<compile_context>
chip_gen: v7x
topology: tpu7x:2x2x1
jax: 0.10.0
libtpu: 0.0.40
codegen_flags: <defaults>
</compile_context>

<pallas_src>
import jax
import jax.numpy as jnp
from jax.experimental import pallas as pl
from jax.experimental.pallas import tpu as pltpu


def _round_up(x, m):
    return ((x + m - 1) // m) * m


# ---------------------------------------------------------------------------
# Pallas kernel: one batch tile of the full MLP forward.
#   x_ref        : [TB, 256]        f32   (input, feature dim zero-padded 160->256)
#   w{1..4}_ref  : [K_pad, N_pad]   bf16  (VMEM-resident across the grid)
#   b{1..4}_ref  : [1, N_pad]       f32
#   w5_ref       : [8, 128]         bf16  (row 0 = real Linear(20,1) weights)
#   b5_ref       : [1, 1]           f32
#   o_ref        : [1, 1, TB]       f32   (lane-dense row of logits)
# ---------------------------------------------------------------------------
def _mlp_kernel(x_ref,
                w1_ref, b1_ref,
                w2_ref, b2_ref,
                w3_ref, b3_ref,
                w4_ref, b4_ref,
                w5_ref, b5_ref,
                o_ref):
    # Activations carried in bf16; MXU accumulates in f32; bias + ReLU in f32.
    h = x_ref[...].astype(jnp.bfloat16)                                  # [TB, 256]

    for w_ref, b_ref in ((w1_ref, b1_ref), (w2_ref, b2_ref),
                         (w3_ref, b3_ref), (w4_ref, b4_ref)):
        acc = jnp.dot(h, w_ref[...],
                      preferred_element_type=jnp.float32) + b_ref[...]
        h = jnp.maximum(acc, 0.0).astype(jnp.bfloat16)                   # store bf16

    # Final Linear(20 -> 1): transposed matmul produces a lane-dense logits row.
    #   (8, 128) x (TB, 128)^T -> (8, TB); row 0 holds the logits for this tile.
    logit8 = jax.lax.dot_general(
        w5_ref[...], h,
        dimension_numbers=(((1,), (1,)), ((), ())),
        preferred_element_type=jnp.float32)                              # [8, TB]
    logits = logit8[0:1, :] + b5_ref[...]                                # [1, TB]
    o_ref[...] = logits.reshape(o_ref.shape).astype(o_ref.dtype)


# ---------------------------------------------------------------------------
# One-time weight preparation (outside the kernel):
#   - pad the input dim 160 -> 256 and hidden widths to multiples of 128 (zeros,
#     exact same math),
#   - cast hidden-layer weights to bf16 (biases stay f32),
#   - final [20, 1] layer becomes an (8, 128) bf16 block (row 0 = weights) + scalar
#     f32 bias, so the kernel can emit a lane-dense logits row from the MXU.
# ---------------------------------------------------------------------------
def prepare_params(params):
    n = len(params)
    prepped = []
    prev_pad = _round_up(params[0][0].shape[0], 128)       # 160 -> 256
    for i, (w, b) in enumerate(params):
        fan_in, fan_out = w.shape
        b = jnp.asarray(b).reshape(1, fan_out).astype(jnp.float32)
        if i < n - 1:
            out_pad = _round_up(fan_out, 128)
            w_p = jnp.zeros((prev_pad, out_pad), jnp.bfloat16)
            w_p = w_p.at[:fan_in, :fan_out].set(w.astype(jnp.bfloat16))
            b_p = jnp.zeros((1, out_pad), jnp.float32).at[:, :fan_out].set(b)
            prepped += [w_p, b_p]
            prev_pad = out_pad
        else:
            assert fan_out == 1
            w_row = jnp.zeros((8, prev_pad), jnp.bfloat16)
            w_row = w_row.at[0, :fan_in].set(w[:, 0].astype(jnp.bfloat16))
            prepped += [w_row, b]                           # b: (1, 1) f32
    return prepped


def _choose_tb(batch):
    """Batch-tile heuristic (see header):
       - tiny batch (<16 padded rows): single tile (pure latency regime)
       - small/medium batch: exactly 2 tiles (engages both v7x TensorCores)
       - large batch: 512-row tiles (fills the MXU, amortizes grid-step overhead)."""
    target = 512
    b8 = _round_up(max(batch, 8), 8)
    if b8 < 16:
        return b8
    if b8 <= 2 * target:
        return _round_up((b8 + 1) // 2, 8)
    return target


def binary_model_forward(x, prepped, tb=None):
    """x: [B, l1_in] float32; prepped: output of prepare_params()."""
    B, d_in = x.shape
    d_in_pad = prepped[0].shape[0]                          # 256
    if tb is None:
        tb = _choose_tb(B)
    b_pad = _round_up(B, tb)
    num_tiles = b_pad // tb

    # Pad batch to the tile grid and the feature dim to the lane-dense width.
    x_p = jnp.pad(x, ((0, b_pad - B), (0, d_in_pad - d_in)))

    in_specs = [pl.BlockSpec((tb, d_in_pad), lambda i: (i, 0))]
    for p in prepped:
        # Constant block index -> weights/biases DMA'd once, VMEM-resident.
        in_specs.append(pl.BlockSpec(p.shape, lambda i: (0, 0)))

    out = pl.pallas_call(
        _mlp_kernel,
        out_shape=jax.ShapeDtypeStruct((num_tiles, 1, tb), jnp.float32),
        grid=(num_tiles,),
        in_specs=in_specs,
        out_specs=pl.BlockSpec((1, 1, tb), lambda i: (i, 0, 0)),
        compiler_params=pltpu.CompilerParams(
            dimension_semantics=("parallel",)),
    )(x_p, *prepped)
    return out.reshape(b_pad, 1)[:B]


# ---------------------------------------------------------------------------
# Deterministic parameter initialization (mirrors PyTorch nn.Linear default:
# U(-1/sqrt(fan_in), 1/sqrt(fan_in)) for both weights and biases).
# ---------------------------------------------------------------------------
def init_params(key, layer_sizes):
    params = []
    for i in range(len(layer_sizes) - 1):
        fan_in, fan_out = layer_sizes[i], layer_sizes[i + 1]
        key, kw, kb = jax.random.split(key, 3)
        bound = 1.0 / jnp.sqrt(jnp.float32(fan_in))
        w = jax.random.uniform(kw, (fan_in, fan_out), jnp.float32, -bound, bound)
        b = jax.random.uniform(kb, (1, fan_out), jnp.float32, -bound, bound)
        params.append((w, b))
    return params


def _reference_forward(x, prepped):
    """Plain-JAX reference using the same padded/bf16 operands as the kernel."""
    w1, b1, w2, b2, w3, b3, w4, b4, w5, b5 = prepped
    d_in_pad = w1.shape[0]
    x_p = jnp.pad(x, ((0, 0), (0, d_in_pad - x.shape[1])))
    h = x_p.astype(jnp.bfloat16)
    for w, b in ((w1, b1), (w2, b2), (w3, b3), (w4, b4)):
        acc = jnp.dot(h, w, preferred_element_type=jnp.float32) + b
        h = jnp.maximum(acc, 0.0).astype(jnp.bfloat16)
    logit = jax.lax.dot_general(
        h, w5[0:1, :],
        dimension_numbers=(((1,), (1,)), ((), ())),
        preferred_element_type=jnp.float32) + b5
    return logit                                             # [B, 1]


if __name__ == "__main__":
    # Module hyperparameters: word_representation_length=32, context_range=2
    #   -> l1_in = 32 * (2*2 + 1) = 160
    word_representation_length = 32
    context_range = 2
    l1_in = word_representation_length * (2 * context_range + 1)
    batch = 32           # small example batch -> auto tb=16, 2 pipelined/parallel tiles

    key = jax.random.PRNGKey(0)
    key, kx = jax.random.split(key)

    x = jax.random.normal(kx, (batch, l1_in), dtype=jnp.float32)
    params = init_params(key, [l1_in, 1000, 400, 100, 20, 1])
    prepped = prepare_params(params)

    out = binary_model_forward(x, prepped)
    out = jax.block_until_ready(out)

    # Sanity check against a plain-JAX reference with identical arithmetic.
    ref = _reference_forward(x, prepped)
    assert out.shape == (batch, 1), out.shape
    assert jnp.allclose(out, ref, atol=2e-3, rtol=2e-3), "mismatch vs reference"

    # Loose check against the full-f32 (unquantized) forward as well.
    ref_f32 = x
    for i, (w, b) in enumerate(params):
        ref_f32 = jnp.dot(ref_f32, w) + b
        if i < len(params) - 1:
            ref_f32 = jnp.maximum(ref_f32, 0.0)
    assert jnp.allclose(out, ref_f32, atol=5e-2, rtol=5e-2), "bf16 drift too large"

    print("KERNEL_OK")
</pallas_src>

<mosaic_0001>
module attributes {stable_mosaic.version = 11 : i64} {
  func.func @_mlp_kernel(%arg0: i32, %arg1: memref<16x256xf32, #tpu.memory_space<vmem>>, %arg2: memref<256x1024xbf16, #tpu.memory_space<vmem>>, %arg3: memref<1x1024xf32, #tpu.memory_space<vmem>>, %arg4: memref<1024x512xbf16, #tpu.memory_space<vmem>>, %arg5: memref<1x512xf32, #tpu.memory_space<vmem>>, %arg6: memref<512x128xbf16, #tpu.memory_space<vmem>>, %arg7: memref<1x128xf32, #tpu.memory_space<vmem>>, %arg8: memref<128x128xbf16, #tpu.memory_space<vmem>>, %arg9: memref<1x128xf32, #tpu.memory_space<vmem>>, %arg10: memref<8x128xbf16, #tpu.memory_space<vmem>>, %arg11: memref<1x1xf32, #tpu.memory_space<vmem>>, %arg12: memref<1x1x16xf32, #tpu.memory_space<vmem>>) attributes {dimension_semantics = [#tpu.dimension_semantics<parallel>], iteration_bounds = array<i64: 2>, scalar_prefetch = 0 : i64, scratch_operands = 0 : i64, tpu.core_type = #tpu.core_type<tc>, window_params = [{transform_indices = @transform_0, window_bounds = array<i64: 16, 256>}, {pipeline_mode = #tpu.pipeline_mode<synchronous>, transform_indices = @transform_1, window_bounds = array<i64: 256, 1024>}, {pipeline_mode = #tpu.pipeline_mode<synchronous>, transform_indices = @transform_2, window_bounds = array<i64: 1, 1024>}, {pipeline_mode = #tpu.pipeline_mode<synchronous>, transform_indices = @transform_3, window_bounds = array<i64: 1024, 512>}, {pipeline_mode = #tpu.pipeline_mode<synchronous>, transform_indices = @transform_4, window_bounds = array<i64: 1, 512>}, {pipeline_mode = #tpu.pipeline_mode<synchronous>, transform_indices = @transform_5, window_bounds = array<i64: 512, 128>}, {pipeline_mode = #tpu.pipeline_mode<synchronous>, transform_indices = @transform_6, window_bounds = array<i64: 1, 128>}, {pipeline_mode = #tpu.pipeline_mode<synchronous>, transform_indices = @transform_7, window_bounds = array<i64: 128, 128>}, {pipeline_mode = #tpu.pipeline_mode<synchronous>, transform_indices = @transform_8, window_bounds = array<i64: 1, 128>}, {pipeline_mode = #tpu.pipeline_mode<synchronous>, transform_indices = @transform_9, window_bounds = array<i64: 8, 128>}, {pipeline_mode = #tpu.pipeline_mode<synchronous>, transform_indices = @transform_10, window_bounds = array<i64: 1, 1>}, {transform_indices = @transform_11, window_bounds = array<i64: 1, 1, 16>}]} {
    %c0 = arith.constant 0 : index
    %c0_0 = arith.constant 0 : index
    %0 = vector.load %arg1[%c0, %c0_0] : memref<16x256xf32, #tpu.memory_space<vmem>>, vector<16x256xf32>
    %1 = arith.truncf %0 : vector<16x256xf32> to vector<16x256xbf16>
    %c0_1 = arith.constant 0 : index
    %c0_2 = arith.constant 0 : index
    %2 = vector.load %arg2[%c0_1, %c0_2] : memref<256x1024xbf16, #tpu.memory_space<vmem>>, vector<256x1024xbf16>
    %cst = arith.constant dense<0.000000e+00> : vector<16x1024xf32>
    %3 = tpu.matmul %1, %2, %cst {dimension_numbers = #tpu.dot_dimension_numbers<[1], [0], [0], [1], [0, 0, 1, 1], [], []>} : vector<16x256xbf16>, vector<256x1024xbf16>, vector<16x1024xf32> -> vector<16x1024xf32>
    %c0_3 = arith.constant 0 : index
    %c0_4 = arith.constant 0 : index
    %4 = vector.load %arg3[%c0_3, %c0_4] : memref<1x1024xf32, #tpu.memory_space<vmem>>, vector<1x1024xf32>
    %5 = vector.broadcast %4 : vector<1x1024xf32> to vector<16x1024xf32>
    %6 = arith.addf %3, %5 : vector<16x1024xf32>
    %cst_5 = arith.constant 0.000000e+00 : f32
    %7 = vector.broadcast %cst_5 : f32 to vector<16x1024xf32>
    %8 = arith.maximumf %6, %7 : vector<16x1024xf32>
    %9 = arith.truncf %8 : vector<16x1024xf32> to vector<16x1024xbf16>
    %c0_6 = arith.constant 0 : index
    %c0_7 = arith.constant 0 : index
    %10 = vector.load %arg4[%c0_6, %c0_7] : memref<1024x512xbf16, #tpu.memory_space<vmem>>, vector<1024x512xbf16>
    %cst_8 = arith.constant dense<0.000000e+00> : vector<16x512xf32>
    %11 = tpu.matmul %9, %10, %cst_8 {dimension_numbers = #tpu.dot_dimension_numbers<[1], [0], [0], [1], [0, 0, 1, 1], [], []>} : vector<16x1024xbf16>, vector<1024x512xbf16>, vector<16x512xf32> -> vector<16x512xf32>
    %c0_9 = arith.constant 0 : index
    %c0_10 = arith.constant 0 : index
    %12 = vector.load %arg5[%c0_9, %c0_10] : memref<1x512xf32, #tpu.memory_space<vmem>>, vector<1x512xf32>
    %13 = vector.broadcast %12 : vector<1x512xf32> to vector<16x512xf32>
    %14 = arith.addf %11, %13 : vector<16x512xf32>
    %cst_11 = arith.constant 0.000000e+00 : f32
    %15 = vector.broadcast %cst_11 : f32 to vector<16x512xf32>
    %16 = arith.maximumf %14, %15 : vector<16x512xf32>
    %17 = arith.truncf %16 : vector<16x512xf32> to vector<16x512xbf16>
    %c0_12 = arith.constant 0 : index
    %c0_13 = arith.constant 0 : index
    %18 = vector.load %arg6[%c0_12, %c0_13] : memref<512x128xbf16, #tpu.memory_space<vmem>>, vector<512x128xbf16>
    %cst_14 = arith.constant dense<0.000000e+00> : vector<16x128xf32>
    %19 = tpu.matmul %17, %18, %cst_14 {dimension_numbers = #tpu.dot_dimension_numbers<[1], [0], [0], [1], [0, 0, 1, 1], [], []>} : vector<16x512xbf16>, vector<512x128xbf16>, vector<16x128xf32> -> vector<16x128xf32>
    %c0_15 = arith.constant 0 : index
    %c0_16 = arith.constant 0 : index
    %20 = vector.load %arg7[%c0_15, %c0_16] : memref<1x128xf32, #tpu.memory_space<vmem>>, vector<1x128xf32>
    %21 = vector.broadcast %20 : vector<1x128xf32> to vector<16x128xf32>
    %22 = arith.addf %19, %21 : vector<16x128xf32>
    %cst_17 = arith.constant 0.000000e+00 : f32
    %23 = vector.broadcast %cst_17 : f32 to vector<16x128xf32>
    %24 = arith.maximumf %22, %23 : vector<16x128xf32>
    %25 = arith.truncf %24 : vector<16x128xf32> to vector<16x128xbf16>
    %c0_18 = arith.constant 0 : index
    %c0_19 = arith.constant 0 : index
    %26 = vector.load %arg8[%c0_18, %c0_19] : memref<128x128xbf16, #tpu.memory_space<vmem>>, vector<128x128xbf16>
    %cst_20 = arith.constant dense<0.000000e+00> : vector<16x128xf32>
    %27 = tpu.matmul %25, %26, %cst_20 {dimension_numbers = #tpu.dot_dimension_numbers<[1], [0], [0], [1], [0, 0, 1, 1], [], []>} : vector<16x128xbf16>, vector<128x128xbf16>, vector<16x128xf32> -> vector<16x128xf32>
    %c0_21 = arith.constant 0 : index
    %c0_22 = arith.constant 0 : index
    %28 = vector.load %arg9[%c0_21, %c0_22] : memref<1x128xf32, #tpu.memory_space<vmem>>, vector<1x128xf32>
    %29 = vector.broadcast %28 : vector<1x128xf32> to vector<16x128xf32>
    %30 = arith.addf %27, %29 : vector<16x128xf32>
    %cst_23 = arith.constant 0.000000e+00 : f32
    %31 = vector.broadcast %cst_23 : f32 to vector<16x128xf32>
    %32 = arith.maximumf %30, %31 : vector<16x128xf32>
    %33 = arith.truncf %32 : vector<16x128xf32> to vector<16x128xbf16>
    %c0_24 = arith.constant 0 : index
    %c0_25 = arith.constant 0 : index
    %34 = vector.load %arg10[%c0_24, %c0_25] : memref<8x128xbf16, #tpu.memory_space<vmem>>, vector<8x128xbf16>
    %cst_26 = arith.constant dense<0.000000e+00> : vector<8x16xf32>
    %35 = tpu.matmul %34, %33, %cst_26 {dimension_numbers = #tpu.dot_dimension_numbers<[1], [1], [0], [0], [0, 0, 1, 0], [], []>} : vector<8x128xbf16>, vector<16x128xbf16>, vector<8x16xf32> -> vector<8x16xf32>
    %36 = vector.extract_strided_slice %35 {offsets = [0, 0], sizes = [1, 16], strides = [1, 1]} : vector<8x16xf32> to vector<1x16xf32>
    %c0_27 = arith.constant 0 : index
    %c0_28 = arith.constant 0 : index
    %37 = vector.load %arg11[%c0_27, %c0_28] : memref<1x1xf32, #tpu.memory_space<vmem>>, vector<1x1xf32>
    %38 = vector.broadcast %37 : vector<1x1xf32> to vector<1x16xf32>
    %39 = arith.addf %36, %38 : vector<1x16xf32>
    %40 = vector.shape_cast %39 : vector<1x16xf32> to vector<1x1x16xf32>
    %c0_29 = arith.constant 0 : index
    %c0_30 = arith.constant 0 : index
    %c0_31 = arith.constant 0 : index
    %41 = vector.load %arg12[%c0_29, %c0_30, %c0_31] : memref<1x1x16xf32, #tpu.memory_space<vmem>>, vector<1x1x16xf32>
    tpu.vector_store %arg12[%c0_29, %c0_30, %c0_31], %40 {strides = array<i32>} : memref<1x1x16xf32, #tpu.memory_space<vmem>>, vector<1x1x16xf32>,
    return
  }
  func.func @transform_0(%arg0: i32) -> (i32, i32) {
    %c0_i32 = arith.constant 0 : i32
    %c0_i32_0 = arith.constant 0 : i32
    return %arg0, %c0_i32 : i32, i32
  }
  func.func @transform_1(%arg0: i32) -> (i32, i32) {
    %c0_i32 = arith.constant 0 : i32
    %c0_i32_0 = arith.constant 0 : i32
    %c0_i32_1 = arith.constant 0 : i32
    return %c0_i32, %c0_i32_0 : i32, i32
  }
  func.func @transform_2(%arg0: i32) -> (i32, i32) {
    %c0_i32 = arith.constant 0 : i32
    %c0_i32_0 = arith.constant 0 : i32
    %c0_i32_1 = arith.constant 0 : i32
    return %c0_i32, %c0_i32_0 : i32, i32
  }
  func.func @transform_3(%arg0: i32) -> (i32, i32) {
    %c0_i32 = arith.constant 0 : i32
    %c0_i32_0 = arith.constant 0 : i32
    %c0_i32_1 = arith.constant 0 : i32
    return %c0_i32, %c0_i32_0 : i32, i32
  }
  func.func @transform_4(%arg0: i32) -> (i32, i32) {
    %c0_i32 = arith.constant 0 : i32
    %c0_i32_0 = arith.constant 0 : i32
    %c0_i32_1 = arith.constant 0 : i32
    return %c0_i32, %c0_i32_0 : i32, i32
  }
  func.func @transform_5(%arg0: i32) -> (i32, i32) {
    %c0_i32 = arith.constant 0 : i32
    %c0_i32_0 = arith.constant 0 : i32
    %c0_i32_1 = arith.constant 0 : i32
    return %c0_i32, %c0_i32_0 : i32, i32
  }
  func.func @transform_6(%arg0: i32) -> (i32, i32) {
    %c0_i32 = arith.constant 0 : i32
    %c0_i32_0 = arith.constant 0 : i32
    %c0_i32_1 = arith.constant 0 : i32
    return %c0_i32, %c0_i32_0 : i32, i32
  }
  func.func @transform_7(%arg0: i32) -> (i32, i32) {
    %c0_i32 = arith.constant 0 : i32
    %c0_i32_0 = arith.constant 0 : i32
    %c0_i32_1 = arith.constant 0 : i32
    return %c0_i32, %c0_i32_0 : i32, i32
  }
  func.func @transform_8(%arg0: i32) -> (i32, i32) {
    %c0_i32 = arith.constant 0 : i32
    %c0_i32_0 = arith.constant 0 : i32
    %c0_i32_1 = arith.constant 0 : i32
    return %c0_i32, %c0_i32_0 : i32, i32
  }
  func.func @transform_9(%arg0: i32) -> (i32, i32) {
    %c0_i32 = arith.constant 0 : i32
    %c0_i32_0 = arith.constant 0 : i32
    %c0_i32_1 = arith.constant 0 : i32
    return %c0_i32, %c0_i32_0 : i32, i32
  }
  func.func @transform_10(%arg0: i32) -> (i32, i32) {
    %c0_i32 = arith.constant 0 : i32
    %c0_i32_0 = arith.constant 0 : i32
    %c0_i32_1 = arith.constant 0 : i32
    return %c0_i32, %c0_i32_0 : i32, i32
  }
  func.func @transform_11(%arg0: i32) -> (i32, i32, i32) {
    %c0_i32 = arith.constant 0 : i32
    %c0_i32_0 = arith.constant 0 : i32
    %c0_i32_1 = arith.constant 0 : i32
    return %arg0, %c0_i32, %c0_i32_0 : i32, i32, i32
  }
}

</mosaic_0001>

<llo_original>
// kernel: tpu_custom_call.1
$region0: #{tpu_custom_call.1}
  #allocation0 [shape = 'u32[]', space=smem, size = 0x4, offset = 0x4, fixed_abs, tag = 'smem constant byte address 0x4 - core index']
  #allocation1 [shape = 'u32[144,128]{1,0:T(1,128)}', space=vmem, size = 0x12000, scoped, tag = 'internal scratch']
  #allocation2 [shape = 'f32[1,1]{1,0:T(1,128)S(1)}', space=vmem, size = 0x200, scoped, tag = 'scoped memory for tpu_custom_call.1']
  %s0 = inlined_call_operand.hbm [shape: f32[32,256], index: 0, kind: input, shape index: {}]
  %s1 = inlined_call_operand.hbm [shape: bf16[256,1024], index: 1, kind: input, shape index: {}]
  %s2 = inlined_call_operand.vmem [shape: f32[1,1024], index: 2, kind: input, shape index: {}]
  %s3 = inlined_call_operand.hbm [shape: bf16[1024,512], index: 3, kind: input, shape index: {}]
  %s4 = inlined_call_operand.vmem [shape: f32[1,512], index: 4, kind: input, shape index: {}]
  %s5 = inlined_call_operand.hbm [shape: bf16[512,128], index: 5, kind: input, shape index: {}]
  %s6 = inlined_call_operand.vmem [shape: f32[1,128], index: 6, kind: input, shape index: {}]
  %s7 = inlined_call_operand.hbm [shape: bf16[128,128], index: 7, kind: input, shape index: {}]
  %s8 = inlined_call_operand.vmem [shape: f32[1,128], index: 8, kind: input, shape index: {}]
  %s9 = inlined_call_operand.vmem [shape: bf16[8,128], index: 9, kind: input, shape index: {}]
  %s10 = inlined_call_operand.<no memory space> [shape: f32[1,1], index: 10, kind: input, shape index: {}]
  %s11 = inlined_call_operand.hbm [shape: f32[2,1,16], index: 11, kind: output, shape index: {}]
  %s12 = sld [smem:[#allocation0]]
  $region97: #{tpu_custom_call.1} parent=0
    _
  %s14 = ssub.s32 1, %s12
  %s15 = scalar_select 0, %s14, %s12
  %v16 = vstv %s10
  %17 = vst [vmem:[#allocation2] sm:$0x1] %v16
  $region1: #{tpu_custom_call.1} parent=0
    #allocation3 [shape = 'u8[32768]{0}', space=vmem, size = 0x8000, scoped, tag = 'input window, operand 0']
    #allocation4 [shape = 's32[2]{0}', space=sflag, size = 0x8, scoped, tag = 'scoped memory for tpu_custom_call.1']
    #allocation5 [shape = 's32[2]{0}', space=sflag, size = 0x8, scoped, tag = 'scoped memory for tpu_custom_call.1']
    #allocation6 [shape = 'u8[524288]{0}', space=vmem, size = 0x80000, scoped, tag = 'input window, operand 1, single buffered']
    #allocation7 [shape = 's32[1]{0}', space=sflag, size = 0x4, scoped, tag = 'scoped memory for tpu_custom_call.1']
    #allocation8 [shape = 'u8[1048576]{0}', space=vmem, size = 0x100000, scoped, tag = 'input window, operand 3, single buffered']
    #allocation9 [shape = 'u8[131072]{0}', space=vmem, size = 0x20000, scoped, tag = 'input window, operand 5, single buffered']
    #allocation10 [shape = 's32[1]{0}', space=sflag, size = 0x4, scoped, tag = 'scoped memory for tpu_custom_call.1']
    #allocation11 [shape = 'u8[32768]{0}', space=vmem, size = 0x8000, scoped, tag = 'input window, operand 7, single buffered']
    #allocation12 [shape = 'u8[1024]{0}', space=vmem, size = 0x400, scoped, tag = 'output window, operand 0']
    %18 = vsyncpa [#allocation4], 0
    %s19 = scalar_lea.sflag [#allocation4], 1
    %20 = vsyncpa %s19, 0
    %21 = vsyncpa [#allocation7], 0
    %22 = vsyncpa [#allocation10], 0
    %23 = vsyncpa [#allocation5], 0
    %s24 = scalar_lea.sflag [#allocation5], 1
    %25 = vsyncpa %s24, 0
    loop: start=0, step=1, limit=4
    $region2: #{tpu_custom_call.1} parent=1 // loop_pre_header
      _
    $region3: #{tpu_custom_call.1} parent=1 // loop_header
      %s27 = sphi 0, %s31
      %p28 = scmp.ge.s32.totalorder %s27, 4
      %s37 = sphi 0, %s39
      %s40 = sphi 0, %s37
      %s41 = sphi 0, %s40
      %s57 = sphi 0, %s41
      %s61 = sphi 0, %s61
      %s63 = sphi 0, %s61
      %s64 = sphi 0, %s63
      %s78 = sphi 0, %s64
      %s82 = sphi 0, %s82
      %s84 = sphi 0, %s82
      %s85 = sphi 0, %s84
      %s99 = sphi 0, %s85
      %s103 = sphi 0, %s103
      %s105 = sphi 0, %s103
      %s106 = sphi 0, %s105
      %s120 = sphi 0, %s106
      %s124 = sphi 0, %s124
      %s126 = sphi 0, %s124
      %s127 = sphi 0, %s126
      %s141 = sphi 0, %s127
      %s145 = sphi 0, %s145
      %s147 = sphi 0, %s145
      %s148 = sphi 0, %s147
      %s162 = sphi 0, %s148
      %s166 = sphi 0, %s166
      %s168 = sphi 0, %s166
      %s169 = sphi 0, %s168
      %s183 = sphi 0, %s169
      %s187 = sphi 0, %s187
      %s189 = sphi 0, %s187
      %s190 = sphi 0, %s189
      %s204 = sphi 0, %s190
      %s208 = sphi 0, %s208
      %s210 = sphi 0, %s208
      %s211 = sphi 0, %s210
      %s225 = sphi 0, %s211
      %s229 = sphi 0, %s229
      %s231 = sphi 0, %s229
      %s232 = sphi 0, %s231
      %s246 = sphi 0, %s232
      %s250 = sphi 0, %s250
      %s252 = sphi 0, %s250
      %s253 = sphi 0, %s252
      %s267 = sphi 0, %s253
      %s273 = sphi 0, %s275
      %s276 = sphi 0, %s273
      %s277 = sphi 0, %s276
      %s293 = sphi 0, %s277
    $region4: #{tpu_custom_call.1} parent=1 // loop_header_branch
      %30 = sbr.rel (%p28) target = $region8
    $region5: #{tpu_custom_call.1} parent=1 // loop_body
      %s32 = ssub.s32 %s27, 1
      %s33 = ssub.s32 %s27, 2
      %s34 = sadd.s32 %s27, 1
      %s35 = ssub.s32 %s27, %s34
      %p36 = scmp.eq.s32.totalorder %s35, 0
      %s38 = sadd.s32 %s37, 1
      %s39 = scalar_select %p36, %s37, %s38
      %p42 = pneg %p36
      %p43 = scmp.eq.s32.totalorder %s27, 1
      %p44 = por %p42, %p43
      %p45 = scmp.ne.s32.totalorder %s37, %s40
      %p46 = scmp.eq.s32.totalorder %s27, 0
      %p47 = por %p45, %p46
      %p48 = scmp.ne.s32.totalorder %s37, %s40
      %p49 = scmp.eq.s32.totalorder %s32, 1
      %p50 = por %p48, %p49
      %p51 = scmp.ne.s32.totalorder %s40, %s41
      %p52 = scmp.eq.s32.totalorder %s32, 0
      %p53 = por %p51, %p52
      %p54 = scmp.ne.s32.totalorder %s40, %s41
      %p55 = scmp.eq.s32.totalorder %s33, 1
      %p56 = por %p54, %p55
      %p58 = scmp.ne.s32.totalorder %s41, %s57
      %p59 = scmp.eq.s32.totalorder %s33, 0
      %p60 = por %p58, %p59
      %s62 = sadd.s32 %s61, 1
      %p65 = scmp.eq.s32.totalorder %s27, 1
      %p66 = scmp.ne.s32.totalorder %s61, %s63
      %p67 = scmp.eq.s32.totalorder %s27, 0
      %p68 = por %p66, %p67
      %p69 = scmp.ne.s32.totalorder %s61, %s63
      %p70 = scmp.eq.s32.totalorder %s32, 1
      %p71 = por %p69, %p70
      %p72 = scmp.ne.s32.totalorder %s63, %s64
      %p73 = scmp.eq.s32.totalorder %s32, 0
      %p74 = por %p72, %p73
      %p75 = scmp.ne.s32.totalorder %s63, %s64
      %p76 = scmp.eq.s32.totalorder %s33, 1
      %p77 = por %p75, %p76
      %p79 = scmp.ne.s32.totalorder %s64, %s78
      %p80 = scmp.eq.s32.totalorder %s33, 0
      %p81 = por %p79, %p80
      %s83 = sadd.s32 %s82, 1
      %p86 = scmp.eq.s32.totalorder %s27, 1
      %p87 = scmp.ne.s32.totalorder %s82, %s84
      %p88 = scmp.eq.s32.totalorder %s27, 0
      %p89 = por %p87, %p88
      %p90 = scmp.ne.s32.totalorder %s82, %s84
      %p91 = scmp.eq.s32.totalorder %s32, 1
      %p92 = por %p90, %p91
      %p93 = scmp.ne.s32.totalorder %s84, %s85
      %p94 = scmp.eq.s32.totalorder %s32, 0
      %p95 = por %p93, %p94
      %p96 = scmp.ne.s32.totalorder %s84, %s85
      %p97 = scmp.eq.s32.totalorder %s33, 1
      %p98 = por %p96, %p97
      %p100 = scmp.ne.s32.totalorder %s85, %s99
      %p101 = scmp.eq.s32.totalorder %s33, 0
      %p102 = por %p100, %p101
      %s104 = sadd.s32 %s103, 1
      %p107 = scmp.eq.s32.totalorder %s27, 1
      %p108 = scmp.ne.s32.totalorder %s103, %s105
      %p109 = scmp.eq.s32.totalorder %s27, 0
      %p110 = por %p108, %p109
      %p111 = scmp.ne.s32.totalorder %s103, %s105
      %p112 = scmp.eq.s32.totalorder %s32, 1
      %p113 = por %p111, %p112
      %p114 = scmp.ne.s32.totalorder %s105, %s106
      %p115 = scmp.eq.s32.totalorder %s32, 0
      %p116 = por %p114, %p115
      %p117 = scmp.ne.s32.totalorder %s105, %s106
      %p118 = scmp.eq.s32.totalorder %s33, 1
      %p119 = por %p117, %p118
      %p121 = scmp.ne.s32.totalorder %s106, %s120
      %p122 = scmp.eq.s32.totalorder %s33, 0
      %p123 = por %p121, %p122
      %s125 = sadd.s32 %s124, 1
      %p128 = scmp.eq.s32.totalorder %s27, 1
      %p129 = scmp.ne.s32.totalorder %s124, %s126
      %p130 = scmp.eq.s32.totalorder %s27, 0
      %p131 = por %p129, %p130
      %p132 = scmp.ne.s32.totalorder %s124, %s126
      %p133 = scmp.eq.s32.totalorder %s32, 1
      %p134 = por %p132, %p133
      %p135 = scmp.ne.s32.totalorder %s126, %s127
      %p136 = scmp.eq.s32.totalorder %s32, 0
      %p137 = por %p135, %p136
      %p138 = scmp.ne.s32.totalorder %s126, %s127
      %p139 = scmp.eq.s32.totalorder %s33, 1
      %p140 = por %p138, %p139
      %p142 = scmp.ne.s32.totalorder %s127, %s141
      %p143 = scmp.eq.s32.totalorder %s33, 0
      %p144 = por %p142, %p143
      %s146 = sadd.s32 %s145, 1
      %p149 = scmp.eq.s32.totalorder %s27, 1
      %p150 = scmp.ne.s32.totalorder %s145, %s147
      %p151 = scmp.eq.s32.totalorder %s27, 0
      %p152 = por %p150, %p151
      %p153 = scmp.ne.s32.totalorder %s145, %s147
      %p154 = scmp.eq.s32.totalorder %s32, 1
      %p155 = por %p153, %p154
      %p156 = scmp.ne.s32.totalorder %s147, %s148
      %p157 = scmp.eq.s32.totalorder %s32, 0
      %p158 = por %p156, %p157
      %p159 = scmp.ne.s32.totalorder %s147, %s148
      %p160 = scmp.eq.s32.totalorder %s33, 1
      %p161 = por %p159, %p160
      %p163 = scmp.ne.s32.totalorder %s148, %s162
      %p164 = scmp.eq.s32.totalorder %s33, 0
      %p165 = por %p163, %p164
      %s167 = sadd.s32 %s166, 1
      %p170 = scmp.eq.s32.totalorder %s27, 1
      %p171 = scmp.ne.s32.totalorder %s166, %s168
      %p172 = scmp.eq.s32.totalorder %s27, 0
      %p173 = por %p171, %p172
      %p174 = scmp.ne.s32.totalorder %s166, %s168
      %p175 = scmp.eq.s32.totalorder %s32, 1
      %p176 = por %p174, %p175
      %p177 = scmp.ne.s32.totalorder %s168, %s169
      %p178 = scmp.eq.s32.totalorder %s32, 0
      %p179 = por %p177, %p178
      %p180 = scmp.ne.s32.totalorder %s168, %s169
      %p181 = scmp.eq.s32.totalorder %s33, 1
      %p182 = por %p180, %p181
      %p184 = scmp.ne.s32.totalorder %s169, %s183
      %p185 = scmp.eq.s32.totalorder %s33, 0
      %p186 = por %p184, %p185
      %s188 = sadd.s32 %s187, 1
      %p191 = scmp.eq.s32.totalorder %s27, 1
      %p192 = scmp.ne.s32.totalorder %s187, %s189
      %p193 = scmp.eq.s32.totalorder %s27, 0
      %p194 = por %p192, %p193
      %p195 = scmp.ne.s32.totalorder %s187, %s189
      %p196 = scmp.eq.s32.totalorder %s32, 1
      %p197 = por %p195, %p196
      %p198 = scmp.ne.s32.totalorder %s189, %s190
      %p199 = scmp.eq.s32.totalorder %s32, 0
      %p200 = por %p198, %p199
      %p201 = scmp.ne.s32.totalorder %s189, %s190
      %p202 = scmp.eq.s32.totalorder %s33, 1
      %p203 = por %p201, %p202
      %p205 = scmp.ne.s32.totalorder %s190, %s204
      %p206 = scmp.eq.s32.totalorder %s33, 0
      %p207 = por %p205, %p206
      %s209 = sadd.s32 %s208, 1
      %p212 = scmp.eq.s32.totalorder %s27, 1
      %p213 = scmp.ne.s32.totalorder %s208, %s210
      %p214 = scmp.eq.s32.totalorder %s27, 0
      %p215 = por %p213, %p214
      %p216 = scmp.ne.s32.totalorder %s208, %s210
      %p217 = scmp.eq.s32.totalorder %s32, 1
      %p218 = por %p216, %p217
      %p219 = scmp.ne.s32.totalorder %s210, %s211
      %p220 = scmp.eq.s32.totalorder %s32, 0
      %p221 = por %p219, %p220
      %p222 = scmp.ne.s32.totalorder %s210, %s211
      %p223 = scmp.eq.s32.totalorder %s33, 1
      %p224 = por %p222, %p223
      %p226 = scmp.ne.s32.totalorder %s211, %s225
      %p227 = scmp.eq.s32.totalorder %s33, 0
      %p228 = por %p226, %p227
      %s230 = sadd.s32 %s229, 1
      %p233 = scmp.eq.s32.totalorder %s27, 1
      %p234 = scmp.ne.s32.totalorder %s229, %s231
      %p235 = scmp.eq.s32.totalorder %s27, 0
      %p236 = por %p234, %p235
      %p237 = scmp.ne.s32.totalorder %s229, %s231
      %p238 = scmp.eq.s32.totalorder %s32, 1
      %p239 = por %p237, %p238
      %p240 = scmp.ne.s32.totalorder %s231, %s232
      %p241 = scmp.eq.s32.totalorder %s32, 0
      %p242 = por %p240, %p241
      %p243 = scmp.ne.s32.totalorder %s231, %s232
      %p244 = scmp.eq.s32.totalorder %s33, 1
      %p245 = por %p243, %p244
      %p247 = scmp.ne.s32.totalorder %s232, %s246
      %p248 = scmp.eq.s32.totalorder %s33, 0
      %p249 = por %p247, %p248
      %s251 = sadd.s32 %s250, 1
      %p254 = scmp.eq.s32.totalorder %s27, 1
      %p255 = scmp.ne.s32.totalorder %s250, %s252
      %p256 = scmp.eq.s32.totalorder %s27, 0
      %p257 = por %p255, %p256
      %p258 = scmp.ne.s32.totalorder %s250, %s252
      %p259 = scmp.eq.s32.totalorder %s32, 1
      %p260 = por %p258, %p259
      %p261 = scmp.ne.s32.totalorder %s252, %s253
      %p262 = scmp.eq.s32.totalorder %s32, 0
      %p263 = por %p261, %p262
      %p264 = scmp.ne.s32.totalorder %s252, %s253
      %p265 = scmp.eq.s32.totalorder %s33, 1
      %p266 = por %p264, %p265
      %p268 = scmp.ne.s32.totalorder %s253, %s267
      %p269 = scmp.eq.s32.totalorder %s33, 0
      %p270 = por %p268, %p269
      %s271 = ssub.s32 %s27, %s34
      %p272 = scmp.eq.s32.totalorder %s271, 0
      %s274 = sadd.s32 %s273, 1
      %s275 = scalar_select %p272, %s273, %s274
      %p278 = pneg %p272
      %p279 = scmp.eq.s32.totalorder %s27, 1
      %p280 = por %p278, %p279
      %p281 = scmp.ne.s32.totalorder %s273, %s276
      %p282 = scmp.eq.s32.totalorder %s27, 0
      %p283 = por %p281, %p282
      %p284 = scmp.ne.s32.totalorder %s273, %s276
      %p285 = scmp.eq.s32.totalorder %s32, 1
      %p286 = por %p284, %p285
      %p287 = scmp.ne.s32.totalorder %s276, %s277
      %p288 = scmp.eq.s32.totalorder %s32, 0
      %p289 = por %p287, %p288
      %p290 = scmp.ne.s32.totalorder %s276, %s277
      %p291 = scmp.eq.s32.totalorder %s33, 1
      %p292 = por %p290, %p291
      %p294 = scmp.ne.s32.totalorder %s277, %s293
      %p295 = scmp.eq.s32.totalorder %s33, 0
      %p296 = por %p294, %p295
      %p297 = scmp.le.s32.totalorder 1, %s27
      %p298 = scmp.lt.s32.totalorder %s27, 3
      %p299 = pnand %p297, %p298
      %p300 = pneg %p299
      // Predicated region
      $region9: #{tpu_custom_call.1} parent=5 // pred_check
        _
      $region10: #{tpu_custom_call.1} parent=5 // pred_check_branch
        %302 = sbr.rel (%p299) target = $region12
      $region11: #{tpu_custom_call.1} parent=5 // pred_region
        %s303 = ssub.s32 %s27, 1
        // Predicated region
        $region13: #{tpu_custom_call.1} parent=11 // pred_check
          %p304 = pneg %p74
        $region14: #{tpu_custom_call.1} parent=11 // pred_check_branch
          %306 = sbr.rel (%p304) target = $region16
        $region15: #{tpu_custom_call.1} parent=11 // pred_region
          %s308 = ssub.s32 16384, 16384
          %309 = vsyncadd [#allocation7], %s308
          %s310 = sshll.u32 [#allocation6], 4
          %s311 = int_to_ptr.vmem [resolvable:$true] %s310
          %316 = dma.hbm_to_vmem [thread:$0]  %s1, 16384, %s311, [#allocation7], 512, 512, 32
        $region16: #{tpu_custom_call.1} parent=11 // pred_fallthru
          _
        // Predicated region
        $region17: #{tpu_custom_call.1} parent=11 // pred_check
          %p317 = pneg %p95
        $region18: #{tpu_custom_call.1} parent=11 // pred_check_branch
          %319 = sbr.rel (%p317) target = $region20
        $region19: #{tpu_custom_call.1} parent=11 // pred_region
          _
        $region20: #{tpu_custom_call.1} parent=11 // pred_fallthru
          _
        // Predicated region
        $region21: #{tpu_custom_call.1} parent=11 // pred_check
          %p320 = pneg %p116
        $region22: #{tpu_custom_call.1} parent=11 // pred_check_branch
          %322 = sbr.rel (%p320) target = $region24
        $region23: #{tpu_custom_call.1} parent=11 // pred_region
          %s324 = ssub.s32 32768, 32768
          %325 = vsyncadd [#allocation7], %s324
          %s326 = sshll.u32 [#allocation8], 4
          %s327 = int_to_ptr.vmem [resolvable:$true] %s326
          %332 = dma.hbm_to_vmem [thread:$0]  %s3, 32768, %s327, [#allocation7], 256, 256, 16
        $region24: #{tpu_custom_call.1} parent=11 // pred_fallthru
          _
        // Predicated region
        $region25: #{tpu_custom_call.1} parent=11 // pred_check
          %p333 = pneg %p137
        $region26: #{tpu_custom_call.1} parent=11 // pred_check_branch
          %335 = sbr.rel (%p333) target = $region28
        $region27: #{tpu_custom_call.1} parent=11 // pred_region
          _
        $region28: #{tpu_custom_call.1} parent=11 // pred_fallthru
          _
        // Predicated region
        $region29: #{tpu_custom_call.1} parent=11 // pred_check
          %p336 = pneg %p158
        $region30: #{tpu_custom_call.1} parent=11 // pred_check_branch
          %338 = sbr.rel (%p336) target = $region32
        $region31: #{tpu_custom_call.1} parent=11 // pred_region
          %s340 = ssub.s32 4096, 4096
          %341 = vsyncadd [#allocation10], %s340
          %s342 = sshll.u32 [#allocation9], 4
          %s343 = int_to_ptr.vmem [resolvable:$true] %s342
          %348 = dma.hbm_to_vmem [thread:$0]  %s5, 4096, %s343, [#allocation10], 64, 64, 4
        $region32: #{tpu_custom_call.1} parent=11 // pred_fallthru
          _
        // Predicated region
        $region33: #{tpu_custom_call.1} parent=11 // pred_check
          %p349 = pneg %p179
        $region34: #{tpu_custom_call.1} parent=11 // pred_check_branch
          %351 = sbr.rel (%p349) target = $region36
        $region35: #{tpu_custom_call.1} parent=11 // pred_region
          _
        $region36: #{tpu_custom_call.1} parent=11 // pred_fallthru
          _
        // Predicated region
        $region37: #{tpu_custom_call.1} parent=11 // pred_check
          %p352 = pneg %p200
        $region38: #{tpu_custom_call.1} parent=11 // pred_check_branch
          %354 = sbr.rel (%p352) target = $region40
        $region39: #{tpu_custom_call.1} parent=11 // pred_region
          %s356 = ssub.s32 1024, 1024
          %357 = vsyncadd [#allocation10], %s356
          %s358 = sshll.u32 [#allocation11], 4
          %s359 = int_to_ptr.vmem [resolvable:$true] %s358
          %364 = dma.hbm_to_vmem [thread:$0]  %s7, 1024, %s359, [#allocation10], 64, 64, 4
        $region40: #{tpu_custom_call.1} parent=11 // pred_fallthru
          _
        // Predicated region
        $region41: #{tpu_custom_call.1} parent=11 // pred_check
          %p365 = pneg %p221
        $region42: #{tpu_custom_call.1} parent=11 // pred_check_branch
          %367 = sbr.rel (%p365) target = $region44
        $region43: #{tpu_custom_call.1} parent=11 // pred_region
          _
        $region44: #{tpu_custom_call.1} parent=11 // pred_fallthru
          _
        // Predicated region
        $region45: #{tpu_custom_call.1} parent=11 // pred_check
          %p368 = pneg %p242
        $region46: #{tpu_custom_call.1} parent=11 // pred_check_branch
          %370 = sbr.rel (%p368) target = $region48
        $region47: #{tpu_custom_call.1} parent=11 // pred_region
          _
        $region48: #{tpu_custom_call.1} parent=11 // pred_fallthru
          _
        // Predicated region
        $region49: #{tpu_custom_call.1} parent=11 // pred_check
          %p371 = pneg %p263
        $region50: #{tpu_custom_call.1} parent=11 // pred_check_branch
          %373 = sbr.rel (%p371) target = $region52
        $region51: #{tpu_custom_call.1} parent=11 // pred_region
          _
        $region52: #{tpu_custom_call.1} parent=11 // pred_fallthru
          _
      $region12: #{tpu_custom_call.1} parent=5 // pred_fallthru
        _
      %p374 = scmp.lt.s32.totalorder %s27, 2
      // Predicated region
      $region53: #{tpu_custom_call.1} parent=5 // pred_check
        %p375 = pneg %p374
      $region54: #{tpu_custom_call.1} parent=5 // pred_check_branch
        %377 = sbr.rel (%p375) target = $region56
      $region55: #{tpu_custom_call.1} parent=5 // pred_region
        // Predicated region
        $region57: #{tpu_custom_call.1} parent=55 // pred_check
          %p378 = pneg %p47
        $region58: #{tpu_custom_call.1} parent=55 // pred_check_branch
          %380 = sbr.rel (%p378) target = $region60
        $region59: #{tpu_custom_call.1} parent=55 // pred_region
          %s381 = sand.u32 %s37, 1
          %s382 = scalar_lea.sflag [#allocation4], %s381
          %s383 = sand.u32 %s37, 1
          %s384 = smul.addr %s383, 32
          %s385 = scalar_lea.vmem [#allocation3], %s384
          %s386 = smul.u32 2, %s27
          %s388 = ssub.s32 512, 512
          %389 = vsyncadd %s382, %s388
          %s390 = smul.addr %s386, 2
          %s391 = smul.addr %s390, 128
          %s392 = scalar_lea.hbm %s0, %s391
          %s393 = sshll.u32 %s385, 4
          %s394 = int_to_ptr.vmem [resolvable:$true] %s393
          %399 = dma.hbm_to_vmem [thread:$0]  %s392, 512, %s394, %s382, 256, 256, 16
        $region60: #{tpu_custom_call.1} parent=55 // pred_fallthru
          _
      $region56: #{tpu_custom_call.1} parent=5 // pred_fallthru
        _
      %p400 = scmp.le.s32.totalorder 1, %s27
      %p401 = scmp.lt.s32.totalorder %s27, 3
      %p402 = pnand %p400, %p401
      %p403 = pneg %p402
      // Predicated region
      $region61: #{tpu_custom_call.1} parent=5 // pred_check
        _
      $region62: #{tpu_custom_call.1} parent=5 // pred_check_branch
        %405 = sbr.rel (%p402) target = $region64
      $region63: #{tpu_custom_call.1} parent=5 // pred_region
        %s406 = ssub.s32 %s27, 1
        %s407 = sand.u32 %s40, 1
        %s408 = scalar_lea.sflag [#allocation4], %s407
        %s409 = sand.u32 %s40, 1
        %s410 = smul.addr %s409, 32
        %s411 = scalar_lea.vmem [#allocation3], %s410
        // Predicated region
        $region65: #{tpu_custom_call.1} parent=63 // pred_check
          %p412 = pneg %p53
        $region66: #{tpu_custom_call.1} parent=63 // pred_check_branch
          %414 = sbr.rel (%p412) target = $region68
        $region67: #{tpu_custom_call.1} parent=63 // pred_region
          %415 = dma.done %s408, 512
        $region68: #{tpu_custom_call.1} parent=63 // pred_fallthru
          _
        // Predicated region
        $region69: #{tpu_custom_call.1} parent=63 // pred_check
          %p416 = pneg %p74
        $region70: #{tpu_custom_call.1} parent=63 // pred_check_branch
          %418 = sbr.rel (%p416) target = $region72
        $region71: #{tpu_custom_call.1} parent=63 // pred_region
          %419 = dma.done [#allocation7], 16384
        $region72: #{tpu_custom_call.1} parent=63 // pred_fallthru
          _
        // Predicated region
        $region73: #{tpu_custom_call.1} parent=63 // pred_check
          %p420 = pneg %p116
        $region74: #{tpu_custom_call.1} parent=63 // pred_check_branch
          %422 = sbr.rel (%p420) target = $region76
        $region75: #{tpu_custom_call.1} parent=63 // pred_region
          %423 = dma.done [#allocation7], 32768
        $region76: #{tpu_custom_call.1} parent=63 // pred_fallthru
          _
        // Predicated region
        $region77: #{tpu_custom_call.1} parent=63 // pred_check
          %p424 = pneg %p158
        $region78: #{tpu_custom_call.1} parent=63 // pred_check_branch
          %426 = sbr.rel (%p424) target = $region80
        $region79: #{tpu_custom_call.1} parent=63 // pred_region
          %427 = dma.done [#allocation10], 4096
        $region80: #{tpu_custom_call.1} parent=63 // pred_fallthru
          _
        // Predicated region
        $region81: #{tpu_custom_call.1} parent=63 // pred_check
          %p428 = pneg %p200
        $region82: #{tpu_custom_call.1} parent=63 // pred_check_branch
          %430 = sbr.rel (%p428) target = $region84
        $region83: #{tpu_custom_call.1} parent=63 // pred_region
          %431 = dma.done [#allocation10], 1024
        $region84: #{tpu_custom_call.1} parent=63 // pred_fallthru
          _
        %s432 = sand.u32 %s40, 1
        %s433 = scalar_lea.sflag [#allocation4], %s432
        %s434 = sand.u32 %s40, 1
        %s435 = smul.addr %s434, 32
        %s436 = scalar_lea.vmem [#allocation3], %s435
        %p437 = pneg %p53
        %p438 = pneg %p50
        %p439 = pneg %p74
        %p440 = pneg %p71
        %p441 = pneg %p95
        %p442 = pneg %p92
        %p443 = pneg %p116
        %p444 = pneg %p113
        %p445 = pneg %p137
        %p446 = pneg %p134
        %p447 = pneg %p158
        %p448 = pneg %p155
        %p449 = pneg %p179
        %p450 = pneg %p176
        %p451 = pneg %p200
        %p452 = pneg %p197
        %p453 = pneg %p221
        %p454 = pneg %p218
        %p455 = pneg %p242
        %p456 = pneg %p239
        %p457 = pneg %p263
        %p458 = pneg %p260
        %p459 = pneg %p289
        %p460 = pneg %p286
        %s461 = sand.u32 %s276, 1
        %s462 = scalar_lea.sflag [#allocation5], %s461
        %s463 = sand.u32 %s276, 1
        %s464 = scalar_lea.vmem [#allocation12], %s463
        %s465 = smul.u32 2, %s32
        %v467 = vld [vmem:[%s411] sm:$0xff]
        %v468 = vld [vmem:[%s411 + $0x8] sm:$0xff]
        %v469 = vld [vmem:[%s411 + $0x10] sm:$0xff]
        %v470 = vld [vmem:[%s411 + $0x18] sm:$0xff]
        %v471 = vpack.c.bf16 %v469, %v467
        %v472 = vpack.c.bf16 %v470, %v468
        %v473 = vld [vmem:[#allocation6] sm:$0xff]
        %v474 = vld [vmem:[#allocation6 + $0x8] sm:$0xff]
        %v475 = vld [vmem:[#allocation6 + $0x10] sm:$0xff]
        %v476 = vld [vmem:[#allocation6 + $0x18] sm:$0xff]
        %v477 = vld [vmem:[#allocation6 + $0x20] sm:$0xff]
        %v478 = vld [vmem:[#allocation6 + $0x28] sm:$0xff]
        %v479 = vld [vmem:[#allocation6 + $0x30] sm:$0xff]
        %v480 = vld [vmem:[#allocation6 + $0x38] sm:$0xff]
        %v481 = vld [vmem:[#allocation6 + $0x40] sm:$0xff]
        %v482 = vld [vmem:[#allocation6 + $0x48] sm:$0xff]
        %v483 = vld [vmem:[#allocation6 + $0x50] sm:$0xff]
        %v484 = vld [vmem:[#allocation6 + $0x58] sm:$0xff]
        %v485 = vld [vmem:[#allocation6 + $0x60] sm:$0xff]
        %v486 = vld [vmem:[#allocation6 + $0x68] sm:$0xff]
        %v487 = vld [vmem:[#allocation6 + $0x70] sm:$0xff]
        %v488 = vld [vmem:[#allocation6 + $0x78] sm:$0xff]
        %v489 = vld [vmem:[#allocation6 + $0x80] sm:$0xff]
        %v490 = vld [vmem:[#allocation6 + $0x88] sm:$0xff]
        %v491 = vld [vmem:[#allocation6 + $0x90] sm:$0xff]
        %v492 = vld [vmem:[#allocation6 + $0x98] sm:$0xff]
        %v493 = vld [vmem:[#allocation6 + $0xa0] sm:$0xff]
        %v494 = vld [vmem:[#allocation6 + $0xa8] sm:$0xff]
        %v495 = vld [vmem:[#allocation6 + $0xb0] sm:$0xff]
        %v496 = vld [vmem:[#allocation6 + $0xb8] sm:$0xff]
        %v497 = vld [vmem:[#allocation6 + $0xc0] sm:$0xff]
        %v498 = vld [vmem:[#allocation6 + $0xc8] sm:$0xff]
        %v499 = vld [vmem:[#allocation6 + $0xd0] sm:$0xff]
        %v500 = vld [vmem:[#allocation6 + $0xd8] sm:$0xff]
        %v501 = vld [vmem:[#allocation6 + $0xe0] sm:$0xff]
        %v502 = vld [vmem:[#allocation6 + $0xe8] sm:$0xff]
        %v503 = vld [vmem:[#allocation6 + $0xf0] sm:$0xff]
        %v504 = vld [vmem:[#allocation6 + $0xf8] sm:$0xff]
        %v505 = vld [vmem:[#allocation6 + $0x100] sm:$0xff]
        %v506 = vld [vmem:[#allocation6 + $0x108] sm:$0xff]
        %v507 = vld [vmem:[#allocation6 + $0x110] sm:$0xff]
        %v508 = vld [vmem:[#allocation6 + $0x118] sm:$0xff]
        %v509 = vld [vmem:[#allocation6 + $0x120] sm:$0xff]
        %v510 = vld [vmem:[#allocation6 + $0x128] sm:$0xff]
        %v511 = vld [vmem:[#allocation6 + $0x130] sm:$0xff]
        %v512 = vld [vmem:[#allocation6 + $0x138] sm:$0xff]
        %v513 = vld [vmem:[#allocation6 + $0x140] sm:$0xff]
        %v514 = vld [vmem:[#allocation6 + $0x148] sm:$0xff]
        %v515 = vld [vmem:[#allocation6 + $0x150] sm:$0xff]
        %v516 = vld [vmem:[#allocation6 + $0x158] sm:$0xff]
        %v517 = vld [vmem:[#allocation6 + $0x160] sm:$0xff]
        %v518 = vld [vmem:[#allocation6 + $0x168] sm:$0xff]
        %v519 = vld [vmem:[#allocation6 + $0x170] sm:$0xff]
        %v520 = vld [vmem:[#allocation6 + $0x178] sm:$0xff]
        %v521 = vld [vmem:[#allocation6 + $0x180] sm:$0xff]
        %v522 = vld [vmem:[#allocation6 + $0x188] sm:$0xff]
        %v523 = vld [vmem:[#allocation6 + $0x190] sm:$0xff]
        %v524 = vld [vmem:[#allocation6 + $0x198] sm:$0xff]
        %v525 = vld [vmem:[#allocation6 + $0x1a0] sm:$0xff]
        %v526 = vld [vmem:[#allocation6 + $0x1a8] sm:$0xff]
        %v527 = vld [vmem:[#allocation6 + $0x1b0] sm:$0xff]
        %v528 = vld [vmem:[#allocation6 + $0x1b8] sm:$0xff]
        %v529 = vld [vmem:[#allocation6 + $0x1c0] sm:$0xff]
        %v530 = vld [vmem:[#allocation6 + $0x1c8] sm:$0xff]
        %v531 = vld [vmem:[#allocation6 + $0x1d0] sm:$0xff]
        %v532 = vld [vmem:[#allocation6 + $0x1d8] sm:$0xff]
        %v533 = vld [vmem:[#allocation6 + $0x1e0] sm:$0xff]
        %v534 = vld [vmem:[#allocation6 + $0x1e8] sm:$0xff]
        %v535 = vld [vmem:[#allocation6 + $0x1f0] sm:$0xff]
        %v536 = vld [vmem:[#allocation6 + $0x1f8] sm:$0xff]
        %v537 = vld [vmem:[#allocation6 + $0x200] sm:$0xff]
        %v538 = vld [vmem:[#allocation6 + $0x208] sm:$0xff]
        %v539 = vld [vmem:[#allocation6 + $0x210] sm:$0xff]
        %v540 = vld [vmem:[#allocation6 + $0x218] sm:$0xff]
        %v541 = vld [vmem:[#allocation6 + $0x220] sm:$0xff]
        %v542 = vld [vmem:[#allocation6 + $0x228] sm:$0xff]
        %v543 = vld [vmem:[#allocation6 + $0x230] sm:$0xff]
        %v544 = vld [vmem:[#allocation6 + $0x238] sm:$0xff]
        %v545 = vld [vmem:[#allocation6 + $0x240] sm:$0xff]
        %v546 = vld [vmem:[#allocation6 + $0x248] sm:$0xff]
        %v547 = vld [vmem:[#allocation6 + $0x250] sm:$0xff]
        %v548 = vld [vmem:[#allocation6 + $0x258] sm:$0xff]
        %v549 = vld [vmem:[#allocation6 + $0x260] sm:$0xff]
        %v550 = vld [vmem:[#allocation6 + $0x268] sm:$0xff]
        %v551 = vld [vmem:[#allocation6 + $0x270] sm:$0xff]
        %v552 = vld [vmem:[#allocation6 + $0x278] sm:$0xff]
        %v553 = vld [vmem:[#allocation6 + $0x280] sm:$0xff]
        %v554 = vld [vmem:[#allocation6 + $0x288] sm:$0xff]
        %v555 = vld [vmem:[#allocation6 + $0x290] sm:$0xff]
        %v556 = vld [vmem:[#allocation6 + $0x298] sm:$0xff]
        %v557 = vld [vmem:[#allocation6 + $0x2a0] sm:$0xff]
        %v558 = vld [vmem:[#allocation6 + $0x2a8] sm:$0xff]
        %v559 = vld [vmem:[#allocation6 + $0x2b0] sm:$0xff]
        %v560 = vld [vmem:[#allocation6 + $0x2b8] sm:$0xff]
        %v561 = vld [vmem:[#allocation6 + $0x2c0] sm:$0xff]
        %v562 = vld [vmem:[#allocation6 + $0x2c8] sm:$0xff]
        %v563 = vld [vmem:[#allocation6 + $0x2d0] sm:$0xff]
        %v564 = vld [vmem:[#allocation6 + $0x2d8] sm:$0xff]
        %v565 = vld [vmem:[#allocation6 + $0x2e0] sm:$0xff]
        %v566 = vld [vmem:[#allocation6 + $0x2e8] sm:$0xff]
        %v567 = vld [vmem:[#allocation6 + $0x2f0] sm:$0xff]
        %v568 = vld [vmem:[#allocation6 + $0x2f8] sm:$0xff]
        %v569 = vld [vmem:[#allocation6 + $0x300] sm:$0xff]
        %v570 = vld [vmem:[#allocation6 + $0x308] sm:$0xff]
        %v571 = vld [vmem:[#allocation6 + $0x310] sm:$0xff]
        %v572 = vld [vmem:[#allocation6 + $0x318] sm:$0xff]
        %v573 = vld [vmem:[#allocation6 + $0x320] sm:$0xff]
        %v574 = vld [vmem:[#allocation6 + $0x328] sm:$0xff]
        %v575 = vld [vmem:[#allocation6 + $0x330] sm:$0xff]
        %v576 = vld [vmem:[#allocation6 + $0x338] sm:$0xff]
        %v577 = vld [vmem:[#allocation6 + $0x340] sm:$0xff]
        %v578 = vld [vmem:[#allocation6 + $0x348] sm:$0xff]
        %v579 = vld [vmem:[#allocation6 + $0x350] sm:$0xff]
        %v580 = vld [vmem:[#allocation6 + $0x358] sm:$0xff]
        %v581 = vld [vmem:[#allocation6 + $0x360] sm:$0xff]
        %v582 = vld [vmem:[#allocation6 + $0x368] sm:$0xff]
        %v583 = vld [vmem:[#allocation6 + $0x370] sm:$0xff]
        %v584 = vld [vmem:[#allocation6 + $0x378] sm:$0xff]
        %v585 = vld [vmem:[#allocation6 + $0x380] sm:$0xff]
        %v586 = vld [vmem:[#allocation6 + $0x388] sm:$0xff]
        %v587 = vld [vmem:[#allocation6 + $0x390] sm:$0xff]
        %v588 = vld [vmem:[#allocation6 + $0x398] sm:$0xff]
        %v589 = vld [vmem:[#allocation6 + $0x3a0] sm:$0xff]
        %v590 = vld [vmem:[#allocation6 + $0x3a8] sm:$0xff]
        %v591 = vld [vmem:[#allocation6 + $0x3b0] sm:$0xff]
        %v592 = vld [vmem:[#allocation6 + $0x3b8] sm:$0xff]
        %v593 = vld [vmem:[#allocation6 + $0x3c0] sm:$0xff]
        %v594 = vld [vmem:[#allocation6 + $0x3c8] sm:$0xff]
        %v595 = vld [vmem:[#allocation6 + $0x3d0] sm:$0xff]
        %v596 = vld [vmem:[#allocation6 + $0x3d8] sm:$0xff]
        %v597 = vld [vmem:[#allocation6 + $0x3e0] sm:$0xff]
        %v598 = vld [vmem:[#allocation6 + $0x3e8] sm:$0xff]
        %v599 = vld [vmem:[#allocation6 + $0x3f0] sm:$0xff]
        %v600 = vld [vmem:[#allocation6 + $0x3f8] sm:$0xff]
        %v601 = vld [vmem:[%s2] sm:$0xff]
        %v603 = vlaneseq
        %v604 = vshrl.u32 %v603, 7
        %v605 = vsub.s32 0, %v604
        %v606 = vrot.slane %v601, %v605
        %v607 = vlaneseq
        %v608 = vshrl.u32 %v607, 7
        %v609 = vsub.s32 1, %v608
        %v610 = vrot.slane %v601, %v609
        %v611 = vlaneseq
        %v612 = vshrl.u32 %v611, 7
        %v613 = vsub.s32 2, %v612
        %v614 = vrot.slane %v601, %v613
        %v615 = vlaneseq
        %v616 = vshrl.u32 %v615, 7
        %v617 = vsub.s32 3, %v616
        %v618 = vrot.slane %v601, %v617
        %v619 = vlaneseq
        %v620 = vshrl.u32 %v619, 7
        %v621 = vsub.s32 4, %v620
        %v622 = vrot.slane %v601, %v621
        %v623 = vlaneseq
        %v624 = vshrl.u32 %v623, 7
        %v625 = vsub.s32 5, %v624
        %v626 = vrot.slane %v601, %v625
        %v627 = vlaneseq
        %v628 = vshrl.u32 %v627, 7
        %v629 = vsub.s32 6, %v628
        %v630 = vrot.slane %v601, %v629
        %v631 = vlaneseq
        %v632 = vshrl.u32 %v631, 7
        %v633 = vsub.s32 7, %v632
        %v634 = vrot.slane %v601, %v633
        %v771 = vunpack.c.l.b16 %v473
        %v772 = vunpack.c.h.b16 %v473
        %v773 = vunpack.c.l.b16 %v474
        %v774 = vunpack.c.h.b16 %v474
        %v775 = vunpack.c.l.b16 %v475
        %v776 = vunpack.c.h.b16 %v475
        %v777 = vunpack.c.l.b16 %v476
        %v778 = vunpack.c.h.b16 %v476
        %v779 = vunpack.c.l.b16 %v477
        %v780 = vunpack.c.h.b16 %v477
        %v781 = vunpack.c.l.b16 %v478
        %v782 = vunpack.c.h.b16 %v478
        %v783 = vunpack.c.l.b16 %v479
        %v784 = vunpack.c.h.b16 %v479
        %v785 = vunpack.c.l.b16 %v480
        %v786 = vunpack.c.h.b16 %v480
        %v787 = vunpack.c.l.b16 %v481
        %v788 = vunpack.c.h.b16 %v481
        %v789 = vunpack.c.l.b16 %v482
        %v790 = vunpack.c.h.b16 %v482
        %v791 = vunpack.c.l.b16 %v483
        %v792 = vunpack.c.h.b16 %v483
        %v793 = vunpack.c.l.b16 %v484
        %v794 = vunpack.c.h.b16 %v484
        %v795 = vunpack.c.l.b16 %v485
        %v796 = vunpack.c.h.b16 %v485
        %v797 = vunpack.c.l.b16 %v486
        %v798 = vunpack.c.h.b16 %v486
        %v799 = vunpack.c.l.b16 %v487
        %v800 = vunpack.c.h.b16 %v487
        %v801 = vunpack.c.l.b16 %v488
        %v802 = vunpack.c.h.b16 %v488
        %v803 = vunpack.c.l.b16 %v489
        %v804 = vunpack.c.h.b16 %v489
        %v805 = vunpack.c.l.b16 %v490
        %v806 = vunpack.c.h.b16 %v490
        %v807 = vunpack.c.l.b16 %v491
        %v808 = vunpack.c.h.b16 %v491
        %v809 = vunpack.c.l.b16 %v492
        %v810 = vunpack.c.h.b16 %v492
        %v811 = vunpack.c.l.b16 %v493
        %v812 = vunpack.c.h.b16 %v493
        %v813 = vunpack.c.l.b16 %v494
        %v814 = vunpack.c.h.b16 %v494
        %v815 = vunpack.c.l.b16 %v495
        %v816 = vunpack.c.h.b16 %v495
        %v817 = vunpack.c.l.b16 %v496
        %v818 = vunpack.c.h.b16 %v496
        %v819 = vunpack.c.l.b16 %v497
        %v820 = vunpack.c.h.b16 %v497
        %v821 = vunpack.c.l.b16 %v498
        %v822 = vunpack.c.h.b16 %v498
        %v823 = vunpack.c.l.b16 %v499
        %v824 = vunpack.c.h.b16 %v499
        %v825 = vunpack.c.l.b16 %v500
        %v826 = vunpack.c.h.b16 %v500
        %v827 = vunpack.c.l.b16 %v501
        %v828 = vunpack.c.h.b16 %v501
        %v829 = vunpack.c.l.b16 %v502
        %v830 = vunpack.c.h.b16 %v502
        %v831 = vunpack.c.l.b16 %v503
        %v832 = vunpack.c.h.b16 %v503
        %v833 = vunpack.c.l.b16 %v504
        %v834 = vunpack.c.h.b16 %v504
        %v835 = vunpack.c.l.b16 %v505
        %v836 = vunpack.c.h.b16 %v505
        %v837 = vunpack.c.l.b16 %v506
        %v838 = vunpack.c.h.b16 %v506
        %v839 = vunpack.c.l.b16 %v507
        %v840 = vunpack.c.h.b16 %v507
        %v841 = vunpack.c.l.b16 %v508
        %v842 = vunpack.c.h.b16 %v508
        %v843 = vunpack.c.l.b16 %v509
        %v844 = vunpack.c.h.b16 %v509
        %v845 = vunpack.c.l.b16 %v510
        %v846 = vunpack.c.h.b16 %v510
        %v847 = vunpack.c.l.b16 %v511
        %v848 = vunpack.c.h.b16 %v511
        %v849 = vunpack.c.l.b16 %v512
        %v850 = vunpack.c.h.b16 %v512
        %v851 = vunpack.c.l.b16 %v513
        %v852 = vunpack.c.h.b16 %v513
        %v853 = vunpack.c.l.b16 %v514
        %v854 = vunpack.c.h.b16 %v514
        %v855 = vunpack.c.l.b16 %v515
        %v856 = vunpack.c.h.b16 %v515
        %v857 = vunpack.c.l.b16 %v516
        %v858 = vunpack.c.h.b16 %v516
        %v859 = vunpack.c.l.b16 %v517
        %v860 = vunpack.c.h.b16 %v517
        %v861 = vunpack.c.l.b16 %v518
        %v862 = vunpack.c.h.b16 %v518
        %v863 = vunpack.c.l.b16 %v519
        %v864 = vunpack.c.h.b16 %v519
        %v865 = vunpack.c.l.b16 %v520
        %v866 = vunpack.c.h.b16 %v520
        %v867 = vunpack.c.l.b16 %v521
        %v868 = vunpack.c.h.b16 %v521
        %v869 = vunpack.c.l.b16 %v522
        %v870 = vunpack.c.h.b16 %v522
        %v871 = vunpack.c.l.b16 %v523
        %v872 = vunpack.c.h.b16 %v523
        %v873 = vunpack.c.l.b16 %v524
        %v874 = vunpack.c.h.b16 %v524
        %v875 = vunpack.c.l.b16 %v525
        %v876 = vunpack.c.h.b16 %v525
        %v877 = vunpack.c.l.b16 %v526
        %v878 = vunpack.c.h.b16 %v526
        %v879 = vunpack.c.l.b16 %v527
        %v880 = vunpack.c.h.b16 %v527
        %v881 = vunpack.c.l.b16 %v528
        %v882 = vunpack.c.h.b16 %v528
        %v883 = vunpack.c.l.b16 %v529
        %v884 = vunpack.c.h.b16 %v529
        %v885 = vunpack.c.l.b16 %v530
        %v886 = vunpack.c.h.b16 %v530
        %v887 = vunpack.c.l.b16 %v531
        %v888 = vunpack.c.h.b16 %v531
        %v889 = vunpack.c.l.b16 %v532
        %v890 = vunpack.c.h.b16 %v532
        %v891 = vunpack.c.l.b16 %v533
        %v892 = vunpack.c.h.b16 %v533
        %v893 = vunpack.c.l.b16 %v534
        %v894 = vunpack.c.h.b16 %v534
        %v895 = vunpack.c.l.b16 %v535
        %v896 = vunpack.c.h.b16 %v535
        %v897 = vunpack.c.l.b16 %v536
        %v898 = vunpack.c.h.b16 %v536
        %v899 = vunpack.c.l.b16 %v537
        %v900 = vunpack.c.h.b16 %v537
        %v901 = vunpack.c.l.b16 %v538
        %v902 = vunpack.c.h.b16 %v538
        %v903 = vunpack.c.l.b16 %v539
        %v904 = vunpack.c.h.b16 %v539
        %v905 = vunpack.c.l.b16 %v540
        %v906 = vunpack.c.h.b16 %v540
        %v907 = vunpack.c.l.b16 %v541
        %v908 = vunpack.c.h.b16 %v541
        %v909 = vunpack.c.l.b16 %v542
        %v910 = vunpack.c.h.b16 %v542
        %v911 = vunpack.c.l.b16 %v543
        %v912 = vunpack.c.h.b16 %v543
        %v913 = vunpack.c.l.b16 %v544
        %v914 = vunpack.c.h.b16 %v544
        %v915 = vunpack.c.l.b16 %v545
        %v916 = vunpack.c.h.b16 %v545
        %v917 = vunpack.c.l.b16 %v546
        %v918 = vunpack.c.h.b16 %v546
        %v919 = vunpack.c.l.b16 %v547
        %v920 = vunpack.c.h.b16 %v547
        %v921 = vunpack.c.l.b16 %v548
        %v922 = vunpack.c.h.b16 %v548
        %v923 = vunpack.c.l.b16 %v549
        %v924 = vunpack.c.h.b16 %v549
        %v925 = vunpack.c.l.b16 %v550
        %v926 = vunpack.c.h.b16 %v550
        %v927 = vunpack.c.l.b16 %v551
        %v928 = vunpack.c.h.b16 %v551
        %v929 = vunpack.c.l.b16 %v552
        %v930 = vunpack.c.h.b16 %v552
        %v931 = vunpack.c.l.b16 %v553
        %v932 = vunpack.c.h.b16 %v553
        %v933 = vunpack.c.l.b16 %v554
        %v934 = vunpack.c.h.b16 %v554
        %v935 = vunpack.c.l.b16 %v555
        %v936 = vunpack.c.h.b16 %v555
        %v937 = vunpack.c.l.b16 %v556
        %v938 = vunpack.c.h.b16 %v556
        %v939 = vunpack.c.l.b16 %v557
        %v940 = vunpack.c.h.b16 %v557
        %v941 = vunpack.c.l.b16 %v558
        %v942 = vunpack.c.h.b16 %v558
        %v943 = vunpack.c.l.b16 %v559
        %v944 = vunpack.c.h.b16 %v559
        %v945 = vunpack.c.l.b16 %v560
        %v946 = vunpack.c.h.b16 %v560
        %v947 = vunpack.c.l.b16 %v561
        %v948 = vunpack.c.h.b16 %v561
        %v949 = vunpack.c.l.b16 %v562
        %v950 = vunpack.c.h.b16 %v562
        %v951 = vunpack.c.l.b16 %v563
        %v952 = vunpack.c.h.b16 %v563
        %v953 = vunpack.c.l.b16 %v564
        %v954 = vunpack.c.h.b16 %v564
        %v955 = vunpack.c.l.b16 %v565
        %v956 = vunpack.c.h.b16 %v565
        %v957 = vunpack.c.l.b16 %v566
        %v958 = vunpack.c.h.b16 %v566
        %v959 = vunpack.c.l.b16 %v567
        %v960 = vunpack.c.h.b16 %v567
        %v961 = vunpack.c.l.b16 %v568
        %v962 = vunpack.c.h.b16 %v568
        %v963 = vunpack.c.l.b16 %v569
        %v964 = vunpack.c.h.b16 %v569
        %v965 = vunpack.c.l.b16 %v570
        %v966 = vunpack.c.h.b16 %v570
        %v967 = vunpack.c.l.b16 %v571
        %v968 = vunpack.c.h.b16 %v571
        %v969 = vunpack.c.l.b16 %v572
        %v970 = vunpack.c.h.b16 %v572
        %v971 = vunpack.c.l.b16 %v573
        %v972 = vunpack.c.h.b16 %v573
        %v973 = vunpack.c.l.b16 %v574
        %v974 = vunpack.c.h.b16 %v574
        %v975 = vunpack.c.l.b16 %v575
        %v976 = vunpack.c.h.b16 %v575
        %v977 = vunpack.c.l.b16 %v576
        %v978 = vunpack.c.h.b16 %v576
        %v979 = vunpack.c.l.b16 %v577
        %v980 = vunpack.c.h.b16 %v577
        %v981 = vunpack.c.l.b16 %v578
        %v982 = vunpack.c.h.b16 %v578
        %v983 = vunpack.c.l.b16 %v579
        %v984 = vunpack.c.h.b16 %v579
        %v985 = vunpack.c.l.b16 %v580
        %v986 = vunpack.c.h.b16 %v580
        %v987 = vunpack.c.l.b16 %v581
        %v988 = vunpack.c.h.b16 %v581
        %v989 = vunpack.c.l.b16 %v582
        %v990 = vunpack.c.h.b16 %v582
        %v991 = vunpack.c.l.b16 %v583
        %v992 = vunpack.c.h.b16 %v583
        %v993 = vunpack.c.l.b16 %v584
        %v994 = vunpack.c.h.b16 %v584
        %v995 = vunpack.c.l.b16 %v585
        %v996 = vunpack.c.h.b16 %v585
        %v997 = vunpack.c.l.b16 %v586
        %v998 = vunpack.c.h.b16 %v586
        %v999 = vunpack.c.l.b16 %v587
        %v1000 = vunpack.c.h.b16 %v587
        %v1001 = vunpack.c.l.b16 %v588
        %v1002 = vunpack.c.h.b16 %v588
        %v1003 = vunpack.c.l.b16 %v589
        %v1004 = vunpack.c.h.b16 %v589
        %v1005 = vunpack.c.l.b16 %v590
        %v1006 = vunpack.c.h.b16 %v590
        %v1007 = vunpack.c.l.b16 %v591
        %v1008 = vunpack.c.h.b16 %v591
        %v1009 = vunpack.c.l.b16 %v592
        %v1010 = vunpack.c.h.b16 %v592
        %v1011 = vunpack.c.l.b16 %v593
        %v1012 = vunpack.c.h.b16 %v593
        %v1013 = vunpack.c.l.b16 %v594
        %v1014 = vunpack.c.h.b16 %v594
        %v1015 = vunpack.c.l.b16 %v595
        %v1016 = vunpack.c.h.b16 %v595
        %v1017 = vunpack.c.l.b16 %v596
        %v1018 = vunpack.c.h.b16 %v596
        %v1019 = vunpack.c.l.b16 %v597
        %v1020 = vunpack.c.h.b16 %v597
        %v1021 = vunpack.c.l.b16 %v598
        %v1022 = vunpack.c.h.b16 %v598
        %v1023 = vunpack.c.l.b16 %v599
        %v1024 = vunpack.c.h.b16 %v599
        %v1025 = vunpack.c.l.b16 %v600
        %v1026 = vunpack.c.h.b16 %v600
        %v1027 = vpack.c.b16 %v779, %v771
        %v1028 = vpack.c.b16 %v780, %v772
        %v1029 = vpack.c.b16 %v781, %v773
        %v1030 = vpack.c.b16 %v782, %v774
        %v1031 = vpack.c.b16 %v783, %v775
        %v1032 = vpack.c.b16 %v784, %v776
        %v1033 = vpack.c.b16 %v785, %v777
        %v1034 = vpack.c.b16 %v786, %v778
        %v1035 = vpack.c.b16 %v795, %v787
        %v1036 = vpack.c.b16 %v796, %v788
        %v1037 = vpack.c.b16 %v797, %v789
        %v1038 = vpack.c.b16 %v798, %v790
        %v1039 = vpack.c.b16 %v799, %v791
        %v1040 = vpack.c.b16 %v800, %v792
        %v1041 = vpack.c.b16 %v801, %v793
        %v1042 = vpack.c.b16 %v802, %v794
        %v1043 = vpack.c.b16 %v811, %v803
        %v1044 = vpack.c.b16 %v812, %v804
        %v1045 = vpack.c.b16 %v813, %v805
        %v1046 = vpack.c.b16 %v814, %v806
        %v1047 = vpack.c.b16 %v815, %v807
        %v1048 = vpack.c.b16 %v816, %v808
        %v1049 = vpack.c.b16 %v817, %v809
        %v1050 = vpack.c.b16 %v818, %v810
        %v1051 = vpack.c.b16 %v827, %v819
        %v1052 = vpack.c.b16 %v828, %v820
        %v1053 = vpack.c.b16 %v829, %v821
        %v1054 = vpack.c.b16 %v830, %v822
        %v1055 = vpack.c.b16 %v831, %v823
        %v1056 = vpack.c.b16 %v832, %v824
        %v1057 = vpack.c.b16 %v833, %v825
        %v1058 = vpack.c.b16 %v834, %v826
        %v1059 = vpack.c.b16 %v843, %v835
        %v1060 = vpack.c.b16 %v844, %v836
        %v1061 = vpack.c.b16 %v845, %v837
        %v1062 = vpack.c.b16 %v846, %v838
        %v1063 = vpack.c.b16 %v847, %v839
        %v1064 = vpack.c.b16 %v848, %v840
        %v1065 = vpack.c.b16 %v849, %v841
        %v1066 = vpack.c.b16 %v850, %v842
        %v1067 = vpack.c.b16 %v859, %v851
        %v1068 = vpack.c.b16 %v860, %v852
        %v1069 = vpack.c.b16 %v861, %v853
        %v1070 = vpack.c.b16 %v862, %v854
        %v1071 = vpack.c.b16 %v863, %v855
        %v1072 = vpack.c.b16 %v864, %v856
        %v1073 = vpack.c.b16 %v865, %v857
        %v1074 = vpack.c.b16 %v866, %v858
        %v1075 = vpack.c.b16 %v875, %v867
        %v1076 = vpack.c.b16 %v876, %v868
        %v1077 = vpack.c.b16 %v877, %v869
        %v1078 = vpack.c.b16 %v878, %v870
        %v1079 = vpack.c.b16 %v879, %v871
        %v1080 = vpack.c.b16 %v880, %v872
        %v1081 = vpack.c.b16 %v881, %v873
        %v1082 = vpack.c.b16 %v882, %v874
        %v1083 = vpack.c.b16 %v891, %v883
        %v1084 = vpack.c.b16 %v892, %v884
        %v1085 = vpack.c.b16 %v893, %v885
        %v1086 = vpack.c.b16 %v894, %v886
        %v1087 = vpack.c.b16 %v895, %v887
        %v1088 = vpack.c.b16 %v896, %v888
        %v1089 = vpack.c.b16 %v897, %v889
        %v1090 = vpack.c.b16 %v898, %v890
        %v1091 = vpack.c.b16 %v907, %v899
        %v1092 = vpack.c.b16 %v908, %v900
        %v1093 = vpack.c.b16 %v909, %v901
        %v1094 = vpack.c.b16 %v910, %v902
        %v1095 = vpack.c.b16 %v911, %v903
        %v1096 = vpack.c.b16 %v912, %v904
        %v1097 = vpack.c.b16 %v913, %v905
        %v1098 = vpack.c.b16 %v914, %v906
        %v1099 = vpack.c.b16 %v923, %v915
        %v1100 = vpack.c.b16 %v924, %v916
        %v1101 = vpack.c.b16 %v925, %v917
        %v1102 = vpack.c.b16 %v926, %v918
        %v1103 = vpack.c.b16 %v927, %v919
        %v1104 = vpack.c.b16 %v928, %v920
        %v1105 = vpack.c.b16 %v929, %v921
        %v1106 = vpack.c.b16 %v930, %v922
        %v1107 = vpack.c.b16 %v939, %v931
        %v1108 = vpack.c.b16 %v940, %v932
        %v1109 = vpack.c.b16 %v941, %v933
        %v1110 = vpack.c.b16 %v942, %v934
        %v1111 = vpack.c.b16 %v943, %v935
        %v1112 = vpack.c.b16 %v944, %v936
        %v1113 = vpack.c.b16 %v945, %v937
        %v1114 = vpack.c.b16 %v946, %v938
        %v1115 = vpack.c.b16 %v955, %v947
        %v1116 = vpack.c.b16 %v956, %v948
        %v1117 = vpack.c.b16 %v957, %v949
        %v1118 = vpack.c.b16 %v958, %v950
        %v1119 = vpack.c.b16 %v959, %v951
        %v1120 = vpack.c.b16 %v960, %v952
        %v1121 = vpack.c.b16 %v961, %v953
        %v1122 = vpack.c.b16 %v962, %v954
        %v1123 = vpack.c.b16 %v971, %v963
        %v1124 = vpack.c.b16 %v972, %v964
        %v1125 = vpack.c.b16 %v973, %v965
        %v1126 = vpack.c.b16 %v974, %v966
        %v1127 = vpack.c.b16 %v975, %v967
        %v1128 = vpack.c.b16 %v976, %v968
        %v1129 = vpack.c.b16 %v977, %v969
        %v1130 = vpack.c.b16 %v978, %v970
        %v1131 = vpack.c.b16 %v987, %v979
        %v1132 = vpack.c.b16 %v988, %v980
        %v1133 = vpack.c.b16 %v989, %v981
        %v1134 = vpack.c.b16 %v990, %v982
        %v1135 = vpack.c.b16 %v991, %v983
        %v1136 = vpack.c.b16 %v992, %v984
        %v1137 = vpack.c.b16 %v993, %v985
        %v1138 = vpack.c.b16 %v994, %v986
        %v1139 = vpack.c.b16 %v1003, %v995
        %v1140 = vpack.c.b16 %v1004, %v996
        %v1141 = vpack.c.b16 %v1005, %v997
        %v1142 = vpack.c.b16 %v1006, %v998
        %v1143 = vpack.c.b16 %v1007, %v999
        %v1144 = vpack.c.b16 %v1008, %v1000
        %v1145 = vpack.c.b16 %v1009, %v1001
        %v1146 = vpack.c.b16 %v1010, %v1002
        %v1147 = vpack.c.b16 %v1019, %v1011
        %v1148 = vpack.c.b16 %v1020, %v1012
        %v1149 = vpack.c.b16 %v1021, %v1013
        %v1150 = vpack.c.b16 %v1022, %v1014
        %v1151 = vpack.c.b16 %v1023, %v1015
        %v1152 = vpack.c.b16 %v1024, %v1016
        %v1153 = vpack.c.b16 %v1025, %v1017
        %v1154 = vpack.c.b16 %v1026, %v1018
        %1283 = vmatprep.subr.bf16.mxu0 %v1028
        %1284 = vmatpush1.bf16.msra.mxu0 %v1027
        %1285 = vmatprep.subr.bf16.mxu0 %v1036
        %1286 = vmatpush1.bf16.msra.mxu0 %v1035
        %1287 = vmatprep.subr.bf16.mxu0 %v1044
        %1288 = vmatpush1.bf16.msra.mxu0 %v1043
        %1289 = vmatprep.subr.bf16.mxu0 %v1052
        %1290 = vmatpush1.bf16.msra.mxu0 %v1051
        %1291 = vmatprep.subr.bf16.mxu0 %v1060
        %1292 = vmatpush1.bf16.msra.mxu0 %v1059
        %1293 = vmatprep.subr.bf16.mxu0 %v1068
        %1294 = vmatpush1.bf16.msra.mxu0 %v1067
        %1295 = vmatprep.subr.bf16.mxu0 %v1076
        %1296 = vmatpush1.bf16.msra.mxu0 %v1075
        %1297 = vmatprep.subr.bf16.mxu0 %v1084
        %1298 = vmatpush1.bf16.msra.mxu0 %v1083
        %1299 = vmatprep.subr.bf16.mxu0 %v1092
        %1300 = vmatpush1.bf16.msra.mxu0 %v1091
        %1301 = vmatprep.subr.bf16.mxu0 %v1100
        %1302 = vmatpush1.bf16.msra.mxu0 %v1099
        %1303 = vmatprep.subr.bf16.mxu0 %v1108
        %1304 = vmatpush1.bf16.msra.mxu0 %v1107
        %1305 = vmatprep.subr.bf16.mxu0 %v1116
        %1306 = vmatpush1.bf16.msra.mxu0 %v1115
        %1307 = vmatprep.subr.bf16.mxu0 %v1124
        %1308 = vmatpush1.bf16.msra.mxu0 %v1123
        %1309 = vmatprep.subr.bf16.mxu0 %v1132
        %1310 = vmatpush1.bf16.msra.mxu0 %v1131
        %1311 = vmatprep.subr.bf16.mxu0 %v1140
        %1312 = vmatpush1.bf16.msra.mxu0 %v1139
        %1313 = vmatprep.subr.bf16.mxu0 %v1148
        %1314 = vmatpush1.bf16.msra.mxu0 %v1147
        %1315 = vmatprep.mubr.bf16.mxu0 %v472
        %1316 = vmatmul.mubr.bf16.gmra.mrb[0].mxu0 %v471
        %v1317 = vpop.f32.mrb[0].mxu0
        %v1318 = vadd.f32 %v606, %v1317
        %v1319 = vpop.f32.mrb[0].mxu0
        %v1320 = vadd.f32 %v610, %v1319
        %v1321 = vpop.f32.mrb[0].mxu0
        %v1322 = vadd.f32 %v606, %v1321
        %v1323 = vpop.f32.mrb[0].mxu0
        %v1324 = vadd.f32 %v610, %v1323
        %1325 = vdwg.mxu0
        %1326 = vmatprep.subr.bf16.mxu0 %v1030
        %1327 = vmatpush1.bf16.msra.mxu0 %v1029
        %1328 = vmatprep.subr.bf16.mxu0 %v1038
        %1329 = vmatpush1.bf16.msra.mxu0 %v1037
        %1330 = vmatprep.subr.bf16.mxu0 %v1046
        %1331 = vmatpush1.bf16.msra.mxu0 %v1045
        %1332 = vmatprep.subr.bf16.mxu0 %v1054
        %1333 = vmatpush1.bf16.msra.mxu0 %v1053
        %1334 = vmatprep.subr.bf16.mxu0 %v1062
        %1335 = vmatpush1.bf16.msra.mxu0 %v1061
        %1336 = vmatprep.subr.bf16.mxu0 %v1070
        %1337 = vmatpush1.bf16.msra.mxu0 %v1069
        %1338 = vmatprep.subr.bf16.mxu0 %v1078
        %1339 = vmatpush1.bf16.msra.mxu0 %v1077
        %1340 = vmatprep.subr.bf16.mxu0 %v1086
        %1341 = vmatpush1.bf16.msra.mxu0 %v1085
        %1342 = vmatprep.subr.bf16.mxu0 %v1094
        %1343 = vmatpush1.bf16.msra.mxu0 %v1093
        %1344 = vmatprep.subr.bf16.mxu0 %v1102
        %1345 = vmatpush1.bf16.msra.mxu0 %v1101
        %1346 = vmatprep.subr.bf16.mxu0 %v1110
        %1347 = vmatpush1.bf16.msra.mxu0 %v1109
        %1348 = vmatprep.subr.bf16.mxu0 %v1118
        %1349 = vmatpush1.bf16.msra.mxu0 %v1117
        %1350 = vmatprep.subr.bf16.mxu0 %v1126
        %1351 = vmatpush1.bf16.msra.mxu0 %v1125
        %1352 = vmatprep.subr.bf16.mxu0 %v1134
        %1353 = vmatpush1.bf16.msra.mxu0 %v1133
        %1354 = vmatprep.subr.bf16.mxu0 %v1142
        %1355 = vmatpush1.bf16.msra.mxu0 %v1141
        %1356 = vmatprep.subr.bf16.mxu0 %v1150
        %1357 = vmatpush1.bf16.msra.mxu0 %v1149
        %1358 = vmatprep.mubr.bf16.mxu0 %v472
        %1359 = vmatmul.mubr.bf16.gmra.mrb[0].mxu0 %v471
        %v1360 = vpop.f32.mrb[0].mxu0
        %v1361 = vadd.f32 %v614, %v1360
        %v1362 = vpop.f32.mrb[0].mxu0
        %v1363 = vadd.f32 %v618, %v1362
        %v1364 = vpop.f32.mrb[0].mxu0
        %v1365 = vadd.f32 %v614, %v1364
        %v1366 = vpop.f32.mrb[0].mxu0
        %v1367 = vadd.f32 %v618, %v1366
        %1368 = vdwg.mxu0
        %1369 = vmatprep.subr.bf16.mxu0 %v1032
        %1370 = vmatpush1.bf16.msra.mxu0 %v1031
        %1371 = vmatprep.subr.bf16.mxu0 %v1040
        %1372 = vmatpush1.bf16.msra.mxu0 %v1039
        %1373 = vmatprep.subr.bf16.mxu0 %v1048
        %1374 = vmatpush1.bf16.msra.mxu0 %v1047
        %1375 = vmatprep.subr.bf16.mxu0 %v1056
        %1376 = vmatpush1.bf16.msra.mxu0 %v1055
        %1377 = vmatprep.subr.bf16.mxu0 %v1064
        %1378 = vmatpush1.bf16.msra.mxu0 %v1063
        %1379 = vmatprep.subr.bf16.mxu0 %v1072
        %1380 = vmatpush1.bf16.msra.mxu0 %v1071
        %1381 = vmatprep.subr.bf16.mxu0 %v1080
        %1382 = vmatpush1.bf16.msra.mxu0 %v1079
        %1383 = vmatprep.subr.bf16.mxu0 %v1088
        %1384 = vmatpush1.bf16.msra.mxu0 %v1087
        %1385 = vmatprep.subr.bf16.mxu0 %v1096
        %1386 = vmatpush1.bf16.msra.mxu0 %v1095
        %1387 = vmatprep.subr.bf16.mxu0 %v1104
        %1388 = vmatpush1.bf16.msra.mxu0 %v1103
        %1389 = vmatprep.subr.bf16.mxu0 %v1112
        %1390 = vmatpush1.bf16.msra.mxu0 %v1111
        %1391 = vmatprep.subr.bf16.mxu0 %v1120
        %1392 = vmatpush1.bf16.msra.mxu0 %v1119
        %1393 = vmatprep.subr.bf16.mxu0 %v1128
        %1394 = vmatpush1.bf16.msra.mxu0 %v1127
        %1395 = vmatprep.subr.bf16.mxu0 %v1136
        %1396 = vmatpush1.bf16.msra.mxu0 %v1135
        %1397 = vmatprep.subr.bf16.mxu0 %v1144
        %1398 = vmatpush1.bf16.msra.mxu0 %v1143
        %1399 = vmatprep.subr.bf16.mxu0 %v1152
        %1400 = vmatpush1.bf16.msra.mxu0 %v1151
        %1401 = vmatprep.mubr.bf16.mxu0 %v472
        %1402 = vmatmul.mubr.bf16.gmra.mrb[0].mxu0 %v471
        %v1403 = vpop.f32.mrb[0].mxu0
        %v1404 = vadd.f32 %v622, %v1403
        %v1405 = vpop.f32.mrb[0].mxu0
        %v1406 = vadd.f32 %v626, %v1405
        %v1407 = vpop.f32.mrb[0].mxu0
        %v1408 = vadd.f32 %v622, %v1407
        %v1409 = vpop.f32.mrb[0].mxu0
        %v1410 = vadd.f32 %v626, %v1409
        %1411 = vdwg.mxu0
        %1412 = vmatprep.subr.bf16.mxu0 %v1034
        %1413 = vmatpush1.bf16.msra.mxu0 %v1033
        %1414 = vmatprep.subr.bf16.mxu0 %v1042
        %1415 = vmatpush1.bf16.msra.mxu0 %v1041
        %1416 = vmatprep.subr.bf16.mxu0 %v1050
        %1417 = vmatpush1.bf16.msra.mxu0 %v1049
        %1418 = vmatprep.subr.bf16.mxu0 %v1058
        %1419 = vmatpush1.bf16.msra.mxu0 %v1057
        %1420 = vmatprep.subr.bf16.mxu0 %v1066
        %1421 = vmatpush1.bf16.msra.mxu0 %v1065
        %1422 = vmatprep.subr.bf16.mxu0 %v1074
        %1423 = vmatpush1.bf16.msra.mxu0 %v1073
        %1424 = vmatprep.subr.bf16.mxu0 %v1082
        %1425 = vmatpush1.bf16.msra.mxu0 %v1081
        %1426 = vmatprep.subr.bf16.mxu0 %v1090
        %1427 = vmatpush1.bf16.msra.mxu0 %v1089
        %1428 = vmatprep.subr.bf16.mxu0 %v1098
        %1429 = vmatpush1.bf16.msra.mxu0 %v1097
        %1430 = vmatprep.subr.bf16.mxu0 %v1106
        %1431 = vmatpush1.bf16.msra.mxu0 %v1105
        %1432 = vmatprep.subr.bf16.mxu0 %v1114
        %1433 = vmatpush1.bf16.msra.mxu0 %v1113
        %1434 = vmatprep.subr.bf16.mxu0 %v1122
        %1435 = vmatpush1.bf16.msra.mxu0 %v1121
        %1436 = vmatprep.subr.bf16.mxu0 %v1130
        %1437 = vmatpush1.bf16.msra.mxu0 %v1129
        %1438 = vmatprep.subr.bf16.mxu0 %v1138
        %1439 = vmatpush1.bf16.msra.mxu0 %v1137
        %1440 = vmatprep.subr.bf16.mxu0 %v1146
        %1441 = vmatpush1.bf16.msra.mxu0 %v1145
        %1442 = vmatprep.subr.bf16.mxu0 %v1154
        %1443 = vmatpush1.bf16.msra.mxu0 %v1153
        %1444 = vmatprep.mubr.bf16.mxu0 %v472
        %1445 = vmatmul.mubr.bf16.gmra.mrb[0].mxu0 %v471
        %v1446 = vpop.f32.mrb[0].mxu0
        %v1447 = vadd.f32 %v630, %v1446
        %v1448 = vpop.f32.mrb[0].mxu0
        %v1449 = vadd.f32 %v634, %v1448
        %v1450 = vpop.f32.mrb[0].mxu0
        %v1451 = vadd.f32 %v630, %v1450
        %v1452 = vpop.f32.mrb[0].mxu0
        %v1453 = vadd.f32 %v634, %v1452
        %1454 = vdwg.mxu0
        %v1455 = vmax.f32 %v1318, 0.0
        %v1456 = vmax.f32 %v1320, 0.0
        %v1457 = vmax.f32 %v1361, 0.0
        %v1458 = vmax.f32 %v1363, 0.0
        %v1459 = vmax.f32 %v1404, 0.0
        %v1460 = vmax.f32 %v1406, 0.0
        %v1461 = vmax.f32 %v1447, 0.0
        %v1462 = vmax.f32 %v1449, 0.0
        %v1463 = vmax.f32 %v1322, 0.0
        %v1464 = vmax.f32 %v1324, 0.0
        %v1465 = vmax.f32 %v1365, 0.0
        %v1466 = vmax.f32 %v1367, 0.0
        %v1467 = vmax.f32 %v1408, 0.0
        %v1468 = vmax.f32 %v1410, 0.0
        %v1469 = vmax.f32 %v1451, 0.0
        %v1470 = vmax.f32 %v1453, 0.0
        %v1471 = vpack.c.bf16 %v1463, %v1455
        %v1472 = vpack.c.bf16 %v1464, %v1456
        %v1473 = vpack.c.bf16 %v1465, %v1457
        %v1474 = vpack.c.bf16 %v1466, %v1458
        %v1475 = vpack.c.bf16 %v1467, %v1459
        %v1476 = vpack.c.bf16 %v1468, %v1460
        %v1477 = vpack.c.bf16 %v1469, %v1461
        %v1478 = vpack.c.bf16 %v1470, %v1462
        %v1479 = vld [vmem:[#allocation8] sm:$0xff]
        %v1480 = vld [vmem:[#allocation8 + $0x8] sm:$0xff]
        %v1481 = vld [vmem:[#allocation8 + $0x10] sm:$0xff]
        %v1482 = vld [vmem:[#allocation8 + $0x18] sm:$0xff]
        %v1483 = vld [vmem:[#allocation8 + $0x20] sm:$0xff]
        %v1484 = vld [vmem:[#allocation8 + $0x28] sm:$0xff]
        %v1485 = vld [vmem:[#allocation8 + $0x30] sm:$0xff]
        %v1486 = vld [vmem:[#allocation8 + $0x38] sm:$0xff]
        %v1487 = vld [vmem:[#allocation8 + $0x40] sm:$0xff]
        %v1488 = vld [vmem:[#allocation8 + $0x48] sm:$0xff]
        %v1489 = vld [vmem:[#allocation8 + $0x50] sm:$0xff]
        %v1490 = vld [vmem:[#allocation8 + $0x58] sm:$0xff]
        %v1491 = vld [vmem:[#allocation8 + $0x60] sm:$0xff]
        %v1492 = vld [vmem:[#allocation8 + $0x68] sm:$0xff]
        %v1493 = vld [vmem:[#allocation8 + $0x70] sm:$0xff]
        %v1494 = vld [vmem:[#allocation8 + $0x78] sm:$0xff]
        %v1495 = vld [vmem:[#allocation8 + $0x80] sm:$0xff]
        %v1496 = vld [vmem:[#allocation8 + $0x88] sm:$0xff]
        %v1497 = vld [vmem:[#allocation8 + $0x90] sm:$0xff]
        %v1498 = vld [vmem:[#allocation8 + $0x98] sm:$0xff]
        %v1499 = vld [vmem:[#allocation8 + $0xa0] sm:$0xff]
        %v1500 = vld [vmem:[#allocation8 + $0xa8] sm:$0xff]
        %v1501 = vld [vmem:[#allocation8 + $0xb0] sm:$0xff]
        %v1502 = vld [vmem:[#allocation8 + $0xb8] sm:$0xff]
        %v1503 = vld [vmem:[#allocation8 + $0xc0] sm:$0xff]
        %v1504 = vld [vmem:[#allocation8 + $0xc8] sm:$0xff]
        %v1505 = vld [vmem:[#allocation8 + $0xd0] sm:$0xff]
        %v1506 = vld [vmem:[#allocation8 + $0xd8] sm:$0xff]
        %v1507 = vld [vmem:[#allocation8 + $0xe0] sm:$0xff]
        %v1508 = vld [vmem:[#allocation8 + $0xe8] sm:$0xff]
        %v1509 = vld [vmem:[#allocation8 + $0xf0] sm:$0xff]
        %v1510 = vld [vmem:[#allocation8 + $0xf8] sm:$0xff]
        %v1511 = vld [vmem:[#allocation8 + $0x100] sm:$0xff]
        %v1512 = vld [vmem:[#allocation8 + $0x108] sm:$0xff]
        %v1513 = vld [vmem:[#allocation8 + $0x110] sm:$0xff]
        %v1514 = vld [vmem:[#allocation8 + $0x118] sm:$0xff]
        %v1515 = vld [vmem:[#allocation8 + $0x120] sm:$0xff]
        %v1516 = vld [vmem:[#allocation8 + $0x128] sm:$0xff]
        %v1517 = vld [vmem:[#allocation8 + $0x130] sm:$0xff]
        %v1518 = vld [vmem:[#allocation8 + $0x138] sm:$0xff]
        %v1519 = vld [vmem:[#allocation8 + $0x140] sm:$0xff]
        %v1520 = vld [vmem:[#allocation8 + $0x148] sm:$0xff]
        %v1521 = vld [vmem:[#allocation8 + $0x150] sm:$0xff]
        %v1522 = vld [vmem:[#allocation8 + $0x158] sm:$0xff]
        %v1523 = vld [vmem:[#allocation8 + $0x160] sm:$0xff]
        %v1524 = vld [vmem:[#allocation8 + $0x168] sm:$0xff]
        %v1525 = vld [vmem:[#allocation8 + $0x170] sm:$0xff]
        %v1526 = vld [vmem:[#allocation8 + $0x178] sm:$0xff]
        %v1527 = vld [vmem:[#allocation8 + $0x180] sm:$0xff]
        %v1528 = vld [vmem:[#allocation8 + $0x188] sm:$0xff]
        %v1529 = vld [vmem:[#allocation8 + $0x190] sm:$0xff]
        %v1530 = vld [vmem:[#allocation8 + $0x198] sm:$0xff]
        %v1531 = vld [vmem:[#allocation8 + $0x1a0] sm:$0xff]
        %v1532 = vld [vmem:[#allocation8 + $0x1a8] sm:$0xff]
        %v1533 = vld [vmem:[#allocation8 + $0x1b0] sm:$0xff]
        %v1534 = vld [vmem:[#allocation8 + $0x1b8] sm:$0xff]
        %v1535 = vld [vmem:[#allocation8 + $0x1c0] sm:$0xff]
        %v1536 = vld [vmem:[#allocation8 + $0x1c8] sm:$0xff]
        %v1537 = vld [vmem:[#allocation8 + $0x1d0] sm:$0xff]
        %v1538 = vld [vmem:[#allocation8 + $0x1d8] sm:$0xff]
        %v1539 = vld [vmem:[#allocation8 + $0x1e0] sm:$0xff]
        %v1540 = vld [vmem:[#allocation8 + $0x1e8] sm:$0xff]
        %v1541 = vld [vmem:[#allocation8 + $0x1f0] sm:$0xff]
        %v1542 = vld [vmem:[#allocation8 + $0x1f8] sm:$0xff]
        %v1543 = vld [vmem:[#allocation8 + $0x200] sm:$0xff]
        %v1544 = vld [vmem:[#allocation8 + $0x208] sm:$0xff]
        %v1545 = vld [vmem:[#allocation8 + $0x210] sm:$0xff]
        %v1546 = vld [vmem:[#allocation8 + $0x218] sm:$0xff]
        %v1547 = vld [vmem:[#allocation8 + $0x220] sm:$0xff]
        %v1548 = vld [vmem:[#allocation8 + $0x228] sm:$0xff]
        %v1549 = vld [vmem:[#allocation8 + $0x230] sm:$0xff]
        %v1550 = vld [vmem:[#allocation8 + $0x238] sm:$0xff]
        %v1551 = vld [vmem:[#allocation8 + $0x240] sm:$0xff]
        %v1552 = vld [vmem:[#allocation8 + $0x248] sm:$0xff]
        %v1553 = vld [vmem:[#allocation8 + $0x250] sm:$0xff]
        %v1554 = vld [vmem:[#allocation8 + $0x258] sm:$0xff]
        %v1555 = vld [vmem:[#allocation8 + $0x260] sm:$0xff]
        %v1556 = vld [vmem:[#allocation8 + $0x268] sm:$0xff]
        %v1557 = vld [vmem:[#allocation8 + $0x270] sm:$0xff]
        %v1558 = vld [vmem:[#allocation8 + $0x278] sm:$0xff]
        %v1559 = vld [vmem:[#allocation8 + $0x280] sm:$0xff]
        %v1560 = vld [vmem:[#allocation8 + $0x288] sm:$0xff]
        %v1561 = vld [vmem:[#allocation8 + $0x290] sm:$0xff]
        %v1562 = vld [vmem:[#allocation8 + $0x298] sm:$0xff]
        %v1563 = vld [vmem:[#allocation8 + $0x2a0] sm:$0xff]
        %v1564 = vld [vmem:[#allocation8 + $0x2a8] sm:$0xff]
        %v1565 = vld [vmem:[#allocation8 + $0x2b0] sm:$0xff]
        %v1566 = vld [vmem:[#allocation8 + $0x2b8] sm:$0xff]
        %v1567 = vld [vmem:[#allocation8 + $0x2c0] sm:$0xff]
        %v1568 = vld [vmem:[#allocation8 + $0x2c8] sm:$0xff]
        %v1569 = vld [vmem:[#allocation8 + $0x2d0] sm:$0xff]
        %v1570 = vld [vmem:[#allocation8 + $0x2d8] sm:$0xff]
        %v1571 = vld [vmem:[#allocation8 + $0x2e0] sm:$0xff]
        %v1572 = vld [vmem:[#allocation8 + $0x2e8] sm:$0xff]
        %v1573 = vld [vmem:[#allocation8 + $0x2f0] sm:$0xff]
        %v1574 = vld [vmem:[#allocation8 + $0x2f8] sm:$0xff]
        %v1575 = vld [vmem:[#allocation8 + $0x300] sm:$0xff]
        %v1576 = vld [vmem:[#allocation8 + $0x308] sm:$0xff]
        %v1577 = vld [vmem:[#allocation8 + $0x310] sm:$0xff]
        %v1578 = vld [vmem:[#allocation8 + $0x318] sm:$0xff]
        %v1579 = vld [vmem:[#allocation8 + $0x320] sm:$0xff]
        %v1580 = vld [vmem:[#allocation8 + $0x328] sm:$0xff]
        %v1581 = vld [vmem:[#allocation8 + $0x330] sm:$0xff]
        %v1582 = vld [vmem:[#allocation8 + $0x338] sm:$0xff]
        %v1583 = vld [vmem:[#allocation8 + $0x340] sm:$0xff]
        %v1584 = vld [vmem:[#allocation8 + $0x348] sm:$0xff]
        %v1585 = vld [vmem:[#allocation8 + $0x350] sm:$0xff]
        %v1586 = vld [vmem:[#allocation8 + $0x358] sm:$0xff]
        %v1587 = vld [vmem:[#allocation8 + $0x360] sm:$0xff]
        %v1588 = vld [vmem:[#allocation8 + $0x368] sm:$0xff]
        %v1589 = vld [vmem:[#allocation8 + $0x370] sm:$0xff]
        %v1590 = vld [vmem:[#allocation8 + $0x378] sm:$0xff]
        %v1591 = vld [vmem:[#allocation8 + $0x380] sm:$0xff]
        %v1592 = vld [vmem:[#allocation8 + $0x388] sm:$0xff]
        %v1593 = vld [vmem:[#allocation8 + $0x390] sm:$0xff]
        %v1594 = vld [vmem:[#allocation8 + $0x398] sm:$0xff]
        %v1595 = vld [vmem:[#allocation8 + $0x3a0] sm:$0xff]
        %v1596 = vld [vmem:[#allocation8 + $0x3a8] sm:$0xff]
        %v1597 = vld [vmem:[#allocation8 + $0x3b0] sm:$0xff]
        %v1598 = vld [vmem:[#allocation8 + $0x3b8] sm:$0xff]
        %v1599 = vld [vmem:[#allocation8 + $0x3c0] sm:$0xff]
        %v1600 = vld [vmem:[#allocation8 + $0x3c8] sm:$0xff]
        %v1601 = vld [vmem:[#allocation8 + $0x3d0] sm:$0xff]
        %v1602 = vld [vmem:[#allocation8 + $0x3d8] sm:$0xff]
        %v1603 = vld [vmem:[#allocation8 + $0x3e0] sm:$0xff]
        %v1604 = vld [vmem:[#allocation8 + $0x3e8] sm:$0xff]
        %v1605 = vld [vmem:[#allocation8 + $0x3f0] sm:$0xff]
        %v1606 = vld [vmem:[#allocation8 + $0x3f8] sm:$0xff]
        %v1607 = vld [vmem:[#allocation8 + $0x400] sm:$0xff]
        %v1608 = vld [vmem:[#allocation8 + $0x408] sm:$0xff]
        %v1609 = vld [vmem:[#allocation8 + $0x410] sm:$0xff]
        %v1610 = vld [vmem:[#allocation8 + $0x418] sm:$0xff]
        %v1611 = vld [vmem:[#allocation8 + $0x420] sm:$0xff]
        %v1612 = vld [vmem:[#allocation8 + $0x428] sm:$0xff]
        %v1613 = vld [vmem:[#allocation8 + $0x430] sm:$0xff]
        %v1614 = vld [vmem:[#allocation8 + $0x438] sm:$0xff]
        %v1615 = vld [vmem:[#allocation8 + $0x440] sm:$0xff]
        %v1616 = vld [vmem:[#allocation8 + $0x448] sm:$0xff]
        %v1617 = vld [vmem:[#allocation8 + $0x450] sm:$0xff]
        %v1618 = vld [vmem:[#allocation8 + $0x458] sm:$0xff]
        %v1619 = vld [vmem:[#allocation8 + $0x460] sm:$0xff]
        %v1620 = vld [vmem:[#allocation8 + $0x468] sm:$0xff]
        %v1621 = vld [vmem:[#allocation8 + $0x470] sm:$0xff]
        %v1622 = vld [vmem:[#allocation8 + $0x478] sm:$0xff]
        %v1623 = vld [vmem:[#allocation8 + $0x480] sm:$0xff]
        %v1624 = vld [vmem:[#allocation8 + $0x488] sm:$0xff]
        %v1625 = vld [vmem:[#allocation8 + $0x490] sm:$0xff]
        %v1626 = vld [vmem:[#allocation8 + $0x498] sm:$0xff]
        %v1627 = vld [vmem:[#allocation8 + $0x4a0] sm:$0xff]
        %v1628 = vld [vmem:[#allocation8 + $0x4a8] sm:$0xff]
        %v1629 = vld [vmem:[#allocation8 + $0x4b0] sm:$0xff]
        %v1630 = vld [vmem:[#allocation8 + $0x4b8] sm:$0xff]
        %v1631 = vld [vmem:[#allocation8 + $0x4c0] sm:$0xff]
        %v1632 = vld [vmem:[#allocation8 + $0x4c8] sm:$0xff]
        %v1633 = vld [vmem:[#allocation8 + $0x4d0] sm:$0xff]
        %v1634 = vld [vmem:[#allocation8 + $0x4d8] sm:$0xff]
        %v1635 = vld [vmem:[#allocation8 + $0x4e0] sm:$0xff]
        %v1636 = vld [vmem:[#allocation8 + $0x4e8] sm:$0xff]
        %v1637 = vld [vmem:[#allocation8 + $0x4f0] sm:$0xff]
        %v1638 = vld [vmem:[#allocation8 + $0x4f8] sm:$0xff]
        %v1639 = vld [vmem:[#allocation8 + $0x500] sm:$0xff]
        %v1640 = vld [vmem:[#allocation8 + $0x508] sm:$0xff]
        %v1641 = vld [vmem:[#allocation8 + $0x510] sm:$0xff]
        %v1642 = vld [vmem:[#allocation8 + $0x518] sm:$0xff]
        %v1643 = vld [vmem:[#allocation8 + $0x520] sm:$0xff]
        %v1644 = vld [vmem:[#allocation8 + $0x528] sm:$0xff]
        %v1645 = vld [vmem:[#allocation8 + $0x530] sm:$0xff]
        %v1646 = vld [vmem:[#allocation8 + $0x538] sm:$0xff]
        %v1647 = vld [vmem:[#allocation8 + $0x540] sm:$0xff]
        %v1648 = vld [vmem:[#allocation8 + $0x548] sm:$0xff]
        %v1649 = vld [vmem:[#allocation8 + $0x550] sm:$0xff]
        %v1650 = vld [vmem:[#allocation8 + $0x558] sm:$0xff]
        %v1651 = vld [vmem:[#allocation8 + $0x560] sm:$0xff]
        %v1652 = vld [vmem:[#allocation8 + $0x568] sm:$0xff]
        %v1653 = vld [vmem:[#allocation8 + $0x570] sm:$0xff]
        %v1654 = vld [vmem:[#allocation8 + $0x578] sm:$0xff]
        %v1655 = vld [vmem:[#allocation8 + $0x580] sm:$0xff]
        %v1656 = vld [vmem:[#allocation8 + $0x588] sm:$0xff]
        %v1657 = vld [vmem:[#allocation8 + $0x590] sm:$0xff]
        %v1658 = vld [vmem:[#allocation8 + $0x598] sm:$0xff]
        %v1659 = vld [vmem:[#allocation8 + $0x5a0] sm:$0xff]
        %v1660 = vld [vmem:[#allocation8 + $0x5a8] sm:$0xff]
        %v1661 = vld [vmem:[#allocation8 + $0x5b0] sm:$0xff]
        %v1662 = vld [vmem:[#allocation8 + $0x5b8] sm:$0xff]
        %v1663 = vld [vmem:[#allocation8 + $0x5c0] sm:$0xff]
        %v1664 = vld [vmem:[#allocation8 + $0x5c8] sm:$0xff]
        %v1665 = vld [vmem:[#allocation8 + $0x5d0] sm:$0xff]
        %v1666 = vld [vmem:[#allocation8 + $0x5d8] sm:$0xff]
        %v1667 = vld [vmem:[#allocation8 + $0x5e0] sm:$0xff]
        %v1668 = vld [vmem:[#allocation8 + $0x5e8] sm:$0xff]
        %v1669 = vld [vmem:[#allocation8 + $0x5f0] sm:$0xff]
        %v1670 = vld [vmem:[#allocation8 + $0x5f8] sm:$0xff]
        %v1671 = vld [vmem:[#allocation8 + $0x600] sm:$0xff]
        %v1672 = vld [vmem:[#allocation8 + $0x608] sm:$0xff]
        %v1673 = vld [vmem:[#allocation8 + $0x610] sm:$0xff]
        %v1674 = vld [vmem:[#allocation8 + $0x618] sm:$0xff]
        %v1675 = vld [vmem:[#allocation8 + $0x620] sm:$0xff]
        %v1676 = vld [vmem:[#allocation8 + $0x628] sm:$0xff]
        %v1677 = vld [vmem:[#allocation8 + $0x630] sm:$0xff]
        %v1678 = vld [vmem:[#allocation8 + $0x638] sm:$0xff]
        %v1679 = vld [vmem:[#allocation8 + $0x640] sm:$0xff]
        %v1680 = vld [vmem:[#allocation8 + $0x648] sm:$0xff]
        %v1681 = vld [vmem:[#allocation8 + $0x650] sm:$0xff]
        %v1682 = vld [vmem:[#allocation8 + $0x658] sm:$0xff]
        %v1683 = vld [vmem:[#allocation8 + $0x660] sm:$0xff]
        %v1684 = vld [vmem:[#allocation8 + $0x668] sm:$0xff]
        %v1685 = vld [vmem:[#allocation8 + $0x670] sm:$0xff]
        %v1686 = vld [vmem:[#allocation8 + $0x678] sm:$0xff]
        %v1687 = vld [vmem:[#allocation8 + $0x680] sm:$0xff]
        %v1688 = vld [vmem:[#allocation8 + $0x688] sm:$0xff]
        %v1689 = vld [vmem:[#allocation8 + $0x690] sm:$0xff]
        %v1690 = vld [vmem:[#allocation8 + $0x698] sm:$0xff]
        %v1691 = vld [vmem:[#allocation8 + $0x6a0] sm:$0xff]
        %v1692 = vld [vmem:[#allocation8 + $0x6a8] sm:$0xff]
        %v1693 = vld [vmem:[#allocation8 + $0x6b0] sm:$0xff]
        %v1694 = vld [vmem:[#allocation8 + $0x6b8] sm:$0xff]
        %v1695 = vld [vmem:[#allocation8 + $0x6c0] sm:$0xff]
        %v1696 = vld [vmem:[#allocation8 + $0x6c8] sm:$0xff]
        %v1697 = vld [vmem:[#allocation8 + $0x6d0] sm:$0xff]
        %v1698 = vld [vmem:[#allocation8 + $0x6d8] sm:$0xff]
        %v1699 = vld [vmem:[#allocation8 + $0x6e0] sm:$0xff]
        %v1700 = vld [vmem:[#allocation8 + $0x6e8] sm:$0xff]
        %v1701 = vld [vmem:[#allocation8 + $0x6f0] sm:$0xff]
        %v1702 = vld [vmem:[#allocation8 + $0x6f8] sm:$0xff]
        %v1703 = vld [vmem:[#allocation8 + $0x700] sm:$0xff]
        %v1704 = vld [vmem:[#allocation8 + $0x708] sm:$0xff]
        %v1705 = vld [vmem:[#allocation8 + $0x710] sm:$0xff]
        %v1706 = vld [vmem:[#allocation8 + $0x718] sm:$0xff]
        %v1707 = vld [vmem:[#allocation8 + $0x720] sm:$0xff]
        %v1708 = vld [vmem:[#allocation8 + $0x728] sm:$0xff]
        %v1709 = vld [vmem:[#allocation8 + $0x730] sm:$0xff]
        %v1710 = vld [vmem:[#allocation8 + $0x738] sm:$0xff]
        %v1711 = vld [vmem:[#allocation8 + $0x740] sm:$0xff]
        %v1712 = vld [vmem:[#allocation8 + $0x748] sm:$0xff]
        %v1713 = vld [vmem:[#allocation8 + $0x750] sm:$0xff]
        %v1714 = vld [vmem:[#allocation8 + $0x758] sm:$0xff]
        %v1715 = vld [vmem:[#allocation8 + $0x760] sm:$0xff]
        %v1716 = vld [vmem:[#allocation8 + $0x768] sm:$0xff]
        %v1717 = vld [vmem:[#allocation8 + $0x770] sm:$0xff]
        %v1718 = vld [vmem:[#allocation8 + $0x778] sm:$0xff]
        %v1719 = vld [vmem:[#allocation8 + $0x780] sm:$0xff]
        %v1720 = vld [vmem:[#allocation8 + $0x788] sm:$0xff]
        %v1721 = vld [vmem:[#allocation8 + $0x790] sm:$0xff]
        %v1722 = vld [vmem:[#allocation8 + $0x798] sm:$0xff]
        %v1723 = vld [vmem:[#allocation8 + $0x7a0] sm:$0xff]
        %v1724 = vld [vmem:[#allocation8 + $0x7a8] sm:$0xff]
        %v1725 = vld [vmem:[#allocation8 + $0x7b0] sm:$0xff]
        %v1726 = vld [vmem:[#allocation8 + $0x7b8] sm:$0xff]
        %v1727 = vld [vmem:[#allocation8 + $0x7c0] sm:$0xff]
        %v1728 = vld [vmem:[#allocation8 + $0x7c8] sm:$0xff]
        %v1729 = vld [vmem:[#allocation8 + $0x7d0] sm:$0xff]
        %v1730 = vld [vmem:[#allocation8 + $0x7d8] sm:$0xff]
        %v1731 = vld [vmem:[#allocation8 + $0x7e0] sm:$0xff]
        %v1732 = vld [vmem:[#allocation8 + $0x7e8] sm:$0xff]
        %v1733 = vld [vmem:[#allocation8 + $0x7f0] sm:$0xff]
        %v1734 = vld [vmem:[#allocation8 + $0x7f8] sm:$0xff]
        %v1735 = vld [vmem:[%s4] sm:$0xf]
        %v1737 = vlaneseq
        %v1738 = vshrl.u32 %v1737, 7
        %v1739 = vsub.s32 0, %v1738
        %v1740 = vrot.slane %v1735, %v1739
        %v1741 = vlaneseq
        %v1742 = vshrl.u32 %v1741, 7
        %v1743 = vsub.s32 1, %v1742
        %v1744 = vrot.slane %v1735, %v1743
        %v1745 = vlaneseq
        %v1746 = vshrl.u32 %v1745, 7
        %v1747 = vsub.s32 2, %v1746
        %v1748 = vrot.slane %v1735, %v1747
        %v1749 = vlaneseq
        %v1750 = vshrl.u32 %v1749, 7
        %v1751 = vsub.s32 3, %v1750
        %v1752 = vrot.slane %v1735, %v1751
        %v2013 = vunpack.c.l.b16 %v1479
        %v2014 = vunpack.c.h.b16 %v1479
        %v2015 = vunpack.c.l.b16 %v1480
        %v2016 = vunpack.c.h.b16 %v1480
        %v2017 = vunpack.c.l.b16 %v1481
        %v2018 = vunpack.c.h.b16 %v1481
        %v2019 = vunpack.c.l.b16 %v1482
        %v2020 = vunpack.c.h.b16 %v1482
        %v2021 = vunpack.c.l.b16 %v1483
        %v2022 = vunpack.c.h.b16 %v1483
        %v2023 = vunpack.c.l.b16 %v1484
        %v2024 = vunpack.c.h.b16 %v1484
        %v2025 = vunpack.c.l.b16 %v1485
        %v2026 = vunpack.c.h.b16 %v1485
        %v2027 = vunpack.c.l.b16 %v1486
        %v2028 = vunpack.c.h.b16 %v1486
        %v2029 = vunpack.c.l.b16 %v1487
        %v2030 = vunpack.c.h.b16 %v1487
        %v2031 = vunpack.c.l.b16 %v1488
        %v2032 = vunpack.c.h.b16 %v1488
        %v2033 = vunpack.c.l.b16 %v1489
        %v2034 = vunpack.c.h.b16 %v1489
        %v2035 = vunpack.c.l.b16 %v1490
        %v2036 = vunpack.c.h.b16 %v1490
        %v2037 = vunpack.c.l.b16 %v1491
        %v2038 = vunpack.c.h.b16 %v1491
        %v2039 = vunpack.c.l.b16 %v1492
        %v2040 = vunpack.c.h.b16 %v1492
        %v2041 = vunpack.c.l.b16 %v1493
        %v2042 = vunpack.c.h.b16 %v1493
        %v2043 = vunpack.c.l.b16 %v1494
        %v2044 = vunpack.c.h.b16 %v1494
        %v2045 = vunpack.c.l.b16 %v1495
        %v2046 = vunpack.c.h.b16 %v1495
        %v2047 = vunpack.c.l.b16 %v1496
        %v2048 = vunpack.c.h.b16 %v1496
        %v2049 = vunpack.c.l.b16 %v1497
        %v2050 = vunpack.c.h.b16 %v1497
        %v2051 = vunpack.c.l.b16 %v1498
        %v2052 = vunpack.c.h.b16 %v1498
        %v2053 = vunpack.c.l.b16 %v1499
        %v2054 = vunpack.c.h.b16 %v1499
        %v2055 = vunpack.c.l.b16 %v1500
        %v2056 = vunpack.c.h.b16 %v1500
        %v2057 = vunpack.c.l.b16 %v1501
        %v2058 = vunpack.c.h.b16 %v1501
        %v2059 = vunpack.c.l.b16 %v1502
        %v2060 = vunpack.c.h.b16 %v1502
        %v2061 = vunpack.c.l.b16 %v1503
        %v2062 = vunpack.c.h.b16 %v1503
        %v2063 = vunpack.c.l.b16 %v1504
        %v2064 = vunpack.c.h.b16 %v1504
        %v2065 = vunpack.c.l.b16 %v1505
        %v2066 = vunpack.c.h.b16 %v1505
        %v2067 = vunpack.c.l.b16 %v1506
        %v2068 = vunpack.c.h.b16 %v1506
        %v2069 = vunpack.c.l.b16 %v1507
        %v2070 = vunpack.c.h.b16 %v1507
        %v2071 = vunpack.c.l.b16 %v1508
        %v2072 = vunpack.c.h.b16 %v1508
        %v2073 = vunpack.c.l.b16 %v1509
        %v2074 = vunpack.c.h.b16 %v1509
        %v2075 = vunpack.c.l.b16 %v1510
        %v2076 = vunpack.c.h.b16 %v1510
        %v2077 = vunpack.c.l.b16 %v1511
        %v2078 = vunpack.c.h.b16 %v1511
        %v2079 = vunpack.c.l.b16 %v1512
        %v2080 = vunpack.c.h.b16 %v1512
        %v2081 = vunpack.c.l.b16 %v1513
        %v2082 = vunpack.c.h.b16 %v1513
        %v2083 = vunpack.c.l.b16 %v1514
        %v2084 = vunpack.c.h.b16 %v1514
        %v2085 = vunpack.c.l.b16 %v1515
        %v2086 = vunpack.c.h.b16 %v1515
        %v2087 = vunpack.c.l.b16 %v1516
        %v2088 = vunpack.c.h.b16 %v1516
        %v2089 = vunpack.c.l.b16 %v1517
        %v2090 = vunpack.c.h.b16 %v1517
        %v2091 = vunpack.c.l.b16 %v1518
        %v2092 = vunpack.c.h.b16 %v1518
        %v2093 = vunpack.c.l.b16 %v1519
        %v2094 = vunpack.c.h.b16 %v1519
        %v2095 = vunpack.c.l.b16 %v1520
        %v2096 = vunpack.c.h.b16 %v1520
        %v2097 = vunpack.c.l.b16 %v1521
        %v2098 = vunpack.c.h.b16 %v1521
        %v2099 = vunpack.c.l.b16 %v1522
        %v2100 = vunpack.c.h.b16 %v1522
        %v2101 = vunpack.c.l.b16 %v1523
        %v2102 = vunpack.c.h.b16 %v1523
        %v2103 = vunpack.c.l.b16 %v1524
        %v2104 = vunpack.c.h.b16 %v1524
        %v2105 = vunpack.c.l.b16 %v1525
        %v2106 = vunpack.c.h.b16 %v1525
        %v2107 = vunpack.c.l.b16 %v1526
        %v2108 = vunpack.c.h.b16 %v1526
        %v2109 = vunpack.c.l.b16 %v1527
        %v2110 = vunpack.c.h.b16 %v1527
        %v2111 = vunpack.c.l.b16 %v1528
        %v2112 = vunpack.c.h.b16 %v1528
        %v2113 = vunpack.c.l.b16 %v1529
        %v2114 = vunpack.c.h.b16 %v1529
        %v2115 = vunpack.c.l.b16 %v1530
        %v2116 = vunpack.c.h.b16 %v1530
        %v2117 = vunpack.c.l.b16 %v1531
        %v2118 = vunpack.c.h.b16 %v1531
        %v2119 = vunpack.c.l.b16 %v1532
        %v2120 = vunpack.c.h.b16 %v1532
        %v2121 = vunpack.c.l.b16 %v1533
        %v2122 = vunpack.c.h.b16 %v1533
        %v2123 = vunpack.c.l.b16 %v1534
        %v2124 = vunpack.c.h.b16 %v1534
        %v2125 = vunpack.c.l.b16 %v1535
        %v2126 = vunpack.c.h.b16 %v1535
        %v2127 = vunpack.c.l.b16 %v1536
        %v2128 = vunpack.c.h.b16 %v1536
        %v2129 = vunpack.c.l.b16 %v1537
        %v2130 = vunpack.c.h.b16 %v1537
        %v2131 = vunpack.c.l.b16 %v1538
        %v2132 = vunpack.c.h.b16 %v1538
        %v2133 = vunpack.c.l.b16 %v1539
        %v2134 = vunpack.c.h.b16 %v1539
        %v2135 = vunpack.c.l.b16 %v1540
        %v2136 = vunpack.c.h.b16 %v1540
        %v2137 = vunpack.c.l.b16 %v1541
        %v2138 = vunpack.c.h.b16 %v1541
        %v2139 = vunpack.c.l.b16 %v1542
        %v2140 = vunpack.c.h.b16 %v1542
        %v2141 = vunpack.c.l.b16 %v1543
        %v2142 = vunpack.c.h.b16 %v1543
        %v2143 = vunpack.c.l.b16 %v1544
        %v2144 = vunpack.c.h.b16 %v1544
        %v2145 = vunpack.c.l.b16 %v1545
        %v2146 = vunpack.c.h.b16 %v1545
        %v2147 = vunpack.c.l.b16 %v1546
        %v2148 = vunpack.c.h.b16 %v1546
        %v2149 = vunpack.c.l.b16 %v1547
        %v2150 = vunpack.c.h.b16 %v1547
        %v2151 = vunpack.c.l.b16 %v1548
        %v2152 = vunpack.c.h.b16 %v1548
        %v2153 = vunpack.c.l.b16 %v1549
        %v2154 = vunpack.c.h.b16 %v1549
        %v2155 = vunpack.c.l.b16 %v1550
        %v2156 = vunpack.c.h.b16 %v1550
        %v2157 = vunpack.c.l.b16 %v1551
        %v2158 = vunpack.c.h.b16 %v1551
        %v2159 = vunpack.c.l.b16 %v1552
        %v2160 = vunpack.c.h.b16 %v1552
        %v2161 = vunpack.c.l.b16 %v1553
        %v2162 = vunpack.c.h.b16 %v1553
        %v2163 = vunpack.c.l.b16 %v1554
        %v2164 = vunpack.c.h.b16 %v1554
        %v2165 = vunpack.c.l.b16 %v1555
        %v2166 = vunpack.c.h.b16 %v1555
        %v2167 = vunpack.c.l.b16 %v1556
        %v2168 = vunpack.c.h.b16 %v1556
        %v2169 = vunpack.c.l.b16 %v1557
        %v2170 = vunpack.c.h.b16 %v1557
        %v2171 = vunpack.c.l.b16 %v1558
        %v2172 = vunpack.c.h.b16 %v1558
        %v2173 = vunpack.c.l.b16 %v1559
        %v2174 = vunpack.c.h.b16 %v1559
        %v2175 = vunpack.c.l.b16 %v1560
        %v2176 = vunpack.c.h.b16 %v1560
        %v2177 = vunpack.c.l.b16 %v1561
        %v2178 = vunpack.c.h.b16 %v1561
        %v2179 = vunpack.c.l.b16 %v1562
        %v2180 = vunpack.c.h.b16 %v1562
        %v2181 = vunpack.c.l.b16 %v1563
        %v2182 = vunpack.c.h.b16 %v1563
        %v2183 = vunpack.c.l.b16 %v1564
        %v2184 = vunpack.c.h.b16 %v1564
        %v2185 = vunpack.c.l.b16 %v1565
        %v2186 = vunpack.c.h.b16 %v1565
        %v2187 = vunpack.c.l.b16 %v1566
        %v2188 = vunpack.c.h.b16 %v1566
        %v2189 = vunpack.c.l.b16 %v1567
        %v2190 = vunpack.c.h.b16 %v1567
        %v2191 = vunpack.c.l.b16 %v1568
        %v2192 = vunpack.c.h.b16 %v1568
        %v2193 = vunpack.c.l.b16 %v1569
        %v2194 = vunpack.c.h.b16 %v1569
        %v2195 = vunpack.c.l.b16 %v1570
        %v2196 = vunpack.c.h.b16 %v1570
        %v2197 = vunpack.c.l.b16 %v1571
        %v2198 = vunpack.c.h.b16 %v1571
        %v2199 = vunpack.c.l.b16 %v1572
        %v2200 = vunpack.c.h.b16 %v1572
        %v2201 = vunpack.c.l.b16 %v1573
        %v2202 = vunpack.c.h.b16 %v1573
        %v2203 = vunpack.c.l.b16 %v1574
        %v2204 = vunpack.c.h.b16 %v1574
        %v2205 = vunpack.c.l.b16 %v1575
        %v2206 = vunpack.c.h.b16 %v1575
        %v2207 = vunpack.c.l.b16 %v1576
        %v2208 = vunpack.c.h.b16 %v1576
        %v2209 = vunpack.c.l.b16 %v1577
        %v2210 = vunpack.c.h.b16 %v1577
        %v2211 = vunpack.c.l.b16 %v1578
        %v2212 = vunpack.c.h.b16 %v1578
        %v2213 = vunpack.c.l.b16 %v1579
        %v2214 = vunpack.c.h.b16 %v1579
        %v2215 = vunpack.c.l.b16 %v1580
        %v2216 = vunpack.c.h.b16 %v1580
        %v2217 = vunpack.c.l.b16 %v1581
        %v2218 = vunpack.c.h.b16 %v1581
        %v2219 = vunpack.c.l.b16 %v1582
        %v2220 = vunpack.c.h.b16 %v1582
        %v2221 = vunpack.c.l.b16 %v1583
        %v2222 = vunpack.c.h.b16 %v1583
        %v2223 = vunpack.c.l.b16 %v1584
        %v2224 = vunpack.c.h.b16 %v1584
        %v2225 = vunpack.c.l.b16 %v1585
        %v2226 = vunpack.c.h.b16 %v1585
        %v2227 = vunpack.c.l.b16 %v1586
        %v2228 = vunpack.c.h.b16 %v1586
        %v2229 = vunpack.c.l.b16 %v1587
        %v2230 = vunpack.c.h.b16 %v1587
        %v2231 = vunpack.c.l.b16 %v1588
        %v2232 = vunpack.c.h.b16 %v1588
        %v2233 = vunpack.c.l.b16 %v1589
        %v2234 = vunpack.c.h.b16 %v1589
        %v2235 = vunpack.c.l.b16 %v1590
        %v2236 = vunpack.c.h.b16 %v1590
        %v2237 = vunpack.c.l.b16 %v1591
        %v2238 = vunpack.c.h.b16 %v1591
        %v2239 = vunpack.c.l.b16 %v1592
        %v2240 = vunpack.c.h.b16 %v1592
        %v2241 = vunpack.c.l.b16 %v1593
        %v2242 = vunpack.c.h.b16 %v1593
        %v2243 = vunpack.c.l.b16 %v1594
        %v2244 = vunpack.c.h.b16 %v1594
        %v2245 = vunpack.c.l.b16 %v1595
        %v2246 = vunpack.c.h.b16 %v1595
        %v2247 = vunpack.c.l.b16 %v1596
        %v2248 = vunpack.c.h.b16 %v1596
        %v2249 = vunpack.c.l.b16 %v1597
        %v2250 = vunpack.c.h.b16 %v1597
        %v2251 = vunpack.c.l.b16 %v1598
        %v2252 = vunpack.c.h.b16 %v1598
        %v2253 = vunpack.c.l.b16 %v1599
        %v2254 = vunpack.c.h.b16 %v1599
        %v2255 = vunpack.c.l.b16 %v1600
        %v2256 = vunpack.c.h.b16 %v1600
        %v2257 = vunpack.c.l.b16 %v1601
        %v2258 = vunpack.c.h.b16 %v1601
        %v2259 = vunpack.c.l.b16 %v1602
        %v2260 = vunpack.c.h.b16 %v1602
        %v2261 = vunpack.c.l.b16 %v1603
        %v2262 = vunpack.c.h.b16 %v1603
        %v2263 = vunpack.c.l.b16 %v1604
        %v2264 = vunpack.c.h.b16 %v1604
        %v2265 = vunpack.c.l.b16 %v1605
        %v2266 = vunpack.c.h.b16 %v1605
        %v2267 = vunpack.c.l.b16 %v1606
        %v2268 = vunpack.c.h.b16 %v1606
        %v2269 = vunpack.c.l.b16 %v1607
        %v2270 = vunpack.c.h.b16 %v1607
        %v2271 = vunpack.c.l.b16 %v1608
        %v2272 = vunpack.c.h.b16 %v1608
        %v2273 = vunpack.c.l.b16 %v1609
        %v2274 = vunpack.c.h.b16 %v1609
        %v2275 = vunpack.c.l.b16 %v1610
        %v2276 = vunpack.c.h.b16 %v1610
        %v2277 = vunpack.c.l.b16 %v1611
        %v2278 = vunpack.c.h.b16 %v1611
        %v2279 = vunpack.c.l.b16 %v1612
        %v2280 = vunpack.c.h.b16 %v1612
        %v2281 = vunpack.c.l.b16 %v1613
        %v2282 = vunpack.c.h.b16 %v1613
        %v2283 = vunpack.c.l.b16 %v1614
        %v2284 = vunpack.c.h.b16 %v1614
        %v2285 = vunpack.c.l.b16 %v1615
        %v2286 = vunpack.c.h.b16 %v1615
        %v2287 = vunpack.c.l.b16 %v1616
        %v2288 = vunpack.c.h.b16 %v1616
        %v2289 = vunpack.c.l.b16 %v1617
        %v2290 = vunpack.c.h.b16 %v1617
        %v2291 = vunpack.c.l.b16 %v1618
        %v2292 = vunpack.c.h.b16 %v1618
        %v2293 = vunpack.c.l.b16 %v1619
        %v2294 = vunpack.c.h.b16 %v1619
        %v2295 = vunpack.c.l.b16 %v1620
        %v2296 = vunpack.c.h.b16 %v1620
        %v2297 = vunpack.c.l.b16 %v1621
        %v2298 = vunpack.c.h.b16 %v1621
        %v2299 = vunpack.c.l.b16 %v1622
        %v2300 = vunpack.c.h.b16 %v1622
        %v2301 = vunpack.c.l.b16 %v1623
        %v2302 = vunpack.c.h.b16 %v1623
        %v2303 = vunpack.c.l.b16 %v1624
        %v2304 = vunpack.c.h.b16 %v1624
        %v2305 = vunpack.c.l.b16 %v1625
        %v2306 = vunpack.c.h.b16 %v1625
        %v2307 = vunpack.c.l.b16 %v1626
        %v2308 = vunpack.c.h.b16 %v1626
        %v2309 = vunpack.c.l.b16 %v1627
        %v2310 = vunpack.c.h.b16 %v1627
        %v2311 = vunpack.c.l.b16 %v1628
        %v2312 = vunpack.c.h.b16 %v1628
        %v2313 = vunpack.c.l.b16 %v1629
        %v2314 = vunpack.c.h.b16 %v1629
        %v2315 = vunpack.c.l.b16 %v1630
        %v2316 = vunpack.c.h.b16 %v1630
        %v2317 = vunpack.c.l.b16 %v1631
        %v2318 = vunpack.c.h.b16 %v1631
        %v2319 = vunpack.c.l.b16 %v1632
        %v2320 = vunpack.c.h.b16 %v1632
        %v2321 = vunpack.c.l.b16 %v1633
        %v2322 = vunpack.c.h.b16 %v1633
        %v2323 = vunpack.c.l.b16 %v1634
        %v2324 = vunpack.c.h.b16 %v1634
        %v2325 = vunpack.c.l.b16 %v1635
        %v2326 = vunpack.c.h.b16 %v1635
        %v2327 = vunpack.c.l.b16 %v1636
        %v2328 = vunpack.c.h.b16 %v1636
        %v2329 = vunpack.c.l.b16 %v1637
        %v2330 = vunpack.c.h.b16 %v1637
        %v2331 = vunpack.c.l.b16 %v1638
        %v2332 = vunpack.c.h.b16 %v1638
        %v2333 = vunpack.c.l.b16 %v1639
        %v2334 = vunpack.c.h.b16 %v1639
        %v2335 = vunpack.c.l.b16 %v1640
        %v2336 = vunpack.c.h.b16 %v1640
        %v2337 = vunpack.c.l.b16 %v1641
        %v2338 = vunpack.c.h.b16 %v1641
        %v2339 = vunpack.c.l.b16 %v1642
        %v2340 = vunpack.c.h.b16 %v1642
        %v2341 = vunpack.c.l.b16 %v1643
        %v2342 = vunpack.c.h.b16 %v1643
        %v2343 = vunpack.c.l.b16 %v1644
        %v2344 = vunpack.c.h.b16 %v1644
        %v2345 = vunpack.c.l.b16 %v1645
        %v2346 = vunpack.c.h.b16 %v1645
        %v2347 = vunpack.c.l.b16 %v1646
        %v2348 = vunpack.c.h.b16 %v1646
        %v2349 = vunpack.c.l.b16 %v1647
        %v2350 = vunpack.c.h.b16 %v1647
        %v2351 = vunpack.c.l.b16 %v1648
        %v2352 = vunpack.c.h.b16 %v1648
        %v2353 = vunpack.c.l.b16 %v1649
        %v2354 = vunpack.c.h.b16 %v1649
        %v2355 = vunpack.c.l.b16 %v1650
        %v2356 = vunpack.c.h.b16 %v1650
        %v2357 = vunpack.c.l.b16 %v1651
        %v2358 = vunpack.c.h.b16 %v1651
        %v2359 = vunpack.c.l.b16 %v1652
        %v2360 = vunpack.c.h.b16 %v1652
        %v2361 = vunpack.c.l.b16 %v1653
        %v2362 = vunpack.c.h.b16 %v1653
        %v2363 = vunpack.c.l.b16 %v1654
        %v2364 = vunpack.c.h.b16 %v1654
        %v2365 = vunpack.c.l.b16 %v1655
        %v2366 = vunpack.c.h.b16 %v1655
        %v2367 = vunpack.c.l.b16 %v1656
        %v2368 = vunpack.c.h.b16 %v1656
        %v2369 = vunpack.c.l.b16 %v1657
        %v2370 = vunpack.c.h.b16 %v1657
        %v2371 = vunpack.c.l.b16 %v1658
        %v2372 = vunpack.c.h.b16 %v1658
        %v2373 = vunpack.c.l.b16 %v1659
        %v2374 = vunpack.c.h.b16 %v1659
        %v2375 = vunpack.c.l.b16 %v1660
        %v2376 = vunpack.c.h.b16 %v1660
        %v2377 = vunpack.c.l.b16 %v1661
        %v2378 = vunpack.c.h.b16 %v1661
        %v2379 = vunpack.c.l.b16 %v1662
        %v2380 = vunpack.c.h.b16 %v1662
        %v2381 = vunpack.c.l.b16 %v1663
        %v2382 = vunpack.c.h.b16 %v1663
        %v2383 = vunpack.c.l.b16 %v1664
        %v2384 = vunpack.c.h.b16 %v1664
        %v2385 = vunpack.c.l.b16 %v1665
        %v2386 = vunpack.c.h.b16 %v1665
        %v2387 = vunpack.c.l.b16 %v1666
        %v2388 = vunpack.c.h.b16 %v1666
        %v2389 = vunpack.c.l.b16 %v1667
        %v2390 = vunpack.c.h.b16 %v1667
        %v2391 = vunpack.c.l.b16 %v1668
        %v2392 = vunpack.c.h.b16 %v1668
        %v2393 = vunpack.c.l.b16 %v1669
        %v2394 = vunpack.c.h.b16 %v1669
        %v2395 = vunpack.c.l.b16 %v1670
        %v2396 = vunpack.c.h.b16 %v1670
        %v2397 = vunpack.c.l.b16 %v1671
        %v2398 = vunpack.c.h.b16 %v1671
        %v2399 = vunpack.c.l.b16 %v1672
        %v2400 = vunpack.c.h.b16 %v1672
        %v2401 = vunpack.c.l.b16 %v1673
        %v2402 = vunpack.c.h.b16 %v1673
        %v2403 = vunpack.c.l.b16 %v1674
        %v2404 = vunpack.c.h.b16 %v1674
        %v2405 = vunpack.c.l.b16 %v1675
        %v2406 = vunpack.c.h.b16 %v1675
        %v2407 = vunpack.c.l.b16 %v1676
        %v2408 = vunpack.c.h.b16 %v1676
        %v2409 = vunpack.c.l.b16 %v1677
        %v2410 = vunpack.c.h.b16 %v1677
        %v2411 = vunpack.c.l.b16 %v1678
        %v2412 = vunpack.c.h.b16 %v1678
        %v2413 = vunpack.c.l.b16 %v1679
        %v2414 = vunpack.c.h.b16 %v1679
        %v2415 = vunpack.c.l.b16 %v1680
        %v2416 = vunpack.c.h.b16 %v1680
        %v2417 = vunpack.c.l.b16 %v1681
        %v2418 = vunpack.c.h.b16 %v1681
        %v2419 = vunpack.c.l.b16 %v1682
        %v2420 = vunpack.c.h.b16 %v1682
        %v2421 = vunpack.c.l.b16 %v1683
        %v2422 = vunpack.c.h.b16 %v1683
        %v2423 = vunpack.c.l.b16 %v1684
        %v2424 = vunpack.c.h.b16 %v1684
        %v2425 = vunpack.c.l.b16 %v1685
        %v2426 = vunpack.c.h.b16 %v1685
        %v2427 = vunpack.c.l.b16 %v1686
        %v2428 = vunpack.c.h.b16 %v1686
        %v2429 = vunpack.c.l.b16 %v1687
        %v2430 = vunpack.c.h.b16 %v1687
        %v2431 = vunpack.c.l.b16 %v1688
        %v2432 = vunpack.c.h.b16 %v1688
        %v2433 = vunpack.c.l.b16 %v1689
        %v2434 = vunpack.c.h.b16 %v1689
        %v2435 = vunpack.c.l.b16 %v1690
        %v2436 = vunpack.c.h.b16 %v1690
        %v2437 = vunpack.c.l.b16 %v1691
        %v2438 = vunpack.c.h.b16 %v1691
        %v2439 = vunpack.c.l.b16 %v1692
        %v2440 = vunpack.c.h.b16 %v1692
        %v2441 = vunpack.c.l.b16 %v1693
        %v2442 = vunpack.c.h.b16 %v1693
        %v2443 = vunpack.c.l.b16 %v1694
        %v2444 = vunpack.c.h.b16 %v1694
        %v2445 = vunpack.c.l.b16 %v1695
        %v2446 = vunpack.c.h.b16 %v1695
        %v2447 = vunpack.c.l.b16 %v1696
        %v2448 = vunpack.c.h.b16 %v1696
        %v2449 = vunpack.c.l.b16 %v1697
        %v2450 = vunpack.c.h.b16 %v1697
        %v2451 = vunpack.c.l.b16 %v1698
        %v2452 = vunpack.c.h.b16 %v1698
        %v2453 = vunpack.c.l.b16 %v1699
        %v2454 = vunpack.c.h.b16 %v1699
        %v2455 = vunpack.c.l.b16 %v1700
        %v2456 = vunpack.c.h.b16 %v1700
        %v2457 = vunpack.c.l.b16 %v1701
        %v2458 = vunpack.c.h.b16 %v1701
        %v2459 = vunpack.c.l.b16 %v1702
        %v2460 = vunpack.c.h.b16 %v1702
        %v2461 = vunpack.c.l.b16 %v1703
        %v2462 = vunpack.c.h.b16 %v1703
        %v2463 = vunpack.c.l.b16 %v1704
        %v2464 = vunpack.c.h.b16 %v1704
        %v2465 = vunpack.c.l.b16 %v1705
        %v2466 = vunpack.c.h.b16 %v1705
        %v2467 = vunpack.c.l.b16 %v1706
        %v2468 = vunpack.c.h.b16 %v1706
        %v2469 = vunpack.c.l.b16 %v1707
        %v2470 = vunpack.c.h.b16 %v1707
        %v2471 = vunpack.c.l.b16 %v1708
        %v2472 = vunpack.c.h.b16 %v1708
        %v2473 = vunpack.c.l.b16 %v1709
        %v2474 = vunpack.c.h.b16 %v1709
        %v2475 = vunpack.c.l.b16 %v1710
        %v2476 = vunpack.c.h.b16 %v1710
        %v2477 = vunpack.c.l.b16 %v1711
        %v2478 = vunpack.c.h.b16 %v1711
        %v2479 = vunpack.c.l.b16 %v1712
        %v2480 = vunpack.c.h.b16 %v1712
        %v2481 = vunpack.c.l.b16 %v1713
        %v2482 = vunpack.c.h.b16 %v1713
        %v2483 = vunpack.c.l.b16 %v1714
        %v2484 = vunpack.c.h.b16 %v1714
        %v2485 = vunpack.c.l.b16 %v1715
        %v2486 = vunpack.c.h.b16 %v1715
        %v2487 = vunpack.c.l.b16 %v1716
        %v2488 = vunpack.c.h.b16 %v1716
        %v2489 = vunpack.c.l.b16 %v1717
        %v2490 = vunpack.c.h.b16 %v1717
        %v2491 = vunpack.c.l.b16 %v1718
        %v2492 = vunpack.c.h.b16 %v1718
        %v2493 = vunpack.c.l.b16 %v1719
        %v2494 = vunpack.c.h.b16 %v1719
        %v2495 = vunpack.c.l.b16 %v1720
        %v2496 = vunpack.c.h.b16 %v1720
        %v2497 = vunpack.c.l.b16 %v1721
        %v2498 = vunpack.c.h.b16 %v1721
        %v2499 = vunpack.c.l.b16 %v1722
        %v2500 = vunpack.c.h.b16 %v1722
        %v2501 = vunpack.c.l.b16 %v1723
        %v2502 = vunpack.c.h.b16 %v1723
        %v2503 = vunpack.c.l.b16 %v1724
        %v2504 = vunpack.c.h.b16 %v1724
        %v2505 = vunpack.c.l.b16 %v1725
        %v2506 = vunpack.c.h.b16 %v1725
        %v2507 = vunpack.c.l.b16 %v1726
        %v2508 = vunpack.c.h.b16 %v1726
        %v2509 = vunpack.c.l.b16 %v1727
        %v2510 = vunpack.c.h.b16 %v1727
        %v2511 = vunpack.c.l.b16 %v1728
        %v2512 = vunpack.c.h.b16 %v1728
        %v2513 = vunpack.c.l.b16 %v1729
        %v2514 = vunpack.c.h.b16 %v1729
        %v2515 = vunpack.c.l.b16 %v1730
        %v2516 = vunpack.c.h.b16 %v1730
        %v2517 = vunpack.c.l.b16 %v1731
        %v2518 = vunpack.c.h.b16 %v1731
        %v2519 = vunpack.c.l.b16 %v1732
        %v2520 = vunpack.c.h.b16 %v1732
        %v2521 = vunpack.c.l.b16 %v1733
        %v2522 = vunpack.c.h.b16 %v1733
        %v2523 = vunpack.c.l.b16 %v1734
        %v2524 = vunpack.c.h.b16 %v1734
        %v2525 = vpack.c.b16 %v2017, %v2013
        %v2526 = vpack.c.b16 %v2018, %v2014
        %v2527 = vpack.c.b16 %v2019, %v2015
        %v2528 = vpack.c.b16 %v2020, %v2016
        %v2529 = vpack.c.b16 %v2025, %v2021
        %v2530 = vpack.c.b16 %v2026, %v2022
        %v2531 = vpack.c.b16 %v2027, %v2023
        %v2532 = vpack.c.b16 %v2028, %v2024
        %v2533 = vpack.c.b16 %v2033, %v2029
        %v2534 = vpack.c.b16 %v2034, %v2030
        %v2535 = vpack.c.b16 %v2035, %v2031
        %v2536 = vpack.c.b16 %v2036, %v2032
        %v2537 = vpack.c.b16 %v2041, %v2037
        %v2538 = vpack.c.b16 %v2042, %v2038
        %v2539 = vpack.c.b16 %v2043, %v2039
        %v2540 = vpack.c.b16 %v2044, %v2040
        %v2541 = vpack.c.b16 %v2049, %v2045
        %v2542 = vpack.c.b16 %v2050, %v2046
        %v2543 = vpack.c.b16 %v2051, %v2047
        %v2544 = vpack.c.b16 %v2052, %v2048
        %v2545 = vpack.c.b16 %v2057, %v2053
        %v2546 = vpack.c.b16 %v2058, %v2054
        %v2547 = vpack.c.b16 %v2059, %v2055
        %v2548 = vpack.c.b16 %v2060, %v2056
        %v2549 = vpack.c.b16 %v2065, %v2061
        %v2550 = vpack.c.b16 %v2066, %v2062
        %v2551 = vpack.c.b16 %v2067, %v2063
        %v2552 = vpack.c.b16 %v2068, %v2064
        %v2553 = vpack.c.b16 %v2073, %v2069
        %v2554 = vpack.c.b16 %v2074, %v2070
        %v2555 = vpack.c.b16 %v2075, %v2071
        %v2556 = vpack.c.b16 %v2076, %v2072
        %v2557 = vpack.c.b16 %v2081, %v2077
        %v2558 = vpack.c.b16 %v2082, %v2078
        %v2559 = vpack.c.b16 %v2083, %v2079
        %v2560 = vpack.c.b16 %v2084, %v2080
        %v2561 = vpack.c.b16 %v2089, %v2085
        %v2562 = vpack.c.b16 %v2090, %v2086
        %v2563 = vpack.c.b16 %v2091, %v2087
        %v2564 = vpack.c.b16 %v2092, %v2088
        %v2565 = vpack.c.b16 %v2097, %v2093
        %v2566 = vpack.c.b16 %v2098, %v2094
        %v2567 = vpack.c.b16 %v2099, %v2095
        %v2568 = vpack.c.b16 %v2100, %v2096
        %v2569 = vpack.c.b16 %v2105, %v2101
        %v2570 = vpack.c.b16 %v2106, %v2102
        %v2571 = vpack.c.b16 %v2107, %v2103
        %v2572 = vpack.c.b16 %v2108, %v2104
        %v2573 = vpack.c.b16 %v2113, %v2109
        %v2574 = vpack.c.b16 %v2114, %v2110
        %v2575 = vpack.c.b16 %v2115, %v2111
        %v2576 = vpack.c.b16 %v2116, %v2112
        %v2577 = vpack.c.b16 %v2121, %v2117
        %v2578 = vpack.c.b16 %v2122, %v2118
        %v2579 = vpack.c.b16 %v2123, %v2119
        %v2580 = vpack.c.b16 %v2124, %v2120
        %v2581 = vpack.c.b16 %v2129, %v2125
        %v2582 = vpack.c.b16 %v2130, %v2126
        %v2583 = vpack.c.b16 %v2131, %v2127
        %v2584 = vpack.c.b16 %v2132, %v2128
        %v2585 = vpack.c.b16 %v2137, %v2133
        %v2586 = vpack.c.b16 %v2138, %v2134
        %v2587 = vpack.c.b16 %v2139, %v2135
        %v2588 = vpack.c.b16 %v2140, %v2136
        %v2589 = vpack.c.b16 %v2145, %v2141
        %v2590 = vpack.c.b16 %v2146, %v2142
        %v2591 = vpack.c.b16 %v2147, %v2143
        %v2592 = vpack.c.b16 %v2148, %v2144
        %v2593 = vpack.c.b16 %v2153, %v2149
        %v2594 = vpack.c.b16 %v2154, %v2150
        %v2595 = vpack.c.b16 %v2155, %v2151
        %v2596 = vpack.c.b16 %v2156, %v2152
        %v2597 = vpack.c.b16 %v2161, %v2157
        %v2598 = vpack.c.b16 %v2162, %v2158
        %v2599 = vpack.c.b16 %v2163, %v2159
        %v2600 = vpack.c.b16 %v2164, %v2160
        %v2601 = vpack.c.b16 %v2169, %v2165
        %v2602 = vpack.c.b16 %v2170, %v2166
        %v2603 = vpack.c.b16 %v2171, %v2167
        %v2604 = vpack.c.b16 %v2172, %v2168
        %v2605 = vpack.c.b16 %v2177, %v2173
        %v2606 = vpack.c.b16 %v2178, %v2174
        %v2607 = vpack.c.b16 %v2179, %v2175
        %v2608 = vpack.c.b16 %v2180, %v2176
        %v2609 = vpack.c.b16 %v2185, %v2181
        %v2610 = vpack.c.b16 %v2186, %v2182
        %v2611 = vpack.c.b16 %v2187, %v2183
        %v2612 = vpack.c.b16 %v2188, %v2184
        %v2613 = vpack.c.b16 %v2193, %v2189
        %v2614 = vpack.c.b16 %v2194, %v2190
        %v2615 = vpack.c.b16 %v2195, %v2191
        %v2616 = vpack.c.b16 %v2196, %v2192
        %v2617 = vpack.c.b16 %v2201, %v2197
        %v2618 = vpack.c.b16 %v2202, %v2198
        %v2619 = vpack.c.b16 %v2203, %v2199
        %v2620 = vpack.c.b16 %v2204, %v2200
        %v2621 = vpack.c.b16 %v2209, %v2205
        %v2622 = vpack.c.b16 %v2210, %v2206
        %v2623 = vpack.c.b16 %v2211, %v2207
        %v2624 = vpack.c.b16 %v2212, %v2208
        %v2625 = vpack.c.b16 %v2217, %v2213
        %v2626 = vpack.c.b16 %v2218, %v2214
        %v2627 = vpack.c.b16 %v2219, %v2215
        %v2628 = vpack.c.b16 %v2220, %v2216
        %v2629 = vpack.c.b16 %v2225, %v2221
        %v2630 = vpack.c.b16 %v2226, %v2222
        %v2631 = vpack.c.b16 %v2227, %v2223
        %v2632 = vpack.c.b16 %v2228, %v2224
        %v2633 = vpack.c.b16 %v2233, %v2229
        %v2634 = vpack.c.b16 %v2234, %v2230
        %v2635 = vpack.c.b16 %v2235, %v2231
        %v2636 = vpack.c.b16 %v2236, %v2232
        %v2637 = vpack.c.b16 %v2241, %v2237
        %v2638 = vpack.c.b16 %v2242, %v2238
        %v2639 = vpack.c.b16 %v2243, %v2239
        %v2640 = vpack.c.b16 %v2244, %v2240
        %v2641 = vpack.c.b16 %v2249, %v2245
        %v2642 = vpack.c.b16 %v2250, %v2246
        %v2643 = vpack.c.b16 %v2251, %v2247
        %v2644 = vpack.c.b16 %v2252, %v2248
        %v2645 = vpack.c.b16 %v2257, %v2253
        %v2646 = vpack.c.b16 %v2258, %v2254
        %v2647 = vpack.c.b16 %v2259, %v2255
        %v2648 = vpack.c.b16 %v2260, %v2256
        %v2649 = vpack.c.b16 %v2265, %v2261
        %v2650 = vpack.c.b16 %v2266, %v2262
        %v2651 = vpack.c.b16 %v2267, %v2263
        %v2652 = vpack.c.b16 %v2268, %v2264
        %v2653 = vpack.c.b16 %v2273, %v2269
        %v2654 = vpack.c.b16 %v2274, %v2270
        %v2655 = vpack.c.b16 %v2275, %v2271
        %v2656 = vpack.c.b16 %v2276, %v2272
        %v2657 = vpack.c.b16 %v2281, %v2277
        %v2658 = vpack.c.b16 %v2282, %v2278
        %v2659 = vpack.c.b16 %v2283, %v2279
        %v2660 = vpack.c.b16 %v2284, %v2280
        %v2661 = vpack.c.b16 %v2289, %v2285
        %v2662 = vpack.c.b16 %v2290, %v2286
        %v2663 = vpack.c.b16 %v2291, %v2287
        %v2664 = vpack.c.b16 %v2292, %v2288
        %v2665 = vpack.c.b16 %v2297, %v2293
        %v2666 = vpack.c.b16 %v2298, %v2294
        %v2667 = vpack.c.b16 %v2299, %v2295
        %v2668 = vpack.c.b16 %v2300, %v2296
        %v2669 = vpack.c.b16 %v2305, %v2301
        %v2670 = vpack.c.b16 %v2306, %v2302
        %v2671 = vpack.c.b16 %v2307, %v2303
        %v2672 = vpack.c.b16 %v2308, %v2304
        %v2673 = vpack.c.b16 %v2313, %v2309
        %v2674 = vpack.c.b16 %v2314, %v2310
        %v2675 = vpack.c.b16 %v2315, %v2311
        %v2676 = vpack.c.b16 %v2316, %v2312
        %v2677 = vpack.c.b16 %v2321, %v2317
        %v2678 = vpack.c.b16 %v2322, %v2318
        %v2679 = vpack.c.b16 %v2323, %v2319
        %v2680 = vpack.c.b16 %v2324, %v2320
        %v2681 = vpack.c.b16 %v2329, %v2325
        %v2682 = vpack.c.b16 %v2330, %v2326
        %v2683 = vpack.c.b16 %v2331, %v2327
        %v2684 = vpack.c.b16 %v2332, %v2328
        %v2685 = vpack.c.b16 %v2337, %v2333
        %v2686 = vpack.c.b16 %v2338, %v2334
        %v2687 = vpack.c.b16 %v2339, %v2335
        %v2688 = vpack.c.b16 %v2340, %v2336
        %v2689 = vpack.c.b16 %v2345, %v2341
        %v2690 = vpack.c.b16 %v2346, %v2342
        %v2691 = vpack.c.b16 %v2347, %v2343
        %v2692 = vpack.c.b16 %v2348, %v2344
        %v2693 = vpack.c.b16 %v2353, %v2349
        %v2694 = vpack.c.b16 %v2354, %v2350
        %v2695 = vpack.c.b16 %v2355, %v2351
        %v2696 = vpack.c.b16 %v2356, %v2352
        %v2697 = vpack.c.b16 %v2361, %v2357
        %v2698 = vpack.c.b16 %v2362, %v2358
        %v2699 = vpack.c.b16 %v2363, %v2359
        %v2700 = vpack.c.b16 %v2364, %v2360
        %v2701 = vpack.c.b16 %v2369, %v2365
        %v2702 = vpack.c.b16 %v2370, %v2366
        %v2703 = vpack.c.b16 %v2371, %v2367
        %v2704 = vpack.c.b16 %v2372, %v2368
        %v2705 = vpack.c.b16 %v2377, %v2373
        %v2706 = vpack.c.b16 %v2378, %v2374
        %v2707 = vpack.c.b16 %v2379, %v2375
        %v2708 = vpack.c.b16 %v2380, %v2376
        %v2709 = vpack.c.b16 %v2385, %v2381
        %v2710 = vpack.c.b16 %v2386, %v2382
        %v2711 = vpack.c.b16 %v2387, %v2383
        %v2712 = vpack.c.b16 %v2388, %v2384
        %v2713 = vpack.c.b16 %v2393, %v2389
        %v2714 = vpack.c.b16 %v2394, %v2390
        %v2715 = vpack.c.b16 %v2395, %v2391
        %v2716 = vpack.c.b16 %v2396, %v2392
        %v2717 = vpack.c.b16 %v2401, %v2397
        %v2718 = vpack.c.b16 %v2402, %v2398
        %v2719 = vpack.c.b16 %v2403, %v2399
        %v2720 = vpack.c.b16 %v2404, %v2400
        %v2721 = vpack.c.b16 %v2409, %v2405
        %v2722 = vpack.c.b16 %v2410, %v2406
        %v2723 = vpack.c.b16 %v2411, %v2407
        %v2724 = vpack.c.b16 %v2412, %v2408
        %v2725 = vpack.c.b16 %v2417, %v2413
        %v2726 = vpack.c.b16 %v2418, %v2414
        %v2727 = vpack.c.b16 %v2419, %v2415
        %v2728 = vpack.c.b16 %v2420, %v2416
        %v2729 = vpack.c.b16 %v2425, %v2421
        %v2730 = vpack.c.b16 %v2426, %v2422
        %v2731 = vpack.c.b16 %v2427, %v2423
        %v2732 = vpack.c.b16 %v2428, %v2424
        %v2733 = vpack.c.b16 %v2433, %v2429
        %v2734 = vpack.c.b16 %v2434, %v2430
        %v2735 = vpack.c.b16 %v2435, %v2431
        %v2736 = vpack.c.b16 %v2436, %v2432
        %v2737 = vpack.c.b16 %v2441, %v2437
        %v2738 = vpack.c.b16 %v2442, %v2438
        %v2739 = vpack.c.b16 %v2443, %v2439
        %v2740 = vpack.c.b16 %v2444, %v2440
        %v2741 = vpack.c.b16 %v2449, %v2445
        %v2742 = vpack.c.b16 %v2450, %v2446
        %v2743 = vpack.c.b16 %v2451, %v2447
        %v2744 = vpack.c.b16 %v2452, %v2448
        %v2745 = vpack.c.b16 %v2457, %v2453
        %v2746 = vpack.c.b16 %v2458, %v2454
        %v2747 = vpack.c.b16 %v2459, %v2455
        %v2748 = vpack.c.b16 %v2460, %v2456
        %v2749 = vpack.c.b16 %v2465, %v2461
        %v2750 = vpack.c.b16 %v2466, %v2462
        %v2751 = vpack.c.b16 %v2467, %v2463
        %v2752 = vpack.c.b16 %v2468, %v2464
        %v2753 = vpack.c.b16 %v2473, %v2469
        %v2754 = vpack.c.b16 %v2474, %v2470
        %v2755 = vpack.c.b16 %v2475, %v2471
        %v2756 = vpack.c.b16 %v2476, %v2472
        %v2757 = vpack.c.b16 %v2481, %v2477
        %v2758 = vpack.c.b16 %v2482, %v2478
        %v2759 = vpack.c.b16 %v2483, %v2479
        %v2760 = vpack.c.b16 %v2484, %v2480
        %v2761 = vpack.c.b16 %v2489, %v2485
        %v2762 = vpack.c.b16 %v2490, %v2486
        %v2763 = vpack.c.b16 %v2491, %v2487
        %v2764 = vpack.c.b16 %v2492, %v2488
        %v2765 = vpack.c.b16 %v2497, %v2493
        %v2766 = vpack.c.b16 %v2498, %v2494
        %v2767 = vpack.c.b16 %v2499, %v2495
        %v2768 = vpack.c.b16 %v2500, %v2496
        %v2769 = vpack.c.b16 %v2505, %v2501
        %v2770 = vpack.c.b16 %v2506, %v2502
        %v2771 = vpack.c.b16 %v2507, %v2503
        %v2772 = vpack.c.b16 %v2508, %v2504
        %v2773 = vpack.c.b16 %v2513, %v2509
        %v2774 = vpack.c.b16 %v2514, %v2510
        %v2775 = vpack.c.b16 %v2515, %v2511
        %v2776 = vpack.c.b16 %v2516, %v2512
        %v2777 = vpack.c.b16 %v2521, %v2517
        %v2778 = vpack.c.b16 %v2522, %v2518
        %v2779 = vpack.c.b16 %v2523, %v2519
        %v2780 = vpack.c.b16 %v2524, %v2520
        %3037 = vmatprep.subr.bf16.mxu0 %v2526
        %3038 = vmatpush1.bf16.msra.mxu0 %v2525
        %3039 = vmatprep.subr.bf16.mxu0 %v2530
        %3040 = vmatpush1.bf16.msra.mxu0 %v2529
        %3041 = vmatprep.subr.bf16.mxu0 %v2534
        %3042 = vmatpush1.bf16.msra.mxu0 %v2533
        %3043 = vmatprep.subr.bf16.mxu0 %v2538
        %3044 = vmatpush1.bf16.msra.mxu0 %v2537
        %3045 = vmatprep.subr.bf16.mxu0 %v2542
        %3046 = vmatpush1.bf16.msra.mxu0 %v2541
        %3047 = vmatprep.subr.bf16.mxu0 %v2546
        %3048 = vmatpush1.bf16.msra.mxu0 %v2545
        %3049 = vmatprep.subr.bf16.mxu0 %v2550
        %3050 = vmatpush1.bf16.msra.mxu0 %v2549
        %3051 = vmatprep.subr.bf16.mxu0 %v2554
        %3052 = vmatpush1.bf16.msra.mxu0 %v2553
        %3053 = vmatprep.subr.bf16.mxu0 %v2558
        %3054 = vmatpush1.bf16.msra.mxu0 %v2557
        %3055 = vmatprep.subr.bf16.mxu0 %v2562
        %3056 = vmatpush1.bf16.msra.mxu0 %v2561
        %3057 = vmatprep.subr.bf16.mxu0 %v2566
        %3058 = vmatpush1.bf16.msra.mxu0 %v2565
        %3059 = vmatprep.subr.bf16.mxu0 %v2570
        %3060 = vmatpush1.bf16.msra.mxu0 %v2569
        %3061 = vmatprep.subr.bf16.mxu0 %v2574
        %3062 = vmatpush1.bf16.msra.mxu0 %v2573
        %3063 = vmatprep.subr.bf16.mxu0 %v2578
        %3064 = vmatpush1.bf16.msra.mxu0 %v2577
        %3065 = vmatprep.subr.bf16.mxu0 %v2582
        %3066 = vmatpush1.bf16.msra.mxu0 %v2581
        %3067 = vmatprep.subr.bf16.mxu0 %v2586
        %3068 = vmatpush1.bf16.msra.mxu0 %v2585
        %3069 = vmatprep.mubr.bf16.mxu0 %v1472
        %3070 = vmatmul.mubr.bf16.gmra.mrb[0].mxu0 %v1471
        %v3071 = vpop.f32.mrb[0].mxu0
        %v3072 = vadd.f32 %v1740, %v3071
        %v3073 = vpop.f32.mrb[0].mxu0
        %v3074 = vadd.f32 %v1744, %v3073
        %v3075 = vpop.f32.mrb[0].mxu0
        %v3076 = vadd.f32 %v1740, %v3075
        %v3077 = vpop.f32.mrb[0].mxu0
        %v3078 = vadd.f32 %v1744, %v3077
        %3079 = vdwg.mxu0
        %3080 = vmatprep.subr.bf16.mxu0 %v2590
        %3081 = vmatpush1.bf16.msra.mxu0 %v2589
        %3082 = vmatprep.subr.bf16.mxu0 %v2594
        %3083 = vmatpush1.bf16.msra.mxu0 %v2593
        %3084 = vmatprep.subr.bf16.mxu0 %v2598
        %3085 = vmatpush1.bf16.msra.mxu0 %v2597
        %3086 = vmatprep.subr.bf16.mxu0 %v2602
        %3087 = vmatpush1.bf16.msra.mxu0 %v2601
        %3088 = vmatprep.subr.bf16.mxu0 %v2606
        %3089 = vmatpush1.bf16.msra.mxu0 %v2605
        %3090 = vmatprep.subr.bf16.mxu0 %v2610
        %3091 = vmatpush1.bf16.msra.mxu0 %v2609
        %3092 = vmatprep.subr.bf16.mxu0 %v2614
        %3093 = vmatpush1.bf16.msra.mxu0 %v2613
        %3094 = vmatprep.subr.bf16.mxu0 %v2618
        %3095 = vmatpush1.bf16.msra.mxu0 %v2617
        %3096 = vmatprep.subr.bf16.mxu0 %v2622
        %3097 = vmatpush1.bf16.msra.mxu0 %v2621
        %3098 = vmatprep.subr.bf16.mxu0 %v2626
        %3099 = vmatpush1.bf16.msra.mxu0 %v2625
        %3100 = vmatprep.subr.bf16.mxu0 %v2630
        %3101 = vmatpush1.bf16.msra.mxu0 %v2629
        %3102 = vmatprep.subr.bf16.mxu0 %v2634
        %3103 = vmatpush1.bf16.msra.mxu0 %v2633
        %3104 = vmatprep.subr.bf16.mxu0 %v2638
        %3105 = vmatpush1.bf16.msra.mxu0 %v2637
        %3106 = vmatprep.subr.bf16.mxu0 %v2642
        %3107 = vmatpush1.bf16.msra.mxu0 %v2641
        %3108 = vmatprep.subr.bf16.mxu0 %v2646
        %3109 = vmatpush1.bf16.msra.mxu0 %v2645
        %3110 = vmatprep.subr.bf16.mxu0 %v2650
        %3111 = vmatpush1.bf16.msra.mxu0 %v2649
        %3112 = vmatprep.mubr.bf16.mxu0 %v1474
        %3113 = vmatmul.mubr.bf16.gmra.mrb[0].mxu0 %v1473
        %v3114 = vpop.f32.mrb[0].mxu0
        %v3115 = vadd.f32 %v3072, %v3114
        %v3116 = vpop.f32.mrb[0].mxu0
        %v3117 = vadd.f32 %v3074, %v3116
        %v3118 = vpop.f32.mrb[0].mxu0
        %v3119 = vadd.f32 %v3076, %v3118
        %v3120 = vpop.f32.mrb[0].mxu0
        %v3121 = vadd.f32 %v3078, %v3120
        %3122 = vdwg.mxu0
        %3123 = vmatprep.subr.bf16.mxu0 %v2654
        %3124 = vmatpush1.bf16.msra.mxu0 %v2653
        %3125 = vmatprep.subr.bf16.mxu0 %v2658
        %3126 = vmatpush1.bf16.msra.mxu0 %v2657
        %3127 = vmatprep.subr.bf16.mxu0 %v2662
        %3128 = vmatpush1.bf16.msra.mxu0 %v2661
        %3129 = vmatprep.subr.bf16.mxu0 %v2666
        %3130 = vmatpush1.bf16.msra.mxu0 %v2665
        %3131 = vmatprep.subr.bf16.mxu0 %v2670
        %3132 = vmatpush1.bf16.msra.mxu0 %v2669
        %3133 = vmatprep.subr.bf16.mxu0 %v2674
        %3134 = vmatpush1.bf16.msra.mxu0 %v2673
        %3135 = vmatprep.subr.bf16.mxu0 %v2678
        %3136 = vmatpush1.bf16.msra.mxu0 %v2677
        %3137 = vmatprep.subr.bf16.mxu0 %v2682
        %3138 = vmatpush1.bf16.msra.mxu0 %v2681
        %3139 = vmatprep.subr.bf16.mxu0 %v2686
        %3140 = vmatpush1.bf16.msra.mxu0 %v2685
        %3141 = vmatprep.subr.bf16.mxu0 %v2690
        %3142 = vmatpush1.bf16.msra.mxu0 %v2689
        %3143 = vmatprep.subr.bf16.mxu0 %v2694
        %3144 = vmatpush1.bf16.msra.mxu0 %v2693
        %3145 = vmatprep.subr.bf16.mxu0 %v2698
        %3146 = vmatpush1.bf16.msra.mxu0 %v2697
        %3147 = vmatprep.subr.bf16.mxu0 %v2702
        %3148 = vmatpush1.bf16.msra.mxu0 %v2701
        %3149 = vmatprep.subr.bf16.mxu0 %v2706
        %3150 = vmatpush1.bf16.msra.mxu0 %v2705
        %3151 = vmatprep.subr.bf16.mxu0 %v2710
        %3152 = vmatpush1.bf16.msra.mxu0 %v2709
        %3153 = vmatprep.subr.bf16.mxu0 %v2714
        %3154 = vmatpush1.bf16.msra.mxu0 %v2713
        %3155 = vmatprep.mubr.bf16.mxu0 %v1476
        %3156 = vmatmul.mubr.bf16.gmra.mrb[0].mxu0 %v1475
        %v3157 = vpop.f32.mrb[0].mxu0
        %v3158 = vadd.f32 %v3115, %v3157
        %v3159 = vpop.f32.mrb[0].mxu0
        %v3160 = vadd.f32 %v3117, %v3159
        %v3161 = vpop.f32.mrb[0].mxu0
        %v3162 = vadd.f32 %v3119, %v3161
        %v3163 = vpop.f32.mrb[0].mxu0
        %v3164 = vadd.f32 %v3121, %v3163
        %3165 = vdwg.mxu0
        %3166 = vmatprep.subr.bf16.mxu0 %v2718
        %3167 = vmatpush1.bf16.msra.mxu0 %v2717
        %3168 = vmatprep.subr.bf16.mxu0 %v2722
        %3169 = vmatpush1.bf16.msra.mxu0 %v2721
        %3170 = vmatprep.subr.bf16.mxu0 %v2726
        %3171 = vmatpush1.bf16.msra.mxu0 %v2725
        %3172 = vmatprep.subr.bf16.mxu0 %v2730
        %3173 = vmatpush1.bf16.msra.mxu0 %v2729
        %3174 = vmatprep.subr.bf16.mxu0 %v2734
        %3175 = vmatpush1.bf16.msra.mxu0 %v2733
        %3176 = vmatprep.subr.bf16.mxu0 %v2738
        %3177 = vmatpush1.bf16.msra.mxu0 %v2737
        %3178 = vmatprep.subr.bf16.mxu0 %v2742
        %3179 = vmatpush1.bf16.msra.mxu0 %v2741
        %3180 = vmatprep.subr.bf16.mxu0 %v2746
        %3181 = vmatpush1.bf16.msra.mxu0 %v2745
        %3182 = vmatprep.subr.bf16.mxu0 %v2750
        %3183 = vmatpush1.bf16.msra.mxu0 %v2749
        %3184 = vmatprep.subr.bf16.mxu0 %v2754
        %3185 = vmatpush1.bf16.msra.mxu0 %v2753
        %3186 = vmatprep.subr.bf16.mxu0 %v2758
        %3187 = vmatpush1.bf16.msra.mxu0 %v2757
        %3188 = vmatprep.subr.bf16.mxu0 %v2762
        %3189 = vmatpush1.bf16.msra.mxu0 %v2761
        %3190 = vmatprep.subr.bf16.mxu0 %v2766
        %3191 = vmatpush1.bf16.msra.mxu0 %v2765
        %3192 = vmatprep.subr.bf16.mxu0 %v2770
        %3193 = vmatpush1.bf16.msra.mxu0 %v2769
        %3194 = vmatprep.subr.bf16.mxu0 %v2774
        %3195 = vmatpush1.bf16.msra.mxu0 %v2773
        %3196 = vmatprep.subr.bf16.mxu0 %v2778
        %3197 = vmatpush1.bf16.msra.mxu0 %v2777
        %3198 = vmatprep.mubr.bf16.mxu0 %v1478
        %3199 = vmatmul.mubr.bf16.gmra.mrb[0].mxu0 %v1477
        %v3200 = vpop.f32.mrb[0].mxu0
        %v3201 = vadd.f32 %v3158, %v3200
        %v3202 = vpop.f32.mrb[0].mxu0
        %v3203 = vadd.f32 %v3160, %v3202
        %v3204 = vpop.f32.mrb[0].mxu0
        %v3205 = vadd.f32 %v3162, %v3204
        %v3206 = vpop.f32.mrb[0].mxu0
        %v3207 = vadd.f32 %v3164, %v3206
        %3208 = vdwg.mxu0
        %3209 = vmatprep.subr.bf16.mxu0 %v2528
        %3210 = vmatpush1.bf16.msra.mxu0 %v2527
        %3211 = vmatprep.subr.bf16.mxu0 %v2532
        %3212 = vmatpush1.bf16.msra.mxu0 %v2531
        %3213 = vmatprep.subr.bf16.mxu0 %v2536
        %3214 = vmatpush1.bf16.msra.mxu0 %v2535
        %3215 = vmatprep.subr.bf16.mxu0 %v2540
        %3216 = vmatpush1.bf16.msra.mxu0 %v2539
        %3217 = vmatprep.subr.bf16.mxu0 %v2544
        %3218 = vmatpush1.bf16.msra.mxu0 %v2543
        %3219 = vmatprep.subr.bf16.mxu0 %v2548
        %3220 = vmatpush1.bf16.msra.mxu0 %v2547
        %3221 = vmatprep.subr.bf16.mxu0 %v2552
        %3222 = vmatpush1.bf16.msra.mxu0 %v2551
        %3223 = vmatprep.subr.bf16.mxu0 %v2556
        %3224 = vmatpush1.bf16.msra.mxu0 %v2555
        %3225 = vmatprep.subr.bf16.mxu0 %v2560
        %3226 = vmatpush1.bf16.msra.mxu0 %v2559
        %3227 = vmatprep.subr.bf16.mxu0 %v2564
        %3228 = vmatpush1.bf16.msra.mxu0 %v2563
        %3229 = vmatprep.subr.bf16.mxu0 %v2568
        %3230 = vmatpush1.bf16.msra.mxu0 %v2567
        %3231 = vmatprep.subr.bf16.mxu0 %v2572
        %3232 = vmatpush1.bf16.msra.mxu0 %v2571
        %3233 = vmatprep.subr.bf16.mxu0 %v2576
        %3234 = vmatpush1.bf16.msra.mxu0 %v2575
        %3235 = vmatprep.subr.bf16.mxu0 %v2580
        %3236 = vmatpush1.bf16.msra.mxu0 %v2579
        %3237 = vmatprep.subr.bf16.mxu0 %v2584
        %3238 = vmatpush1.bf16.msra.mxu0 %v2583
        %3239 = vmatprep.subr.bf16.mxu0 %v2588
        %3240 = vmatpush1.bf16.msra.mxu0 %v2587
        %3241 = vmatprep.mubr.bf16.mxu0 %v1472
        %3242 = vmatmul.mubr.bf16.gmra.mrb[0].mxu0 %v1471
        %v3243 = vpop.f32.mrb[0].mxu0
        %v3244 = vadd.f32 %v1748, %v3243
        %v3245 = vpop.f32.mrb[0].mxu0
        %v3246 = vadd.f32 %v1752, %v3245
        %v3247 = vpop.f32.mrb[0].mxu0
        %v3248 = vadd.f32 %v1748, %v3247
        %v3249 = vpop.f32.mrb[0].mxu0
        %v3250 = vadd.f32 %v1752, %v3249
        %3251 = vdwg.mxu0
        %3252 = vmatprep.subr.bf16.mxu0 %v2592
        %3253 = vmatpush1.bf16.msra.mxu0 %v2591
        %3254 = vmatprep.subr.bf16.mxu0 %v2596
        %3255 = vmatpush1.bf16.msra.mxu0 %v2595
        %3256 = vmatprep.subr.bf16.mxu0 %v2600
        %3257 = vmatpush1.bf16.msra.mxu0 %v2599
        %3258 = vmatprep.subr.bf16.mxu0 %v2604
        %3259 = vmatpush1.bf16.msra.mxu0 %v2603
        %3260 = vmatprep.subr.bf16.mxu0 %v2608
        %3261 = vmatpush1.bf16.msra.mxu0 %v2607
        %3262 = vmatprep.subr.bf16.mxu0 %v2612
        %3263 = vmatpush1.bf16.msra.mxu0 %v2611
        %3264 = vmatprep.subr.bf16.mxu0 %v2616
        %3265 = vmatpush1.bf16.msra.mxu0 %v2615
        %3266 = vmatprep.subr.bf16.mxu0 %v2620
        %3267 = vmatpush1.bf16.msra.mxu0 %v2619
        %3268 = vmatprep.subr.bf16.mxu0 %v2624
        %3269 = vmatpush1.bf16.msra.mxu0 %v2623
        %3270 = vmatprep.subr.bf16.mxu0 %v2628
        %3271 = vmatpush1.bf16.msra.mxu0 %v2627
        %3272 = vmatprep.subr.bf16.mxu0 %v2632
        %3273 = vmatpush1.bf16.msra.mxu0 %v2631
        %3274 = vmatprep.subr.bf16.mxu0 %v2636
        %3275 = vmatpush1.bf16.msra.mxu0 %v2635
        %3276 = vmatprep.subr.bf16.mxu0 %v2640
        %3277 = vmatpush1.bf16.msra.mxu0 %v2639
        %3278 = vmatprep.subr.bf16.mxu0 %v2644
        %3279 = vmatpush1.bf16.msra.mxu0 %v2643
        %3280 = vmatprep.subr.bf16.mxu0 %v2648
        %3281 = vmatpush1.bf16.msra.mxu0 %v2647
        %3282 = vmatprep.subr.bf16.mxu0 %v2652
        %3283 = vmatpush1.bf16.msra.mxu0 %v2651
        %3284 = vmatprep.mubr.bf16.mxu0 %v1474
        %3285 = vmatmul.mubr.bf16.gmra.mrb[0].mxu0 %v1473
        %v3286 = vpop.f32.mrb[0].mxu0
        %v3287 = vadd.f32 %v3244, %v3286
        %v3288 = vpop.f32.mrb[0].mxu0
        %v3289 = vadd.f32 %v3246, %v3288
        %v3290 = vpop.f32.mrb[0].mxu0
        %v3291 = vadd.f32 %v3248, %v3290
        %v3292 = vpop.f32.mrb[0].mxu0
        %v3293 = vadd.f32 %v3250, %v3292
        %3294 = vdwg.mxu0
        %3295 = vmatprep.subr.bf16.mxu0 %v2656
        %3296 = vmatpush1.bf16.msra.mxu0 %v2655
        %3297 = vmatprep.subr.bf16.mxu0 %v2660
        %3298 = vmatpush1.bf16.msra.mxu0 %v2659
        %3299 = vmatprep.subr.bf16.mxu0 %v2664
        %3300 = vmatpush1.bf16.msra.mxu0 %v2663
        %3301 = vmatprep.subr.bf16.mxu0 %v2668
        %3302 = vmatpush1.bf16.msra.mxu0 %v2667
        %3303 = vmatprep.subr.bf16.mxu0 %v2672
        %3304 = vmatpush1.bf16.msra.mxu0 %v2671
        %3305 = vmatprep.subr.bf16.mxu0 %v2676
        %3306 = vmatpush1.bf16.msra.mxu0 %v2675
        %3307 = vmatprep.subr.bf16.mxu0 %v2680
        %3308 = vmatpush1.bf16.msra.mxu0 %v2679
        %3309 = vmatprep.subr.bf16.mxu0 %v2684
        %3310 = vmatpush1.bf16.msra.mxu0 %v2683
        %3311 = vmatprep.subr.bf16.mxu0 %v2688
        %3312 = vmatpush1.bf16.msra.mxu0 %v2687
        %3313 = vmatprep.subr.bf16.mxu0 %v2692
        %3314 = vmatpush1.bf16.msra.mxu0 %v2691
        %3315 = vmatprep.subr.bf16.mxu0 %v2696
        %3316 = vmatpush1.bf16.msra.mxu0 %v2695
        %3317 = vmatprep.subr.bf16.mxu0 %v2700
        %3318 = vmatpush1.bf16.msra.mxu0 %v2699
        %3319 = vmatprep.subr.bf16.mxu0 %v2704
        %3320 = vmatpush1.bf16.msra.mxu0 %v2703
        %3321 = vmatprep.subr.bf16.mxu0 %v2708
        %3322 = vmatpush1.bf16.msra.mxu0 %v2707
        %3323 = vmatprep.subr.bf16.mxu0 %v2712
        %3324 = vmatpush1.bf16.msra.mxu0 %v2711
        %3325 = vmatprep.subr.bf16.mxu0 %v2716
        %3326 = vmatpush1.bf16.msra.mxu0 %v2715
        %3327 = vmatprep.mubr.bf16.mxu0 %v1476
        %3328 = vmatmul.mubr.bf16.gmra.mrb[0].mxu0 %v1475
        %v3329 = vpop.f32.mrb[0].mxu0
        %v3330 = vadd.f32 %v3287, %v3329
        %v3331 = vpop.f32.mrb[0].mxu0
        %v3332 = vadd.f32 %v3289, %v3331
        %v3333 = vpop.f32.mrb[0].mxu0
        %v3334 = vadd.f32 %v3291, %v3333
        %v3335 = vpop.f32.mrb[0].mxu0
        %v3336 = vadd.f32 %v3293, %v3335
        %3337 = vdwg.mxu0
        %3338 = vmatprep.subr.bf16.mxu0 %v2720
        %3339 = vmatpush1.bf16.msra.mxu0 %v2719
        %3340 = vmatprep.subr.bf16.mxu0 %v2724
        %3341 = vmatpush1.bf16.msra.mxu0 %v2723
        %3342 = vmatprep.subr.bf16.mxu0 %v2728
        %3343 = vmatpush1.bf16.msra.mxu0 %v2727
        %3344 = vmatprep.subr.bf16.mxu0 %v2732
        %3345 = vmatpush1.bf16.msra.mxu0 %v2731
        %3346 = vmatprep.subr.bf16.mxu0 %v2736
        %3347 = vmatpush1.bf16.msra.mxu0 %v2735
        %3348 = vmatprep.subr.bf16.mxu0 %v2740
        %3349 = vmatpush1.bf16.msra.mxu0 %v2739
        %3350 = vmatprep.subr.bf16.mxu0 %v2744
        %3351 = vmatpush1.bf16.msra.mxu0 %v2743
        %3352 = vmatprep.subr.bf16.mxu0 %v2748
        %3353 = vmatpush1.bf16.msra.mxu0 %v2747
        %3354 = vmatprep.subr.bf16.mxu0 %v2752
        %3355 = vmatpush1.bf16.msra.mxu0 %v2751
        %3356 = vmatprep.subr.bf16.mxu0 %v2756
        %3357 = vmatpush1.bf16.msra.mxu0 %v2755
        %3358 = vmatprep.subr.bf16.mxu0 %v2760
        %3359 = vmatpush1.bf16.msra.mxu0 %v2759
        %3360 = vmatprep.subr.bf16.mxu0 %v2764
        %3361 = vmatpush1.bf16.msra.mxu0 %v2763
        %3362 = vmatprep.subr.bf16.mxu0 %v2768
        %3363 = vmatpush1.bf16.msra.mxu0 %v2767
        %3364 = vmatprep.subr.bf16.mxu0 %v2772
        %3365 = vmatpush1.bf16.msra.mxu0 %v2771
        %3366 = vmatprep.subr.bf16.mxu0 %v2776
        %3367 = vmatpush1.bf16.msra.mxu0 %v2775
        %3368 = vmatprep.subr.bf16.mxu0 %v2780
        %3369 = vmatpush1.bf16.msra.mxu0 %v2779
        %3370 = vmatprep.mubr.bf16.mxu0 %v1478
        %3371 = vmatmul.mubr.bf16.gmra.mrb[0].mxu0 %v1477
        %v3372 = vpop.f32.mrb[0].mxu0
        %v3373 = vadd.f32 %v3330, %v3372
        %v3374 = vpop.f32.mrb[0].mxu0
        %v3375 = vadd.f32 %v3332, %v3374
        %v3376 = vpop.f32.mrb[0].mxu0
        %v3377 = vadd.f32 %v3334, %v3376
        %v3378 = vpop.f32.mrb[0].mxu0
        %v3379 = vadd.f32 %v3336, %v3378
        %3380 = vdwg.mxu0
        %v3381 = vmax.f32 %v3201, 0.0
        %v3382 = vmax.f32 %v3203, 0.0
        %v3383 = vmax.f32 %v3373, 0.0
        %v3384 = vmax.f32 %v3375, 0.0
        %v3385 = vmax.f32 %v3205, 0.0
        %v3386 = vmax.f32 %v3207, 0.0
        %v3387 = vmax.f32 %v3377, 0.0
        %v3388 = vmax.f32 %v3379, 0.0
        %v3389 = vpack.c.bf16 %v3385, %v3381
        %v3390 = vpack.c.bf16 %v3386, %v3382
        %v3391 = vpack.c.bf16 %v3387, %v3383
        %v3392 = vpack.c.bf16 %v3388, %v3384
        %v3393 = vld [vmem:[#allocation9] sm:$0xf]
        %v3394 = vld [vmem:[#allocation9 + $0x4] sm:$0xf]
        %v3395 = vld [vmem:[#allocation9 + $0x8] sm:$0xf]
        %v3396 = vld [vmem:[#allocation9 + $0xc] sm:$0xf]
        %v3397 = vld [vmem:[#allocation9 + $0x10] sm:$0xf]
        %v3398 = vld [vmem:[#allocation9 + $0x14] sm:$0xf]
        %v3399 = vld [vmem:[#allocation9 + $0x18] sm:$0xf]
        %v3400 = vld [vmem:[#allocation9 + $0x1c] sm:$0xf]
        %v3401 = vld [vmem:[#allocation9 + $0x20] sm:$0xf]
        %v3402 = vld [vmem:[#allocation9 + $0x24] sm:$0xf]
        %v3403 = vld [vmem:[#allocation9 + $0x28] sm:$0xf]
        %v3404 = vld [vmem:[#allocation9 + $0x2c] sm:$0xf]
        %v3405 = vld [vmem:[#allocation9 + $0x30] sm:$0xf]
        %v3406 = vld [vmem:[#allocation9 + $0x34] sm:$0xf]
        %v3407 = vld [vmem:[#allocation9 + $0x38] sm:$0xf]
        %v3408 = vld [vmem:[#allocation9 + $0x3c] sm:$0xf]
        %v3409 = vld [vmem:[#allocation9 + $0x40] sm:$0xf]
        %v3410 = vld [vmem:[#allocation9 + $0x44] sm:$0xf]
        %v3411 = vld [vmem:[#allocation9 + $0x48] sm:$0xf]
        %v3412 = vld [vmem:[#allocation9 + $0x4c] sm:$0xf]
        %v3413 = vld [vmem:[#allocation9 + $0x50] sm:$0xf]
        %v3414 = vld [vmem:[#allocation9 + $0x54] sm:$0xf]
        %v3415 = vld [vmem:[#allocation9 + $0x58] sm:$0xf]
        %v3416 = vld [vmem:[#allocation9 + $0x5c] sm:$0xf]
        %v3417 = vld [vmem:[#allocation9 + $0x60] sm:$0xf]
        %v3418 = vld [vmem:[#allocation9 + $0x64] sm:$0xf]
        %v3419 = vld [vmem:[#allocation9 + $0x68] sm:$0xf]
        %v3420 = vld [vmem:[#allocation9 + $0x6c] sm:$0xf]
        %v3421 = vld [vmem:[#allocation9 + $0x70] sm:$0xf]
        %v3422 = vld [vmem:[#allocation9 + $0x74] sm:$0xf]
        %v3423 = vld [vmem:[#allocation9 + $0x78] sm:$0xf]
        %v3424 = vld [vmem:[#allocation9 + $0x7c] sm:$0xf]
        %v3425 = vld [vmem:[#allocation9 + $0x80] sm:$0xf]
        %v3426 = vld [vmem:[#allocation9 + $0x84] sm:$0xf]
        %v3427 = vld [vmem:[#allocation9 + $0x88] sm:$0xf]
        %v3428 = vld [vmem:[#allocation9 + $0x8c] sm:$0xf]
        %v3429 = vld [vmem:[#allocation9 + $0x90] sm:$0xf]
        %v3430 = vld [vmem:[#allocation9 + $0x94] sm:$0xf]
        %v3431 = vld [vmem:[#allocation9 + $0x98] sm:$0xf]
        %v3432 = vld [vmem:[#allocation9 + $0x9c] sm:$0xf]
        %v3433 = vld [vmem:[#allocation9 + $0xa0] sm:$0xf]
        %v3434 = vld [vmem:[#allocation9 + $0xa4] sm:$0xf]
        %v3435 = vld [vmem:[#allocation9 + $0xa8] sm:$0xf]
        %v3436 = vld [vmem:[#allocation9 + $0xac] sm:$0xf]
        %v3437 = vld [vmem:[#allocation9 + $0xb0] sm:$0xf]
        %v3438 = vld [vmem:[#allocation9 + $0xb4] sm:$0xf]
        %v3439 = vld [vmem:[#allocation9 + $0xb8] sm:$0xf]
        %v3440 = vld [vmem:[#allocation9 + $0xbc] sm:$0xf]
        %v3441 = vld [vmem:[#allocation9 + $0xc0] sm:$0xf]
        %v3442 = vld [vmem:[#allocation9 + $0xc4] sm:$0xf]
        %v3443 = vld [vmem:[#allocation9 + $0xc8] sm:$0xf]
        %v3444 = vld [vmem:[#allocation9 + $0xcc] sm:$0xf]
        %v3445 = vld [vmem:[#allocation9 + $0xd0] sm:$0xf]
        %v3446 = vld [vmem:[#allocation9 + $0xd4] sm:$0xf]
        %v3447 = vld [vmem:[#allocation9 + $0xd8] sm:$0xf]
        %v3448 = vld [vmem:[#allocation9 + $0xdc] sm:$0xf]
        %v3449 = vld [vmem:[#allocation9 + $0xe0] sm:$0xf]
        %v3450 = vld [vmem:[#allocation9 + $0xe4] sm:$0xf]
        %v3451 = vld [vmem:[#allocation9 + $0xe8] sm:$0xf]
        %v3452 = vld [vmem:[#allocation9 + $0xec] sm:$0xf]
        %v3453 = vld [vmem:[#allocation9 + $0xf0] sm:$0xf]
        %v3454 = vld [vmem:[#allocation9 + $0xf4] sm:$0xf]
        %v3455 = vld [vmem:[#allocation9 + $0xf8] sm:$0xf]
        %v3456 = vld [vmem:[#allocation9 + $0xfc] sm:$0xf]
        %v3457 = vld [vmem:[%s6] sm:$0x1]
        %v3459 = vlaneseq
        %v3460 = vshrl.u32 %v3459, 7
        %v3461 = vsub.s32 0, %v3460
        %v3462 = vrot.slane %v3457, %v3461
        %v3528 = vunpack.c.l.b16 %v3393
        %v3529 = vunpack.c.l.b16 %v3394
        %v3530 = vunpack.c.l.b16 %v3395
        %v3531 = vunpack.c.l.b16 %v3396
        %v3532 = vunpack.c.l.b16 %v3397
        %v3533 = vunpack.c.l.b16 %v3398
        %v3534 = vunpack.c.l.b16 %v3399
        %v3535 = vunpack.c.l.b16 %v3400
        %v3536 = vunpack.c.l.b16 %v3401
        %v3537 = vunpack.c.l.b16 %v3402
        %v3538 = vunpack.c.l.b16 %v3403
        %v3539 = vunpack.c.l.b16 %v3404
        %v3540 = vunpack.c.l.b16 %v3405
        %v3541 = vunpack.c.l.b16 %v3406
        %v3542 = vunpack.c.l.b16 %v3407
        %v3543 = vunpack.c.l.b16 %v3408
        %v3544 = vunpack.c.l.b16 %v3409
        %v3545 = vunpack.c.l.b16 %v3410
        %v3546 = vunpack.c.l.b16 %v3411
        %v3547 = vunpack.c.l.b16 %v3412
        %v3548 = vunpack.c.l.b16 %v3413
        %v3549 = vunpack.c.l.b16 %v3414
        %v3550 = vunpack.c.l.b16 %v3415
        %v3551 = vunpack.c.l.b16 %v3416
        %v3552 = vunpack.c.l.b16 %v3417
        %v3553 = vunpack.c.l.b16 %v3418
        %v3554 = vunpack.c.l.b16 %v3419
        %v3555 = vunpack.c.l.b16 %v3420
        %v3556 = vunpack.c.l.b16 %v3421
        %v3557 = vunpack.c.l.b16 %v3422
        %v3558 = vunpack.c.l.b16 %v3423
        %v3559 = vunpack.c.l.b16 %v3424
        %v3560 = vunpack.c.l.b16 %v3425
        %v3561 = vunpack.c.l.b16 %v3426
        %v3562 = vunpack.c.l.b16 %v3427
        %v3563 = vunpack.c.l.b16 %v3428
        %v3564 = vunpack.c.l.b16 %v3429
        %v3565 = vunpack.c.l.b16 %v3430
        %v3566 = vunpack.c.l.b16 %v3431
        %v3567 = vunpack.c.l.b16 %v3432
        %v3568 = vunpack.c.l.b16 %v3433
        %v3569 = vunpack.c.l.b16 %v3434
        %v3570 = vunpack.c.l.b16 %v3435
        %v3571 = vunpack.c.l.b16 %v3436
        %v3572 = vunpack.c.l.b16 %v3437
        %v3573 = vunpack.c.l.b16 %v3438
        %v3574 = vunpack.c.l.b16 %v3439
        %v3575 = vunpack.c.l.b16 %v3440
        %v3576 = vunpack.c.l.b16 %v3441
        %v3577 = vunpack.c.l.b16 %v3442
        %v3578 = vunpack.c.l.b16 %v3443
        %v3579 = vunpack.c.l.b16 %v3444
        %v3580 = vunpack.c.l.b16 %v3445
        %v3581 = vunpack.c.l.b16 %v3446
        %v3582 = vunpack.c.l.b16 %v3447
        %v3583 = vunpack.c.l.b16 %v3448
        %v3584 = vunpack.c.l.b16 %v3449
        %v3585 = vunpack.c.l.b16 %v3450
        %v3586 = vunpack.c.l.b16 %v3451
        %v3587 = vunpack.c.l.b16 %v3452
        %v3588 = vunpack.c.l.b16 %v3453
        %v3589 = vunpack.c.l.b16 %v3454
        %v3590 = vunpack.c.l.b16 %v3455
        %v3591 = vunpack.c.l.b16 %v3456
        %v3592 = vpack.c.b16 %v3529, %v3528
        %v3593 = vpack.c.b16 %v3531, %v3530
        %v3594 = vpack.c.b16 %v3533, %v3532
        %v3595 = vpack.c.b16 %v3535, %v3534
        %v3596 = vpack.c.b16 %v3537, %v3536
        %v3597 = vpack.c.b16 %v3539, %v3538
        %v3598 = vpack.c.b16 %v3541, %v3540
        %v3599 = vpack.c.b16 %v3543, %v3542
        %v3600 = vpack.c.b16 %v3545, %v3544
        %v3601 = vpack.c.b16 %v3547, %v3546
        %v3602 = vpack.c.b16 %v3549, %v3548
        %v3603 = vpack.c.b16 %v3551, %v3550
        %v3604 = vpack.c.b16 %v3553, %v3552
        %v3605 = vpack.c.b16 %v3555, %v3554
        %v3606 = vpack.c.b16 %v3557, %v3556
        %v3607 = vpack.c.b16 %v3559, %v3558
        %v3608 = vpack.c.b16 %v3561, %v3560
        %v3609 = vpack.c.b16 %v3563, %v3562
        %v3610 = vpack.c.b16 %v3565, %v3564
        %v3611 = vpack.c.b16 %v3567, %v3566
        %v3612 = vpack.c.b16 %v3569, %v3568
        %v3613 = vpack.c.b16 %v3571, %v3570
        %v3614 = vpack.c.b16 %v3573, %v3572
        %v3615 = vpack.c.b16 %v3575, %v3574
        %v3616 = vpack.c.b16 %v3577, %v3576
        %v3617 = vpack.c.b16 %v3579, %v3578
        %v3618 = vpack.c.b16 %v3581, %v3580
        %v3619 = vpack.c.b16 %v3583, %v3582
        %v3620 = vpack.c.b16 %v3585, %v3584
        %v3621 = vpack.c.b16 %v3587, %v3586
        %v3622 = vpack.c.b16 %v3589, %v3588
        %v3623 = vpack.c.b16 %v3591, %v3590
        %3656 = vmatprep.subr.bf16.mxu0 0
        %3657 = vmatpush1.bf16.msra.mxu0 %v3592
        %3658 = vmatprep.subr.bf16.mxu0 0
        %3659 = vmatpush1.bf16.msra.mxu0 %v3593
        %3660 = vmatprep.subr.bf16.mxu0 0
        %3661 = vmatpush1.bf16.msra.mxu0 %v3594
        %3662 = vmatprep.subr.bf16.mxu0 0
        %3663 = vmatpush1.bf16.msra.mxu0 %v3595
        %3664 = vmatprep.subr.bf16.mxu0 0
        %3665 = vmatpush1.bf16.msra.mxu0 %v3596
        %3666 = vmatprep.subr.bf16.mxu0 0
        %3667 = vmatpush1.bf16.msra.mxu0 %v3597
        %3668 = vmatprep.subr.bf16.mxu0 0
        %3669 = vmatpush1.bf16.msra.mxu0 %v3598
        %3670 = vmatprep.subr.bf16.mxu0 0
        %3671 = vmatpush1.bf16.msra.mxu0 %v3599
        %3672 = vmatprep.subr.bf16.mxu0 0
        %3673 = vmatpush1.bf16.msra.mxu0 %v3600
        %3674 = vmatprep.subr.bf16.mxu0 0
        %3675 = vmatpush1.bf16.msra.mxu0 %v3601
        %3676 = vmatprep.subr.bf16.mxu0 0
        %3677 = vmatpush1.bf16.msra.mxu0 %v3602
        %3678 = vmatprep.subr.bf16.mxu0 0
        %3679 = vmatpush1.bf16.msra.mxu0 %v3603
        %3680 = vmatprep.subr.bf16.mxu0 0
        %3681 = vmatpush1.bf16.msra.mxu0 %v3604
        %3682 = vmatprep.subr.bf16.mxu0 0
        %3683 = vmatpush1.bf16.msra.mxu0 %v3605
        %3684 = vmatprep.subr.bf16.mxu0 0
        %3685 = vmatpush1.bf16.msra.mxu0 %v3606
        %3686 = vmatprep.subr.bf16.mxu0 0
        %3687 = vmatpush1.bf16.msra.mxu0 %v3607
        %3688 = vmatprep.mubr.bf16.mxu0 %v3390
        %3689 = vmatmul.mubr.bf16.gmra.mrb[0].mxu0 %v3389
        %v3690 = vpop.f32.mrb[0].mxu0
        %v3691 = vadd.f32 %v3462, %v3690
        %v3692 = vpop.f32.mrb[0].mxu0
        %v3693 = vpop.f32.mrb[0].mxu0
        %v3694 = vadd.f32 %v3462, %v3693
        %v3695 = vpop.f32.mrb[0].mxu0
        %3696 = vdwg.mxu0
        %3697 = vmatprep.subr.bf16.mxu0 0
        %3698 = vmatpush1.bf16.msra.mxu0 %v3608
        %3699 = vmatprep.subr.bf16.mxu0 0
        %3700 = vmatpush1.bf16.msra.mxu0 %v3609
        %3701 = vmatprep.subr.bf16.mxu0 0
        %3702 = vmatpush1.bf16.msra.mxu0 %v3610
        %3703 = vmatprep.subr.bf16.mxu0 0
        %3704 = vmatpush1.bf16.msra.mxu0 %v3611
        %3705 = vmatprep.subr.bf16.mxu0 0
        %3706 = vmatpush1.bf16.msra.mxu0 %v3612
        %3707 = vmatprep.subr.bf16.mxu0 0
        %3708 = vmatpush1.bf16.msra.mxu0 %v3613
        %3709 = vmatprep.subr.bf16.mxu0 0
        %3710 = vmatpush1.bf16.msra.mxu0 %v3614
        %3711 = vmatprep.subr.bf16.mxu0 0
        %3712 = vmatpush1.bf16.msra.mxu0 %v3615
        %3713 = vmatprep.subr.bf16.mxu0 0
        %3714 = vmatpush1.bf16.msra.mxu0 %v3616
        %3715 = vmatprep.subr.bf16.mxu0 0
        %3716 = vmatpush1.bf16.msra.mxu0 %v3617
        %3717 = vmatprep.subr.bf16.mxu0 0
        %3718 = vmatpush1.bf16.msra.mxu0 %v3618
        %3719 = vmatprep.subr.bf16.mxu0 0
        %3720 = vmatpush1.bf16.msra.mxu0 %v3619
        %3721 = vmatprep.subr.bf16.mxu0 0
        %3722 = vmatpush1.bf16.msra.mxu0 %v3620
        %3723 = vmatprep.subr.bf16.mxu0 0
        %3724 = vmatpush1.bf16.msra.mxu0 %v3621
        %3725 = vmatprep.subr.bf16.mxu0 0
        %3726 = vmatpush1.bf16.msra.mxu0 %v3622
        %3727 = vmatprep.subr.bf16.mxu0 0
        %3728 = vmatpush1.bf16.msra.mxu0 %v3623
        %3729 = vmatprep.mubr.bf16.mxu0 %v3392
        %3730 = vmatmul.mubr.bf16.gmra.mrb[0].mxu0 %v3391
        %v3731 = vpop.f32.mrb[0].mxu0
        %v3732 = vadd.f32 %v3691, %v3731
        %v3733 = vpop.f32.mrb[0].mxu0
        %v3734 = vpop.f32.mrb[0].mxu0
        %v3735 = vadd.f32 %v3694, %v3734
        %v3736 = vpop.f32.mrb[0].mxu0
        %3737 = vdwg.mxu0
        %v3738 = vmax.f32 %v3732, 0.0
        %v3739 = vmax.f32 %v3735, 0.0
        %v3740 = vpack.c.bf16 %v3739, %v3738
        %v3741 = vld [vmem:[#allocation11] sm:$0xf]
        %v3742 = vld [vmem:[#allocation11 + $0x4] sm:$0xf]
        %v3743 = vld [vmem:[#allocation11 + $0x8] sm:$0xf]
        %v3744 = vld [vmem:[#allocation11 + $0xc] sm:$0xf]
        %v3745 = vld [vmem:[#allocation11 + $0x10] sm:$0xf]
        %v3746 = vld [vmem:[#allocation11 + $0x14] sm:$0xf]
        %v3747 = vld [vmem:[#allocation11 + $0x18] sm:$0xf]
        %v3748 = vld [vmem:[#allocation11 + $0x1c] sm:$0xf]
        %v3749 = vld [vmem:[#allocation11 + $0x20] sm:$0xf]
        %v3750 = vld [vmem:[#allocation11 + $0x24] sm:$0xf]
        %v3751 = vld [vmem:[#allocation11 + $0x28] sm:$0xf]
        %v3752 = vld [vmem:[#allocation11 + $0x2c] sm:$0xf]
        %v3753 = vld [vmem:[#allocation11 + $0x30] sm:$0xf]
        %v3754 = vld [vmem:[#allocation11 + $0x34] sm:$0xf]
        %v3755 = vld [vmem:[#allocation11 + $0x38] sm:$0xf]
        %v3756 = vld [vmem:[#allocation11 + $0x3c] sm:$0xf]
        %v3757 = vld [vmem:[%s8] sm:$0x1]
        %v3759 = vlaneseq
        %v3760 = vshrl.u32 %v3759, 7
        %v3761 = vsub.s32 0, %v3760
        %v3762 = vrot.slane %v3757, %v3761
        %v3780 = vunpack.c.l.b16 %v3741
        %v3781 = vunpack.c.l.b16 %v3742
        %v3782 = vunpack.c.l.b16 %v3743
        %v3783 = vunpack.c.l.b16 %v3744
        %v3784 = vunpack.c.l.b16 %v3745
        %v3785 = vunpack.c.l.b16 %v3746
        %v3786 = vunpack.c.l.b16 %v3747
        %v3787 = vunpack.c.l.b16 %v3748
        %v3788 = vunpack.c.l.b16 %v3749
        %v3789 = vunpack.c.l.b16 %v3750
        %v3790 = vunpack.c.l.b16 %v3751
        %v3791 = vunpack.c.l.b16 %v3752
        %v3792 = vunpack.c.l.b16 %v3753
        %v3793 = vunpack.c.l.b16 %v3754
        %v3794 = vunpack.c.l.b16 %v3755
        %v3795 = vunpack.c.l.b16 %v3756
        %v3796 = vpack.c.b16 %v3781, %v3780
        %v3797 = vpack.c.b16 %v3783, %v3782
        %v3798 = vpack.c.b16 %v3785, %v3784
        %v3799 = vpack.c.b16 %v3787, %v3786
        %v3800 = vpack.c.b16 %v3789, %v3788
        %v3801 = vpack.c.b16 %v3791, %v3790
        %v3802 = vpack.c.b16 %v3793, %v3792
        %v3803 = vpack.c.b16 %v3795, %v3794
        %3812 = vmatprep.subr.bf16.mxu0 0
        %3813 = vmatpush1.bf16.msra.mxu0 %v3796
        %3814 = vmatprep.subr.bf16.mxu0 0
        %3815 = vmatpush1.bf16.msra.mxu0 %v3797
        %3816 = vmatprep.subr.bf16.mxu0 0
        %3817 = vmatpush1.bf16.msra.mxu0 %v3798
        %3818 = vmatprep.subr.bf16.mxu0 0
        %3819 = vmatpush1.bf16.msra.mxu0 %v3799
        %3820 = vmatprep.subr.bf16.mxu0 0
        %3821 = vmatpush1.bf16.msra.mxu0 %v3800
        %3822 = vmatprep.subr.bf16.mxu0 0
        %3823 = vmatpush1.bf16.msra.mxu0 %v3801
        %3824 = vmatprep.subr.bf16.mxu0 0
        %3825 = vmatpush1.bf16.msra.mxu0 %v3802
        %3826 = vmatprep.subr.bf16.mxu0 0
        %3827 = vmatpush1.bf16.msra.mxu0 %v3803
        %3828 = vmatprep.subr.bf16.mxu0 0
        %3829 = vmatpush1.bf16.msra.mxu0 0
        %3830 = vmatprep.subr.bf16.mxu0 0
        %3831 = vmatpush1.bf16.msra.mxu0 0
        %3832 = vmatprep.subr.bf16.mxu0 0
        %3833 = vmatpush1.bf16.msra.mxu0 0
        %3834 = vmatprep.subr.bf16.mxu0 0
        %3835 = vmatpush1.bf16.msra.mxu0 0
        %3836 = vmatprep.subr.bf16.mxu0 0
        %3837 = vmatpush1.bf16.msra.mxu0 0
        %3838 = vmatprep.subr.bf16.mxu0 0
        %3839 = vmatpush1.bf16.msra.mxu0 0
        %3840 = vmatprep.subr.bf16.mxu0 0
        %3841 = vmatpush1.bf16.msra.mxu0 0
        %3842 = vmatprep.subr.bf16.mxu0 0
        %3843 = vmatpush1.bf16.msra.mxu0 0
        %3844 = vmatprep.mubr.bf16.mxu0 0
        %3845 = vmatmul.mubr.bf16.gmra.mrb[0].mxu0 %v3740
        %v3846 = vpop.f32.mrb[0].mxu0
        %v3847 = vadd.f32 %v3762, %v3846
        %v3848 = vpop.f32.mrb[0].mxu0
        %v3849 = vpop.f32.mrb[0].mxu0
        %v3850 = vadd.f32 %v3762, %v3849
        %v3851 = vpop.f32.mrb[0].mxu0
        %3852 = vdwg.mxu0
        %v3853 = vmax.f32 %v3847, 0.0
        %v3854 = vmax.f32 %v3850, 0.0
        %v3855 = vpack.c.bf16 %v3854, %v3853
        %v3856 = vld [vmem:[%s9] sm:$0xf]
        %3857 = vmatprep.subr.bf16.mxu0 0
        %3858 = vmatpush1.bf16.xpose.msra.mxu0 %v3855
        %3859 = vmatprep.subr.bf16.mxu0 0
        %3860 = vmatpush1.bf16.xpose.msra.mxu0 0
        %3861 = vmatprep.subr.bf16.mxu0 0
        %3862 = vmatpush1.bf16.xpose.msra.mxu0 0
        %3863 = vmatprep.subr.bf16.mxu0 0
        %3864 = vmatpush1.bf16.xpose.msra.mxu0 0
        %3865 = vmatprep.subr.bf16.mxu0 0
        %3866 = vmatpush1.bf16.xpose.msra.mxu0 0
        %3867 = vmatprep.subr.bf16.mxu0 0
        %3868 = vmatpush1.bf16.xpose.msra.mxu0 0
        %3869 = vmatprep.subr.bf16.mxu0 0
        %3870 = vmatpush1.bf16.xpose.msra.mxu0 0
        %3871 = vmatprep.subr.bf16.mxu0 0
        %3872 = vmatpush1.bf16.xpose.msra.mxu0 0
        %3873 = vmatprep.subr.bf16.mxu0 0
        %3874 = vmatpush1.bf16.xpose.msra.mxu0 0
        %3875 = vmatprep.subr.bf16.mxu0 0
        %3876 = vmatpush1.bf16.xpose.msra.mxu0 0
        %3877 = vmatprep.subr.bf16.mxu0 0
        %3878 = vmatpush1.bf16.xpose.msra.mxu0 0
        %3879 = vmatprep.subr.bf16.mxu0 0
        %3880 = vmatpush1.bf16.xpose.msra.mxu0 0
        %3881 = vmatprep.subr.bf16.mxu0 0
        %3882 = vmatpush1.bf16.xpose.msra.mxu0 0
        %3883 = vmatprep.subr.bf16.mxu0 0
        %3884 = vmatpush1.bf16.xpose.msra.mxu0 0
        %3885 = vmatprep.subr.bf16.mxu0 0
        %3886 = vmatpush1.bf16.xpose.msra.mxu0 0
        %3887 = vmatprep.subr.bf16.mxu0 0
        %3888 = vmatpush1.bf16.xpose.msra.mxu0 0
        %3889 = vmatprep.mubr.bf16.mxu0 0
        %3890 = vmatmul.mubr.bf16.gmra.mrb[0].mxu0 %v3856
        %v3891 = vpop.f32.mrb[0].mxu0
        %v3892 = vadd.f32 0.0, %v3891
        %v3893 = vpop.f32.mrb[0].mxu0
        %v3894 = vpop.f32.mrb[0].mxu0
        %v3895 = vpop.f32.mrb[0].mxu0
        %3896 = vdwg.mxu0
        %v3897 = vld [vmem:[#allocation2] sm:$0x1]
        %3899 = vset.pattern.permute.xlu0 0
        %3900 = vperm.xlu0 %3899, %v3897
        %v3901 = vpop.permute.xlu0 %3900
        %v3903 = vlaneseq
        %v3904 = vshrl.u32 %v3903, 7
        %v3905 = vsub.s32 0, %v3904
        %v3906 = vrot.slane %v3901, %v3905
        %v3907 = vadd.f32 %v3892, %v3906
        %vm3908 = vcmask 122880
        %3909 = vst.msk [vmem:[%s464] sm:$0x1] %vm3908, %v3907
        %s3910 = sand.u32 %s276, 1
        %s3911 = scalar_lea.sflag [#allocation5], %s3910
        %s3912 = sand.u32 %s276, 1
        %s3913 = scalar_lea.vmem [#allocation12], %s3912
        // Predicated region
        $region85: #{tpu_custom_call.1} parent=63 // pred_check
          %p3914 = pneg %p286
        $region86: #{tpu_custom_call.1} parent=63 // pred_check_branch
          %3916 = sbr.rel (%p3914) target = $region88
        $region87: #{tpu_custom_call.1} parent=63 // pred_region
          %s3918 = ssub.s32 16, 16
          %3919 = vsyncadd %s3911, %s3918
          %s3920 = smul.addr %s32, 16
          %s3921 = scalar_lea.hbm %s11, %s3920
          %s3923 = sshll.u32 %s3913, 4
          %s3924 = int_to_ptr.vmem [resolvable:$true] %s3923
          %3926 = dma.vmem_to_hbm [thread:$0]  %s3924, 16, %s3921, %s3911
        $region88: #{tpu_custom_call.1} parent=63 // pred_fallthru
          _
      $region64: #{tpu_custom_call.1} parent=5 // pred_fallthru
        _
      %p3927 = scmp.le.s32.totalorder 2, %s27
      // Predicated region
      $region89: #{tpu_custom_call.1} parent=5 // pred_check
        %p3928 = pneg %p3927
      $region90: #{tpu_custom_call.1} parent=5 // pred_check_branch
        %3930 = sbr.rel (%p3928) target = $region92
      $region91: #{tpu_custom_call.1} parent=5 // pred_region
        %s3931 = ssub.s32 %s27, 2
        // Predicated region
        $region93: #{tpu_custom_call.1} parent=91 // pred_check
          %p3932 = pneg %p292
        $region94: #{tpu_custom_call.1} parent=91 // pred_check_branch
          %3934 = sbr.rel (%p3932) target = $region96
        $region95: #{tpu_custom_call.1} parent=91 // pred_region
          %s3935 = sand.u32 %s277, 1
          %s3936 = scalar_lea.sflag [#allocation5], %s3935
          %s3937 = sand.u32 %s277, 1
          %s3938 = scalar_lea.vmem [#allocation12], %s3937
          %3939 = dma.done %s3936, 16
        $region96: #{tpu_custom_call.1} parent=91 // pred_fallthru
          _
      $region92: #{tpu_custom_call.1} parent=5 // pred_fallthru
        _
    $region6: #{tpu_custom_call.1} parent=1 // loop_footer
      %s31 = sadd.s32 1, %s27
    $region7: #{tpu_custom_call.1} parent=1 // loop_footer_branch
      %26 = sbr.rel target = $region3
    $region8: #{tpu_custom_call.1} parent=1 // loop_exit
      _
    %3940 = vsyncpa [#allocation4], 1
    %s3941 = scalar_lea.sflag [#allocation4], 1
    %3942 = vsyncpa %s3941, 1
    %3943 = vsyncpa [#allocation7], 1
    %3944 = vsyncpa [#allocation10], 1
    %3945 = vsyncpa [#allocation5], 1
    %s3946 = scalar_lea.sflag [#allocation5], 1
    %3947 = vsyncpa %s3946, 1

</llo_original>
